<compile_context>
chip_gen: v7x
topology: tpu7x:2x2x1
jax: 0.10.0
libtpu: 0.0.40
codegen_flags: <defaults>
</compile_context>

<pallas_src>
import functools

import jax
import jax.numpy as jnp
from jax.experimental import pallas as pl
from jax.experimental.pallas import tpu as pltpu


def _encoder_kernel(x_ref, *refs, num_blocks, dilations, ksize, block_dims):
    """All EncoderBlocks fused; one grid step processes one batch element.

    x_ref        : (1, H, W, C0) channel-last input block for this batch item.
    refs[:2B]    : per block (W_f bf16 (9*Cin, Cout), b_f f32 (1, Cout)).
    refs[2B:3B]  : per block output, (1, Hout*Wout, Cout) f32.
    refs[3B:]    : per block zero-padded VMEM scratch (Hp, Wp, Cin) f32.
    """
    w_refs = refs[:2 * num_blocks]
    out_refs = refs[2 * num_blocks:3 * num_blocks]
    pad_refs = refs[3 * num_blocks:]

    cur = x_ref[0]                                    # (H, W, Cin) channel-last

    for blk in range(num_blocks):
        wf = w_refs[2 * blk][...]                     # (9*Cin, Cout)  bf16
        bf = w_refs[2 * blk + 1][...]                 # (1, Cout)      f32
        pad_ref = pad_refs[blk]
        d = dilations[blk]
        hh, ww, cin = cur.shape
        hout, wout, cout = block_dims[blk]
        hp, wp, _ = pad_ref.shape

        # --- zero-padded copy in a VMEM scratch (replaces concat padding). --
        # Zeroed every step (tiny) so correctness is independent of how the
        # "parallel" batch axis is partitioned across TensorCores.
        pad_ref[...] = jnp.zeros_like(pad_ref)
        pad_ref[d:d + hh, d:d + ww, :] = cur

        # --- parity (space-to-depth) split of the padded activation. -------
        # H is the outermost dim (free index remap); the W split is the one
        # materialized relayout per block.
        p = pad_ref[...].reshape(hp // 2, 2, wp // 2, 2, cin)

        # --- im2col: gather the 9 tap slabs, concatenate ONCE on the lane
        # axis (per review; per-tap accumulation is the VMEM-bound fallback).
        taps = []
        for kh in range(ksize):
            for kw in range(ksize):
                rh, rw = kh * d, kw * d
                q = p[:, rh % 2, :, rw % 2, :]        # quadrant (hp//2, wp//2, cin)
                taps.append(q[rh // 2:rh // 2 + hout,
                              rw // 2:rw // 2 + wout, :])
        patches = jnp.concatenate(taps, axis=-1)      # (hout, wout, 9*cin)

        # Single reshape to (M, K); bf16 operands, f32 accumulation on the MXU.
        m = hout * wout
        patches2d = patches.reshape(m, ksize * ksize * cin).astype(jnp.bfloat16)
        y = jnp.dot(patches2d, wf, preferred_element_type=jnp.float32)
        y = jnp.maximum(y + bf, 0.0)                  # bias + ReLU in f32 (VPU)

        # Plain store in the compute-native layout (no store-side relayout).
        out_refs[blk][...] = y[None].astype(out_refs[blk].dtype)

        if blk + 1 < num_blocks:
            cur = y.reshape(hout, wout, cout)         # carry for next block


def _fuse_block_params(params):
    """Fold depthwise 3x3 + pointwise 1x1 into one (9*Cin, Cout) matmul."""
    dw_w, dw_b, pw_w, pw_b = params
    kk, cin = dw_w.shape
    cout = pw_w.shape[1]
    w_f = (dw_w[:, :, None] * pw_w[None, :, :]).reshape(kk * cin, cout)
    b_f = pw_b + dw_b @ pw_w
    # bf16 weights halve DMA/VMEM; the kernel accumulates in f32.
    return w_f.astype(jnp.bfloat16), b_f.astype(jnp.float32)


def _encoder_forward_impl(x_nchw, block_params, dilated):
    n, c0, h, w = x_nchw.shape
    num_blocks = len(block_params)
    ksize = 3
    dilations = tuple((2 ** i) if dilated else 1 for i in range(num_blocks))

    # NCHW -> channel-last once at the API boundary (PyTorch contract is NCHW).
    x = jnp.transpose(x_nchw, (0, 2, 3, 1)).astype(jnp.float32)

    args = [x]
    in_specs = [pl.BlockSpec((1, h, w, c0), lambda i: (i, 0, 0, 0))]
    out_shapes, out_specs, scratch_shapes, block_dims = [], [], [], []
    hh, ww = h, w
    for blk, params in enumerate(block_params):
        w_f, b_f = _fuse_block_params(params)
        args += [w_f, b_f]
        # Constant index maps: weights stay VMEM-resident across grid steps.
        in_specs += [pl.BlockSpec(w_f.shape, lambda i: (0, 0)),
                     pl.BlockSpec(b_f.shape, lambda i: (0, 0))]
        d = dilations[blk]
        cin, cout = params[2].shape
        hout = (hh + 2 * d - d * (ksize - 1) - 1) // 2 + 1
        wout = (ww + 2 * d - d * (ksize - 1) - 1) // 2 + 1
        hp = hh + 2 * d
        hp += hp % 2                       # even extent -> parity split is exact
        wp = ww + 2 * d
        wp += wp % 2
        scratch_shapes.append(pltpu.VMEM((hp, wp, cin), jnp.float32))
        out_shapes.append(
            jax.ShapeDtypeStruct((n, hout * wout, cout), jnp.float32))
        out_specs.append(
            pl.BlockSpec((1, hout * wout, cout), lambda i: (i, 0, 0)))
        block_dims.append((hout, wout, cout))
        hh, ww = hout, wout

    kernel = functools.partial(
        _encoder_kernel, num_blocks=num_blocks, dilations=dilations,
        ksize=ksize, block_dims=tuple(block_dims))

    outs = pl.pallas_call(
        kernel,
        out_shape=tuple(out_shapes),
        grid=(n,),                         # batch-parallel: both TCs on v7x
        in_specs=in_specs,
        out_specs=tuple(out_specs),
        scratch_shapes=tuple(scratch_shapes),
        compiler_params=pltpu.CompilerParams(
            dimension_semantics=("parallel",),
            vmem_limit_bytes=32 * 1024 * 1024),
    )(*args)

    # Kernel-native (N, Hout*Wout, Cout) -> NCHW only at the API boundary.
    results = []
    for o, (ho, wo, cout) in zip(outs, block_dims):
        results.append(jnp.transpose(o.reshape(n, ho, wo, cout), (0, 3, 1, 2)))
    return results[-1], results[:-1]


@functools.partial(jax.jit, static_argnames=("dilated",))
def _encoder_forward_jit(x_nchw, block_params, dilated):
    return _encoder_forward_impl(x_nchw, block_params, dilated)


def encoder_forward(x_nchw, block_params, dilated=False):
    """Matches Encoder.forward: returns (output, skips), both NCHW."""
    return _encoder_forward_jit(x_nchw, tuple(block_params), dilated=dilated)


def init_encoder_params(key, channel_list, ksize=3):
    """Deterministic synthetic parameters for every EncoderBlock."""
    params = []
    for idx in range(len(channel_list) - 1):
        cin, cout = channel_list[idx], channel_list[idx + 1]
        k1, k2, k3, k4, key = jax.random.split(key, 5)
        # depthwise Conv2d(cin, cin, 3, groups=cin): (cin,1,3,3) -> (k*k, cin)
        dw_w = 0.1 * jax.random.normal(k1, (ksize * ksize, cin), jnp.float32)
        dw_b = 0.1 * jax.random.normal(k2, (1, cin), jnp.float32)
        # pointwise Conv2d(cin, cout, 1): (cout,cin,1,1) -> (cin, cout)
        pw_w = 0.1 * jax.random.normal(k3, (cin, cout), jnp.float32)
        pw_b = 0.1 * jax.random.normal(k4, (1, cout), jnp.float32)
        params.append((dw_w, dw_b, pw_w, pw_b))
    return params


def _reference_forward(x_nchw, block_params, dilated=False):
    """Pure-XLA reference (lax convolutions) matching the PyTorch module."""
    num_blocks = len(block_params)
    x = x_nchw
    outs = []
    for idx, (dw_w, dw_b, pw_w, pw_b) in enumerate(block_params):
        d = (2 ** idx) if dilated else 1
        cin, cout = pw_w.shape
        w_dw = jnp.transpose(dw_w.reshape(3, 3, cin), (2, 0, 1))[:, None]
        y = jax.lax.conv_general_dilated(
            x, w_dw, window_strides=(2, 2),
            padding=((d, d), (d, d)), rhs_dilation=(d, d),
            dimension_numbers=("NCHW", "OIHW", "NCHW"),
            feature_group_count=cin, precision=jax.lax.Precision.HIGHEST)
        y = y + dw_b.reshape(1, cin, 1, 1)
        w_pw = jnp.transpose(pw_w, (1, 0))[:, :, None, None]
        z = jax.lax.conv_general_dilated(
            y, w_pw, window_strides=(1, 1), padding="VALID",
            dimension_numbers=("NCHW", "OIHW", "NCHW"),
            precision=jax.lax.Precision.HIGHEST)
        z = jnp.maximum(z + pw_b.reshape(1, cout, 1, 1), 0.0)
        outs.append(z)
        x = z
    return outs[-1], outs[:num_blocks - 1]


if __name__ == "__main__":
    key = jax.random.PRNGKey(0)
    channel_list = [4, 8, 16, 32]          # 3 EncoderBlocks
    kx, kp = jax.random.split(key)

    x = jax.random.normal(kx, (2, 4, 16, 16), jnp.float32)   # NCHW, like PyTorch
    params = init_encoder_params(kp, channel_list)

    output, skips = encoder_forward(x, params, dilated=False)
    output = jax.block_until_ready(output)
    skips = [jax.block_until_ready(s) for s in skips]

    assert output.shape == (2, 32, 2, 2), output.shape
    assert [s.shape for s in skips] == [(2, 8, 8, 8), (2, 16, 4, 4)], \
        [s.shape for s in skips]

    # Numerical check against a pure-XLA reference of the same module.
    # Tolerance loosened vs the pure-f32 version because matmul operands are
    # bf16 (accumulation stays f32).
    ref_out, ref_skips = _reference_forward(x, params, dilated=False)
    for got, want in zip([output] + list(skips), [ref_out] + list(ref_skips)):
        err = float(jnp.max(jnp.abs(got - want)))
        assert err < 1e-2, err

    print("KERNEL_OK")
</pallas_src>

<mosaic_0001>
module attributes {stable_mosaic.version = 11 : i64} {
  func.func @_encoder_kernel(%arg0: i32, %arg1: memref<1x16x16x4xf32, #tpu.memory_space<vmem>>, %arg2: memref<36x8xbf16, #tpu.memory_space<vmem>>, %arg3: memref<1x8xf32, #tpu.memory_space<vmem>>, %arg4: memref<72x16xbf16, #tpu.memory_space<vmem>>, %arg5: memref<1x16xf32, #tpu.memory_space<vmem>>, %arg6: memref<144x32xbf16, #tpu.memory_space<vmem>>, %arg7: memref<1x32xf32, #tpu.memory_space<vmem>>, %arg8: memref<1x64x8xf32, #tpu.memory_space<vmem>>, %arg9: memref<1x16x16xf32, #tpu.memory_space<vmem>>, %arg10: memref<1x4x32xf32, #tpu.memory_space<vmem>>, %arg11: memref<18x18x4xf32, #tpu.memory_space<vmem>>, %arg12: memref<10x10x8xf32, #tpu.memory_space<vmem>>, %arg13: memref<6x6x16xf32, #tpu.memory_space<vmem>>) attributes {dimension_semantics = [#tpu.dimension_semantics<parallel>], iteration_bounds = array<i64: 2>, scalar_prefetch = 0 : i64, scratch_operands = 3 : i64, tpu.core_type = #tpu.core_type<tc>, window_params = [{transform_indices = @transform_0, window_bounds = array<i64: 1, 16, 16, 4>}, {pipeline_mode = #tpu.pipeline_mode<synchronous>, transform_indices = @transform_1, window_bounds = array<i64: 36, 8>}, {pipeline_mode = #tpu.pipeline_mode<synchronous>, transform_indices = @transform_2, window_bounds = array<i64: 1, 8>}, {pipeline_mode = #tpu.pipeline_mode<synchronous>, transform_indices = @transform_3, window_bounds = array<i64: 72, 16>}, {pipeline_mode = #tpu.pipeline_mode<synchronous>, transform_indices = @transform_4, window_bounds = array<i64: 1, 16>}, {pipeline_mode = #tpu.pipeline_mode<synchronous>, transform_indices = @transform_5, window_bounds = array<i64: 144, 32>}, {pipeline_mode = #tpu.pipeline_mode<synchronous>, transform_indices = @transform_6, window_bounds = array<i64: 1, 32>}, {transform_indices = @transform_7, window_bounds = array<i64: 1, 64, 8>}, {transform_indices = @transform_8, window_bounds = array<i64: 1, 16, 16>}, {transform_indices = @transform_9, window_bounds = array<i64: 1, 4, 32>}]} {
    %c0 = arith.constant 0 : index
    %c0_0 = arith.constant 0 : index
    %c0_1 = arith.constant 0 : index
    %c0_2 = arith.constant 0 : index
    %0 = vector.load %arg1[%c0, %c0_0, %c0_1, %c0_2] : memref<1x16x16x4xf32, #tpu.memory_space<vmem>>, vector<1x16x16x4xf32>
    %1 = vector.shape_cast %0 : vector<1x16x16x4xf32> to vector<16x16x4xf32>
    %c0_3 = arith.constant 0 : index
    %c0_4 = arith.constant 0 : index
    %2 = vector.load %arg2[%c0_3, %c0_4] : memref<36x8xbf16, #tpu.memory_space<vmem>>, vector<36x8xbf16>
    %c0_5 = arith.constant 0 : index
    %c0_6 = arith.constant 0 : index
    %3 = vector.load %arg3[%c0_5, %c0_6] : memref<1x8xf32, #tpu.memory_space<vmem>>, vector<1x8xf32>
    %cst = arith.constant 0.000000e+00 : f32
    %4 = vector.broadcast %cst : f32 to vector<18x18x4xf32>
    %c0_7 = arith.constant 0 : index
    %c0_8 = arith.constant 0 : index
    %c0_9 = arith.constant 0 : index
    %5 = vector.load %arg11[%c0_7, %c0_8, %c0_9] : memref<18x18x4xf32, #tpu.memory_space<vmem>>, vector<18x18x4xf32>
    tpu.vector_store %arg11[%c0_7, %c0_8, %c0_9], %4 {strides = array<i32>} : memref<18x18x4xf32, #tpu.memory_space<vmem>>, vector<18x18x4xf32>,
    %c1 = arith.constant 1 : index
    %c1_10 = arith.constant 1 : index
    %c0_11 = arith.constant 0 : index
    %6 = vector.load %arg11[%c1, %c1_10, %c0_11] : memref<18x18x4xf32, #tpu.memory_space<vmem>>, vector<16x16x4xf32>
    tpu.vector_store %arg11[%c1, %c1_10, %c0_11], %1 {strides = array<i32>} : memref<18x18x4xf32, #tpu.memory_space<vmem>>, vector<16x16x4xf32>,
    %c0_12 = arith.constant 0 : index
    %c0_13 = arith.constant 0 : index
    %c0_14 = arith.constant 0 : index
    %7 = vector.load %arg11[%c0_12, %c0_13, %c0_14] : memref<18x18x4xf32, #tpu.memory_space<vmem>>, vector<18x18x4xf32>
    %8 = vector.shape_cast %7 : vector<18x18x4xf32> to vector<9x2x9x2x4xf32>
    %9 = vector.extract_strided_slice %8 {offsets = [0, 0, 0, 0, 0], sizes = [9, 1, 9, 1, 4], strides = [1, 1, 1, 1, 1]} : vector<9x2x9x2x4xf32> to vector<9x1x9x1x4xf32>
    %10 = vector.shape_cast %9 : vector<9x1x9x1x4xf32> to vector<9x9x4xf32>
    %11 = vector.extract_strided_slice %10 {offsets = [0, 0, 0], sizes = [8, 8, 4], strides = [1, 1, 1]} : vector<9x9x4xf32> to vector<8x8x4xf32>
    %12 = vector.extract_strided_slice %8 {offsets = [0, 0, 0, 1, 0], sizes = [9, 1, 9, 1, 4], strides = [1, 1, 1, 1, 1]} : vector<9x2x9x2x4xf32> to vector<9x1x9x1x4xf32>
    %13 = vector.shape_cast %12 : vector<9x1x9x1x4xf32> to vector<9x9x4xf32>
    %14 = vector.extract_strided_slice %13 {offsets = [0, 0, 0], sizes = [8, 8, 4], strides = [1, 1, 1]} : vector<9x9x4xf32> to vector<8x8x4xf32>
    %15 = vector.extract_strided_slice %8 {offsets = [0, 0, 0, 0, 0], sizes = [9, 1, 9, 1, 4], strides = [1, 1, 1, 1, 1]} : vector<9x2x9x2x4xf32> to vector<9x1x9x1x4xf32>
    %16 = vector.shape_cast %15 : vector<9x1x9x1x4xf32> to vector<9x9x4xf32>
    %17 = vector.extract_strided_slice %16 {offsets = [0, 1, 0], sizes = [8, 8, 4], strides = [1, 1, 1]} : vector<9x9x4xf32> to vector<8x8x4xf32>
    %18 = vector.extract_strided_slice %8 {offsets = [0, 1, 0, 0, 0], sizes = [9, 1, 9, 1, 4], strides = [1, 1, 1, 1, 1]} : vector<9x2x9x2x4xf32> to vector<9x1x9x1x4xf32>
    %19 = vector.shape_cast %18 : vector<9x1x9x1x4xf32> to vector<9x9x4xf32>
    %20 = vector.extract_strided_slice %19 {offsets = [0, 0, 0], sizes = [8, 8, 4], strides = [1, 1, 1]} : vector<9x9x4xf32> to vector<8x8x4xf32>
    %21 = vector.extract_strided_slice %8 {offsets = [0, 1, 0, 1, 0], sizes = [9, 1, 9, 1, 4], strides = [1, 1, 1, 1, 1]} : vector<9x2x9x2x4xf32> to vector<9x1x9x1x4xf32>
    %22 = vector.shape_cast %21 : vector<9x1x9x1x4xf32> to vector<9x9x4xf32>
    %23 = vector.extract_strided_slice %22 {offsets = [0, 0, 0], sizes = [8, 8, 4], strides = [1, 1, 1]} : vector<9x9x4xf32> to vector<8x8x4xf32>
    %24 = vector.extract_strided_slice %8 {offsets = [0, 1, 0, 0, 0], sizes = [9, 1, 9, 1, 4], strides = [1, 1, 1, 1, 1]} : vector<9x2x9x2x4xf32> to vector<9x1x9x1x4xf32>
    %25 = vector.shape_cast %24 : vector<9x1x9x1x4xf32> to vector<9x9x4xf32>
    %26 = vector.extract_strided_slice %25 {offsets = [0, 1, 0], sizes = [8, 8, 4], strides = [1, 1, 1]} : vector<9x9x4xf32> to vector<8x8x4xf32>
    %27 = vector.extract_strided_slice %8 {offsets = [0, 0, 0, 0, 0], sizes = [9, 1, 9, 1, 4], strides = [1, 1, 1, 1, 1]} : vector<9x2x9x2x4xf32> to vector<9x1x9x1x4xf32>
    %28 = vector.shape_cast %27 : vector<9x1x9x1x4xf32> to vector<9x9x4xf32>
    %29 = vector.extract_strided_slice %28 {offsets = [1, 0, 0], sizes = [8, 8, 4], strides = [1, 1, 1]} : vector<9x9x4xf32> to vector<8x8x4xf32>
    %30 = vector.extract_strided_slice %8 {offsets = [0, 0, 0, 1, 0], sizes = [9, 1, 9, 1, 4], strides = [1, 1, 1, 1, 1]} : vector<9x2x9x2x4xf32> to vector<9x1x9x1x4xf32>
    %31 = vector.shape_cast %30 : vector<9x1x9x1x4xf32> to vector<9x9x4xf32>
    %32 = vector.extract_strided_slice %31 {offsets = [1, 0, 0], sizes = [8, 8, 4], strides = [1, 1, 1]} : vector<9x9x4xf32> to vector<8x8x4xf32>
    %33 = vector.extract_strided_slice %8 {offsets = [0, 0, 0, 0, 0], sizes = [9, 1, 9, 1, 4], strides = [1, 1, 1, 1, 1]} : vector<9x2x9x2x4xf32> to vector<9x1x9x1x4xf32>
    %34 = vector.shape_cast %33 : vector<9x1x9x1x4xf32> to vector<9x9x4xf32>
    %35 = vector.extract_strided_slice %34 {offsets = [1, 1, 0], sizes = [8, 8, 4], strides = [1, 1, 1]} : vector<9x9x4xf32> to vector<8x8x4xf32>
    %36 = tpu.concatenate %11, %14, %17, %20, %23, %26, %29, %32, %35 in 2 : vector<8x8x4xf32>, vector<8x8x4xf32>, vector<8x8x4xf32>, vector<8x8x4xf32>, vector<8x8x4xf32>, vector<8x8x4xf32>, vector<8x8x4xf32>, vector<8x8x4xf32>, vector<8x8x4xf32> -> vector<8x8x36xf32>
    %37 = vector.shape_cast %36 : vector<8x8x36xf32> to vector<64x36xf32>
    %38 = arith.truncf %37 : vector<64x36xf32> to vector<64x36xbf16>
    %cst_15 = arith.constant dense<0.000000e+00> : vector<64x8xf32>
    %39 = tpu.matmul %38, %2, %cst_15 {dimension_numbers = #tpu.dot_dimension_numbers<[1], [0], [0], [1], [0, 0, 1, 1], [], []>} : vector<64x36xbf16>, vector<36x8xbf16>, vector<64x8xf32> -> vector<64x8xf32>
    %40 = vector.broadcast %3 : vector<1x8xf32> to vector<64x8xf32>
    %41 = arith.addf %39, %40 : vector<64x8xf32>
    %cst_16 = arith.constant 0.000000e+00 : f32
    %42 = vector.broadcast %cst_16 : f32 to vector<64x8xf32>
    %43 = arith.maximumf %41, %42 : vector<64x8xf32>
    %44 = vector.shape_cast %43 : vector<64x8xf32> to vector<1x64x8xf32>
    %c0_17 = arith.constant 0 : index
    %c0_18 = arith.constant 0 : index
    %c0_19 = arith.constant 0 : index
    %45 = vector.load %arg8[%c0_17, %c0_18, %c0_19] : memref<1x64x8xf32, #tpu.memory_space<vmem>>, vector<1x64x8xf32>
    tpu.vector_store %arg8[%c0_17, %c0_18, %c0_19], %44 {strides = array<i32>} : memref<1x64x8xf32, #tpu.memory_space<vmem>>, vector<1x64x8xf32>,
    %46 = vector.shape_cast %43 : vector<64x8xf32> to vector<8x8x8xf32>
    %c0_20 = arith.constant 0 : index
    %c0_21 = arith.constant 0 : index
    %47 = vector.load %arg4[%c0_20, %c0_21] : memref<72x16xbf16, #tpu.memory_space<vmem>>, vector<72x16xbf16>
    %c0_22 = arith.constant 0 : index
    %c0_23 = arith.constant 0 : index
    %48 = vector.load %arg5[%c0_22, %c0_23] : memref<1x16xf32, #tpu.memory_space<vmem>>, vector<1x16xf32>
    %cst_24 = arith.constant 0.000000e+00 : f32
    %49 = vector.broadcast %cst_24 : f32 to vector<10x10x8xf32>
    %c0_25 = arith.constant 0 : index
    %c0_26 = arith.constant 0 : index
    %c0_27 = arith.constant 0 : index
    %50 = vector.load %arg12[%c0_25, %c0_26, %c0_27] : memref<10x10x8xf32, #tpu.memory_space<vmem>>, vector<10x10x8xf32>
    tpu.vector_store %arg12[%c0_25, %c0_26, %c0_27], %49 {strides = array<i32>} : memref<10x10x8xf32, #tpu.memory_space<vmem>>, vector<10x10x8xf32>,
    %c1_28 = arith.constant 1 : index
    %c1_29 = arith.constant 1 : index
    %c0_30 = arith.constant 0 : index
    %51 = vector.load %arg12[%c1_28, %c1_29, %c0_30] : memref<10x10x8xf32, #tpu.memory_space<vmem>>, vector<8x8x8xf32>
    tpu.vector_store %arg12[%c1_28, %c1_29, %c0_30], %46 {strides = array<i32>} : memref<10x10x8xf32, #tpu.memory_space<vmem>>, vector<8x8x8xf32>,
    %c0_31 = arith.constant 0 : index
    %c0_32 = arith.constant 0 : index
    %c0_33 = arith.constant 0 : index
    %52 = vector.load %arg12[%c0_31, %c0_32, %c0_33] : memref<10x10x8xf32, #tpu.memory_space<vmem>>, vector<10x10x8xf32>
    %53 = vector.shape_cast %52 : vector<10x10x8xf32> to vector<5x2x5x2x8xf32>
    %54 = vector.extract_strided_slice %53 {offsets = [0, 0, 0, 0, 0], sizes = [5, 1, 5, 1, 8], strides = [1, 1, 1, 1, 1]} : vector<5x2x5x2x8xf32> to vector<5x1x5x1x8xf32>
    %55 = vector.shape_cast %54 : vector<5x1x5x1x8xf32> to vector<5x5x8xf32>
    %56 = vector.extract_strided_slice %55 {offsets = [0, 0, 0], sizes = [4, 4, 8], strides = [1, 1, 1]} : vector<5x5x8xf32> to vector<4x4x8xf32>
    %57 = vector.extract_strided_slice %53 {offsets = [0, 0, 0, 1, 0], sizes = [5, 1, 5, 1, 8], strides = [1, 1, 1, 1, 1]} : vector<5x2x5x2x8xf32> to vector<5x1x5x1x8xf32>
    %58 = vector.shape_cast %57 : vector<5x1x5x1x8xf32> to vector<5x5x8xf32>
    %59 = vector.extract_strided_slice %58 {offsets = [0, 0, 0], sizes = [4, 4, 8], strides = [1, 1, 1]} : vector<5x5x8xf32> to vector<4x4x8xf32>
    %60 = vector.extract_strided_slice %53 {offsets = [0, 0, 0, 0, 0], sizes = [5, 1, 5, 1, 8], strides = [1, 1, 1, 1, 1]} : vector<5x2x5x2x8xf32> to vector<5x1x5x1x8xf32>
    %61 = vector.shape_cast %60 : vector<5x1x5x1x8xf32> to vector<5x5x8xf32>
    %62 = vector.extract_strided_slice %61 {offsets = [0, 1, 0], sizes = [4, 4, 8], strides = [1, 1, 1]} : vector<5x5x8xf32> to vector<4x4x8xf32>
    %63 = vector.extract_strided_slice %53 {offsets = [0, 1, 0, 0, 0], sizes = [5, 1, 5, 1, 8], strides = [1, 1, 1, 1, 1]} : vector<5x2x5x2x8xf32> to vector<5x1x5x1x8xf32>
    %64 = vector.shape_cast %63 : vector<5x1x5x1x8xf32> to vector<5x5x8xf32>
    %65 = vector.extract_strided_slice %64 {offsets = [0, 0, 0], sizes = [4, 4, 8], strides = [1, 1, 1]} : vector<5x5x8xf32> to vector<4x4x8xf32>
    %66 = vector.extract_strided_slice %53 {offsets = [0, 1, 0, 1, 0], sizes = [5, 1, 5, 1, 8], strides = [1, 1, 1, 1, 1]} : vector<5x2x5x2x8xf32> to vector<5x1x5x1x8xf32>
    %67 = vector.shape_cast %66 : vector<5x1x5x1x8xf32> to vector<5x5x8xf32>
    %68 = vector.extract_strided_slice %67 {offsets = [0, 0, 0], sizes = [4, 4, 8], strides = [1, 1, 1]} : vector<5x5x8xf32> to vector<4x4x8xf32>
    %69 = vector.extract_strided_slice %53 {offsets = [0, 1, 0, 0, 0], sizes = [5, 1, 5, 1, 8], strides = [1, 1, 1, 1, 1]} : vector<5x2x5x2x8xf32> to vector<5x1x5x1x8xf32>
    %70 = vector.shape_cast %69 : vector<5x1x5x1x8xf32> to vector<5x5x8xf32>
    %71 = vector.extract_strided_slice %70 {offsets = [0, 1, 0], sizes = [4, 4, 8], strides = [1, 1, 1]} : vector<5x5x8xf32> to vector<4x4x8xf32>
    %72 = vector.extract_strided_slice %53 {offsets = [0, 0, 0, 0, 0], sizes = [5, 1, 5, 1, 8], strides = [1, 1, 1, 1, 1]} : vector<5x2x5x2x8xf32> to vector<5x1x5x1x8xf32>
    %73 = vector.shape_cast %72 : vector<5x1x5x1x8xf32> to vector<5x5x8xf32>
    %74 = vector.extract_strided_slice %73 {offsets = [1, 0, 0], sizes = [4, 4, 8], strides = [1, 1, 1]} : vector<5x5x8xf32> to vector<4x4x8xf32>
    %75 = vector.extract_strided_slice %53 {offsets = [0, 0, 0, 1, 0], sizes = [5, 1, 5, 1, 8], strides = [1, 1, 1, 1, 1]} : vector<5x2x5x2x8xf32> to vector<5x1x5x1x8xf32>
    %76 = vector.shape_cast %75 : vector<5x1x5x1x8xf32> to vector<5x5x8xf32>
    %77 = vector.extract_strided_slice %76 {offsets = [1, 0, 0], sizes = [4, 4, 8], strides = [1, 1, 1]} : vector<5x5x8xf32> to vector<4x4x8xf32>
    %78 = vector.extract_strided_slice %53 {offsets = [0, 0, 0, 0, 0], sizes = [5, 1, 5, 1, 8], strides = [1, 1, 1, 1, 1]} : vector<5x2x5x2x8xf32> to vector<5x1x5x1x8xf32>
    %79 = vector.shape_cast %78 : vector<5x1x5x1x8xf32> to vector<5x5x8xf32>
    %80 = vector.extract_strided_slice %79 {offsets = [1, 1, 0], sizes = [4, 4, 8], strides = [1, 1, 1]} : vector<5x5x8xf32> to vector<4x4x8xf32>
    %81 = tpu.concatenate %56, %59, %62, %65, %68, %71, %74, %77, %80 in 2 : vector<4x4x8xf32>, vector<4x4x8xf32>, vector<4x4x8xf32>, vector<4x4x8xf32>, vector<4x4x8xf32>, vector<4x4x8xf32>, vector<4x4x8xf32>, vector<4x4x8xf32>, vector<4x4x8xf32> -> vector<4x4x72xf32>
    %82 = vector.shape_cast %81 : vector<4x4x72xf32> to vector<16x72xf32>
    %83 = arith.truncf %82 : vector<16x72xf32> to vector<16x72xbf16>
    %cst_34 = arith.constant dense<0.000000e+00> : vector<16x16xf32>
    %84 = tpu.matmul %83, %47, %cst_34 {dimension_numbers = #tpu.dot_dimension_numbers<[1], [0], [0], [1], [0, 0, 1, 1], [], []>} : vector<16x72xbf16>, vector<72x16xbf16>, vector<16x16xf32> -> vector<16x16xf32>
    %85 = vector.broadcast %48 : vector<1x16xf32> to vector<16x16xf32>
    %86 = arith.addf %84, %85 : vector<16x16xf32>
    %cst_35 = arith.constant 0.000000e+00 : f32
    %87 = vector.broadcast %cst_35 : f32 to vector<16x16xf32>
    %88 = arith.maximumf %86, %87 : vector<16x16xf32>
    %89 = vector.shape_cast %88 : vector<16x16xf32> to vector<1x16x16xf32>
    %c0_36 = arith.constant 0 : index
    %c0_37 = arith.constant 0 : index
    %c0_38 = arith.constant 0 : index
    %90 = vector.load %arg9[%c0_36, %c0_37, %c0_38] : memref<1x16x16xf32, #tpu.memory_space<vmem>>, vector<1x16x16xf32>
    tpu.vector_store %arg9[%c0_36, %c0_37, %c0_38], %89 {strides = array<i32>} : memref<1x16x16xf32, #tpu.memory_space<vmem>>, vector<1x16x16xf32>,
    %91 = vector.shape_cast %88 : vector<16x16xf32> to vector<4x4x16xf32>
    %c0_39 = arith.constant 0 : index
    %c0_40 = arith.constant 0 : index
    %92 = vector.load %arg6[%c0_39, %c0_40] : memref<144x32xbf16, #tpu.memory_space<vmem>>, vector<144x32xbf16>
    %c0_41 = arith.constant 0 : index
    %c0_42 = arith.constant 0 : index
    %93 = vector.load %arg7[%c0_41, %c0_42] : memref<1x32xf32, #tpu.memory_space<vmem>>, vector<1x32xf32>
    %cst_43 = arith.constant 0.000000e+00 : f32
    %94 = vector.broadcast %cst_43 : f32 to vector<6x6x16xf32>
    %c0_44 = arith.constant 0 : index
    %c0_45 = arith.constant 0 : index
    %c0_46 = arith.constant 0 : index
    %95 = vector.load %arg13[%c0_44, %c0_45, %c0_46] : memref<6x6x16xf32, #tpu.memory_space<vmem>>, vector<6x6x16xf32>
    tpu.vector_store %arg13[%c0_44, %c0_45, %c0_46], %94 {strides = array<i32>} : memref<6x6x16xf32, #tpu.memory_space<vmem>>, vector<6x6x16xf32>,
    %c1_47 = arith.constant 1 : index
    %c1_48 = arith.constant 1 : index
    %c0_49 = arith.constant 0 : index
    %96 = vector.load %arg13[%c1_47, %c1_48, %c0_49] : memref<6x6x16xf32, #tpu.memory_space<vmem>>, vector<4x4x16xf32>
    tpu.vector_store %arg13[%c1_47, %c1_48, %c0_49], %91 {strides = array<i32>} : memref<6x6x16xf32, #tpu.memory_space<vmem>>, vector<4x4x16xf32>,
    %c0_50 = arith.constant 0 : index
    %c0_51 = arith.constant 0 : index
    %c0_52 = arith.constant 0 : index
    %97 = vector.load %arg13[%c0_50, %c0_51, %c0_52] : memref<6x6x16xf32, #tpu.memory_space<vmem>>, vector<6x6x16xf32>
    %98 = vector.shape_cast %97 : vector<6x6x16xf32> to vector<3x2x3x2x16xf32>
    %99 = vector.extract_strided_slice %98 {offsets = [0, 0, 0, 0, 0], sizes = [3, 1, 3, 1, 16], strides = [1, 1, 1, 1, 1]} : vector<3x2x3x2x16xf32> to vector<3x1x3x1x16xf32>
    %100 = vector.shape_cast %99 : vector<3x1x3x1x16xf32> to vector<3x3x16xf32>
    %101 = vector.extract_strided_slice %100 {offsets = [0, 0, 0], sizes = [2, 2, 16], strides = [1, 1, 1]} : vector<3x3x16xf32> to vector<2x2x16xf32>
    %102 = vector.extract_strided_slice %98 {offsets = [0, 0, 0, 1, 0], sizes = [3, 1, 3, 1, 16], strides = [1, 1, 1, 1, 1]} : vector<3x2x3x2x16xf32> to vector<3x1x3x1x16xf32>
    %103 = vector.shape_cast %102 : vector<3x1x3x1x16xf32> to vector<3x3x16xf32>
    %104 = vector.extract_strided_slice %103 {offsets = [0, 0, 0], sizes = [2, 2, 16], strides = [1, 1, 1]} : vector<3x3x16xf32> to vector<2x2x16xf32>
    %105 = vector.extract_strided_slice %98 {offsets = [0, 0, 0, 0, 0], sizes = [3, 1, 3, 1, 16], strides = [1, 1, 1, 1, 1]} : vector<3x2x3x2x16xf32> to vector<3x1x3x1x16xf32>
    %106 = vector.shape_cast %105 : vector<3x1x3x1x16xf32> to vector<3x3x16xf32>
    %107 = vector.extract_strided_slice %106 {offsets = [0, 1, 0], sizes = [2, 2, 16], strides = [1, 1, 1]} : vector<3x3x16xf32> to vector<2x2x16xf32>
    %108 = vector.extract_strided_slice %98 {offsets = [0, 1, 0, 0, 0], sizes = [3, 1, 3, 1, 16], strides = [1, 1, 1, 1, 1]} : vector<3x2x3x2x16xf32> to vector<3x1x3x1x16xf32>
    %109 = vector.shape_cast %108 : vector<3x1x3x1x16xf32> to vector<3x3x16xf32>
    %110 = vector.extract_strided_slice %109 {offsets = [0, 0, 0], sizes = [2, 2, 16], strides = [1, 1, 1]} : vector<3x3x16xf32> to vector<2x2x16xf32>
    %111 = vector.extract_strided_slice %98 {offsets = [0, 1, 0, 1, 0], sizes = [3, 1, 3, 1, 16], strides = [1, 1, 1, 1, 1]} : vector<3x2x3x2x16xf32> to vector<3x1x3x1x16xf32>
    %112 = vector.shape_cast %111 : vector<3x1x3x1x16xf32> to vector<3x3x16xf32>
    %113 = vector.extract_strided_slice %112 {offsets = [0, 0, 0], sizes = [2, 2, 16], strides = [1, 1, 1]} : vector<3x3x16xf32> to vector<2x2x16xf32>
    %114 = vector.extract_strided_slice %98 {offsets = [0, 1, 0, 0, 0], sizes = [3, 1, 3, 1, 16], strides = [1, 1, 1, 1, 1]} : vector<3x2x3x2x16xf32> to vector<3x1x3x1x16xf32>
    %115 = vector.shape_cast %114 : vector<3x1x3x1x16xf32> to vector<3x3x16xf32>
    %116 = vector.extract_strided_slice %115 {offsets = [0, 1, 0], sizes = [2, 2, 16], strides = [1, 1, 1]} : vector<3x3x16xf32> to vector<2x2x16xf32>
    %117 = vector.extract_strided_slice %98 {offsets = [0, 0, 0, 0, 0], sizes = [3, 1, 3, 1, 16], strides = [1, 1, 1, 1, 1]} : vector<3x2x3x2x16xf32> to vector<3x1x3x1x16xf32>
    %118 = vector.shape_cast %117 : vector<3x1x3x1x16xf32> to vector<3x3x16xf32>
    %119 = vector.extract_strided_slice %118 {offsets = [1, 0, 0], sizes = [2, 2, 16], strides = [1, 1, 1]} : vector<3x3x16xf32> to vector<2x2x16xf32>
    %120 = vector.extract_strided_slice %98 {offsets = [0, 0, 0, 1, 0], sizes = [3, 1, 3, 1, 16], strides = [1, 1, 1, 1, 1]} : vector<3x2x3x2x16xf32> to vector<3x1x3x1x16xf32>
    %121 = vector.shape_cast %120 : vector<3x1x3x1x16xf32> to vector<3x3x16xf32>
    %122 = vector.extract_strided_slice %121 {offsets = [1, 0, 0], sizes = [2, 2, 16], strides = [1, 1, 1]} : vector<3x3x16xf32> to vector<2x2x16xf32>
    %123 = vector.extract_strided_slice %98 {offsets = [0, 0, 0, 0, 0], sizes = [3, 1, 3, 1, 16], strides = [1, 1, 1, 1, 1]} : vector<3x2x3x2x16xf32> to vector<3x1x3x1x16xf32>
    %124 = vector.shape_cast %123 : vector<3x1x3x1x16xf32> to vector<3x3x16xf32>
    %125 = vector.extract_strided_slice %124 {offsets = [1, 1, 0], sizes = [2, 2, 16], strides = [1, 1, 1]} : vector<3x3x16xf32> to vector<2x2x16xf32>
    %126 = tpu.concatenate %101, %104, %107, %110, %113, %116, %119, %122, %125 in 2 : vector<2x2x16xf32>, vector<2x2x16xf32>, vector<2x2x16xf32>, vector<2x2x16xf32>, vector<2x2x16xf32>, vector<2x2x16xf32>, vector<2x2x16xf32>, vector<2x2x16xf32>, vector<2x2x16xf32> -> vector<2x2x144xf32>
    %127 = vector.shape_cast %126 : vector<2x2x144xf32> to vector<4x144xf32>
    %128 = arith.truncf %127 : vector<4x144xf32> to vector<4x144xbf16>
    %cst_53 = arith.constant dense<0.000000e+00> : vector<4x32xf32>
    %129 = tpu.matmul %128, %92, %cst_53 {dimension_numbers = #tpu.dot_dimension_numbers<[1], [0], [0], [1], [0, 0, 1, 1], [], []>} : vector<4x144xbf16>, vector<144x32xbf16>, vector<4x32xf32> -> vector<4x32xf32>
    %130 = vector.broadcast %93 : vector<1x32xf32> to vector<4x32xf32>
    %131 = arith.addf %129, %130 : vector<4x32xf32>
    %cst_54 = arith.constant 0.000000e+00 : f32
    %132 = vector.broadcast %cst_54 : f32 to vector<4x32xf32>
    %133 = arith.maximumf %131, %132 : vector<4x32xf32>
    %134 = vector.shape_cast %133 : vector<4x32xf32> to vector<1x4x32xf32>
    %c0_55 = arith.constant 0 : index
    %c0_56 = arith.constant 0 : index
    %c0_57 = arith.constant 0 : index
    %135 = vector.load %arg10[%c0_55, %c0_56, %c0_57] : memref<1x4x32xf32, #tpu.memory_space<vmem>>, vector<1x4x32xf32>
    tpu.vector_store %arg10[%c0_55, %c0_56, %c0_57], %134 {strides = array<i32>} : memref<1x4x32xf32, #tpu.memory_space<vmem>>, vector<1x4x32xf32>,
    return
  }
  func.func @transform_0(%arg0: i32) -> (i32, i32, i32, i32) {
    %c0_i32 = arith.constant 0 : i32
    %c0_i32_0 = arith.constant 0 : i32
    %c0_i32_1 = arith.constant 0 : i32
    %c0_i32_2 = arith.constant 0 : i32
    return %arg0, %c0_i32, %c0_i32_0, %c0_i32_1 : i32, i32, i32, i32
  }
  func.func @transform_1(%arg0: i32) -> (i32, i32) {
    %c0_i32 = arith.constant 0 : i32
    %c0_i32_0 = arith.constant 0 : i32
    %c0_i32_1 = arith.constant 0 : i32
    return %c0_i32, %c0_i32_0 : i32, i32
  }
  func.func @transform_2(%arg0: i32) -> (i32, i32) {
    %c0_i32 = arith.constant 0 : i32
    %c0_i32_0 = arith.constant 0 : i32
    %c0_i32_1 = arith.constant 0 : i32
    return %c0_i32, %c0_i32_0 : i32, i32
  }
  func.func @transform_3(%arg0: i32) -> (i32, i32) {
    %c0_i32 = arith.constant 0 : i32
    %c0_i32_0 = arith.constant 0 : i32
    %c0_i32_1 = arith.constant 0 : i32
    return %c0_i32, %c0_i32_0 : i32, i32
  }
  func.func @transform_4(%arg0: i32) -> (i32, i32) {
    %c0_i32 = arith.constant 0 : i32
    %c0_i32_0 = arith.constant 0 : i32
    %c0_i32_1 = arith.constant 0 : i32
    return %c0_i32, %c0_i32_0 : i32, i32
  }
  func.func @transform_5(%arg0: i32) -> (i32, i32) {
    %c0_i32 = arith.constant 0 : i32
    %c0_i32_0 = arith.constant 0 : i32
    %c0_i32_1 = arith.constant 0 : i32
    return %c0_i32, %c0_i32_0 : i32, i32
  }
  func.func @transform_6(%arg0: i32) -> (i32, i32) {
    %c0_i32 = arith.constant 0 : i32
    %c0_i32_0 = arith.constant 0 : i32
    %c0_i32_1 = arith.constant 0 : i32
    return %c0_i32, %c0_i32_0 : i32, i32
  }
  func.func @transform_7(%arg0: i32) -> (i32, i32, i32) {
    %c0_i32 = arith.constant 0 : i32
    %c0_i32_0 = arith.constant 0 : i32
    %c0_i32_1 = arith.constant 0 : i32
    return %arg0, %c0_i32, %c0_i32_0 : i32, i32, i32
  }
  func.func @transform_8(%arg0: i32) -> (i32, i32, i32) {
    %c0_i32 = arith.constant 0 : i32
    %c0_i32_0 = arith.constant 0 : i32
    %c0_i32_1 = arith.constant 0 : i32
    return %arg0, %c0_i32, %c0_i32_0 : i32, i32, i32
  }
  func.func @transform_9(%arg0: i32) -> (i32, i32, i32) {
    %c0_i32 = arith.constant 0 : i32
    %c0_i32_0 = arith.constant 0 : i32
    %c0_i32_1 = arith.constant 0 : i32
    return %arg0, %c0_i32, %c0_i32_0 : i32, i32, i32
  }
}

</mosaic_0001>

<llo_original>
// kernel: _encoder_forward_jit.1
$region0: #{_encoder_forward_jit.1}
  #allocation0 [shape = 'u32[]', space=smem, size = 0x4, offset = 0x4, fixed_abs, tag = 'smem constant byte address 0x4 - core index']
  #allocation1 [shape = 'u32[144,128]{1,0:T(1,128)}', space=vmem, size = 0x12000, scoped, tag = 'internal scratch']
  #allocation2 [shape = 'f32[18,18,4]{2,1,0:T(8,128)}', space=vmem, size = 0x36000, scoped, tag = 'scratch operand']
  #allocation3 [shape = 'f32[10,10,8]{2,1,0:T(8,128)}', space=vmem, size = 0x14000, scoped, tag = 'scratch operand']
  #allocation4 [shape = 'f32[6,6,16]{2,1,0:T(8,128)}', space=vmem, size = 0x6000, scoped, tag = 'scratch operand']
  %s0 = inlined_call_operand.vmem [shape: f32[2,16,16,4], index: 0, kind: input, shape index: {}]
  %s1 = inlined_call_operand.vmem [shape: bf16[36,8], index: 1, kind: input, shape index: {}]
  %s2 = inlined_call_operand.vmem [shape: f32[1,8], index: 2, kind: input, shape index: {}]
  %s3 = inlined_call_operand.vmem [shape: bf16[72,16], index: 3, kind: input, shape index: {}]
  %s4 = inlined_call_operand.vmem [shape: f32[1,16], index: 4, kind: input, shape index: {}]
  %s5 = inlined_call_operand.vmem [shape: bf16[144,32], index: 5, kind: input, shape index: {}]
  %s6 = inlined_call_operand.vmem [shape: f32[1,32], index: 6, kind: input, shape index: {}]
  %s7 = inlined_call_operand.vmem [shape: f32[2,64,8], index: 7, kind: output, shape index: {0}]
  %s8 = inlined_call_operand.hbm [shape: f32[2,16,16], index: 8, kind: output, shape index: {1}]
  %s9 = inlined_call_operand.hbm [shape: f32[2,4,32], index: 9, kind: output, shape index: {2}]
  %10 = xla_tuple %s7, %s8, %s9
  %s11 = sld [smem:[#allocation0]]
  $region77: #{_encoder_forward_jit.1} parent=0
    _
  %s13 = ssub.s32 1, %s11
  %s14 = scalar_select 0, %s13, %s11
  $region1: #{_encoder_forward_jit.1} parent=0
    #allocation5 [shape = 'u8[16384]{0}', space=vmem, size = 0x4000, scoped, tag = 'output window, operand 1']
    #allocation6 [shape = 's32[2]{0}', space=sflag, size = 0x8, scoped, tag = 'scoped memory for _encoder_forward_jit.1']
    #allocation7 [shape = 'u8[4096]{0}', space=vmem, size = 0x1000, scoped, tag = 'output window, operand 2']
    #allocation8 [shape = 's32[2]{0}', space=sflag, size = 0x8, scoped, tag = 'scoped memory for _encoder_forward_jit.1']
    %15 = vsyncpa [#allocation6], 0
    %s16 = scalar_lea.sflag [#allocation6], 1
    %17 = vsyncpa %s16, 0
    %18 = vsyncpa [#allocation8], 0
    %s19 = scalar_lea.sflag [#allocation8], 1
    %20 = vsyncpa %s19, 0
    loop: start=0, step=1, limit=4
    $region2: #{_encoder_forward_jit.1} parent=1 // loop_pre_header
      _
    $region3: #{_encoder_forward_jit.1} parent=1 // loop_header
      %s22 = sphi 0, %s26
      %p23 = scmp.ge.s32.totalorder %s22, 4
      %s32 = sphi 0, %s34
      %s35 = sphi 0, %s32
      %s36 = sphi 0, %s35
      %s52 = sphi 0, %s36
      %s56 = sphi 0, %s56
      %s58 = sphi 0, %s56
      %s59 = sphi 0, %s58
      %s73 = sphi 0, %s59
      %s77 = sphi 0, %s77
      %s79 = sphi 0, %s77
      %s80 = sphi 0, %s79
      %s94 = sphi 0, %s80
      %s98 = sphi 0, %s98
      %s100 = sphi 0, %s98
      %s101 = sphi 0, %s100
      %s115 = sphi 0, %s101
      %s119 = sphi 0, %s119
      %s121 = sphi 0, %s119
      %s122 = sphi 0, %s121
      %s136 = sphi 0, %s122
      %s140 = sphi 0, %s140
      %s142 = sphi 0, %s140
      %s143 = sphi 0, %s142
      %s157 = sphi 0, %s143
      %s161 = sphi 0, %s161
      %s163 = sphi 0, %s161
      %s164 = sphi 0, %s163
      %s178 = sphi 0, %s164
      %s184 = sphi 0, %s186
      %s187 = sphi 0, %s184
      %s188 = sphi 0, %s187
      %s204 = sphi 0, %s188
      %s210 = sphi 0, %s212
      %s213 = sphi 0, %s210
      %s214 = sphi 0, %s213
      %s230 = sphi 0, %s214
      %s236 = sphi 0, %s238
      %s239 = sphi 0, %s236
      %s240 = sphi 0, %s239
      %s256 = sphi 0, %s240
    $region4: #{_encoder_forward_jit.1} parent=1 // loop_header_branch
      %25 = sbr.rel (%p23) target = $region8
    $region5: #{_encoder_forward_jit.1} parent=1 // loop_body
      %s27 = ssub.s32 %s22, 1
      %s28 = ssub.s32 %s22, 2
      %s29 = sadd.s32 %s22, 1
      %s30 = ssub.s32 %s22, %s29
      %p31 = scmp.eq.s32.totalorder %s30, 0
      %s33 = sadd.s32 %s32, 1
      %s34 = scalar_select %p31, %s32, %s33
      %p37 = pneg %p31
      %p38 = scmp.eq.s32.totalorder %s22, 1
      %p39 = por %p37, %p38
      %p40 = scmp.ne.s32.totalorder %s32, %s35
      %p41 = scmp.eq.s32.totalorder %s22, 0
      %p42 = por %p40, %p41
      %p43 = scmp.ne.s32.totalorder %s32, %s35
      %p44 = scmp.eq.s32.totalorder %s27, 1
      %p45 = por %p43, %p44
      %p46 = scmp.ne.s32.totalorder %s35, %s36
      %p47 = scmp.eq.s32.totalorder %s27, 0
      %p48 = por %p46, %p47
      %p49 = scmp.ne.s32.totalorder %s35, %s36
      %p50 = scmp.eq.s32.totalorder %s28, 1
      %p51 = por %p49, %p50
      %p53 = scmp.ne.s32.totalorder %s36, %s52
      %p54 = scmp.eq.s32.totalorder %s28, 0
      %p55 = por %p53, %p54
      %s57 = sadd.s32 %s56, 1
      %p60 = scmp.eq.s32.totalorder %s22, 1
      %p61 = scmp.ne.s32.totalorder %s56, %s58
      %p62 = scmp.eq.s32.totalorder %s22, 0
      %p63 = por %p61, %p62
      %p64 = scmp.ne.s32.totalorder %s56, %s58
      %p65 = scmp.eq.s32.totalorder %s27, 1
      %p66 = por %p64, %p65
      %p67 = scmp.ne.s32.totalorder %s58, %s59
      %p68 = scmp.eq.s32.totalorder %s27, 0
      %p69 = por %p67, %p68
      %p70 = scmp.ne.s32.totalorder %s58, %s59
      %p71 = scmp.eq.s32.totalorder %s28, 1
      %p72 = por %p70, %p71
      %p74 = scmp.ne.s32.totalorder %s59, %s73
      %p75 = scmp.eq.s32.totalorder %s28, 0
      %p76 = por %p74, %p75
      %s78 = sadd.s32 %s77, 1
      %p81 = scmp.eq.s32.totalorder %s22, 1
      %p82 = scmp.ne.s32.totalorder %s77, %s79
      %p83 = scmp.eq.s32.totalorder %s22, 0
      %p84 = por %p82, %p83
      %p85 = scmp.ne.s32.totalorder %s77, %s79
      %p86 = scmp.eq.s32.totalorder %s27, 1
      %p87 = por %p85, %p86
      %p88 = scmp.ne.s32.totalorder %s79, %s80
      %p89 = scmp.eq.s32.totalorder %s27, 0
      %p90 = por %p88, %p89
      %p91 = scmp.ne.s32.totalorder %s79, %s80
      %p92 = scmp.eq.s32.totalorder %s28, 1
      %p93 = por %p91, %p92
      %p95 = scmp.ne.s32.totalorder %s80, %s94
      %p96 = scmp.eq.s32.totalorder %s28, 0
      %p97 = por %p95, %p96
      %s99 = sadd.s32 %s98, 1
      %p102 = scmp.eq.s32.totalorder %s22, 1
      %p103 = scmp.ne.s32.totalorder %s98, %s100
      %p104 = scmp.eq.s32.totalorder %s22, 0
      %p105 = por %p103, %p104
      %p106 = scmp.ne.s32.totalorder %s98, %s100
      %p107 = scmp.eq.s32.totalorder %s27, 1
      %p108 = por %p106, %p107
      %p109 = scmp.ne.s32.totalorder %s100, %s101
      %p110 = scmp.eq.s32.totalorder %s27, 0
      %p111 = por %p109, %p110
      %p112 = scmp.ne.s32.totalorder %s100, %s101
      %p113 = scmp.eq.s32.totalorder %s28, 1
      %p114 = por %p112, %p113
      %p116 = scmp.ne.s32.totalorder %s101, %s115
      %p117 = scmp.eq.s32.totalorder %s28, 0
      %p118 = por %p116, %p117
      %s120 = sadd.s32 %s119, 1
      %p123 = scmp.eq.s32.totalorder %s22, 1
      %p124 = scmp.ne.s32.totalorder %s119, %s121
      %p125 = scmp.eq.s32.totalorder %s22, 0
      %p126 = por %p124, %p125
      %p127 = scmp.ne.s32.totalorder %s119, %s121
      %p128 = scmp.eq.s32.totalorder %s27, 1
      %p129 = por %p127, %p128
      %p130 = scmp.ne.s32.totalorder %s121, %s122
      %p131 = scmp.eq.s32.totalorder %s27, 0
      %p132 = por %p130, %p131
      %p133 = scmp.ne.s32.totalorder %s121, %s122
      %p134 = scmp.eq.s32.totalorder %s28, 1
      %p135 = por %p133, %p134
      %p137 = scmp.ne.s32.totalorder %s122, %s136
      %p138 = scmp.eq.s32.totalorder %s28, 0
      %p139 = por %p137, %p138
      %s141 = sadd.s32 %s140, 1
      %p144 = scmp.eq.s32.totalorder %s22, 1
      %p145 = scmp.ne.s32.totalorder %s140, %s142
      %p146 = scmp.eq.s32.totalorder %s22, 0
      %p147 = por %p145, %p146
      %p148 = scmp.ne.s32.totalorder %s140, %s142
      %p149 = scmp.eq.s32.totalorder %s27, 1
      %p150 = por %p148, %p149
      %p151 = scmp.ne.s32.totalorder %s142, %s143
      %p152 = scmp.eq.s32.totalorder %s27, 0
      %p153 = por %p151, %p152
      %p154 = scmp.ne.s32.totalorder %s142, %s143
      %p155 = scmp.eq.s32.totalorder %s28, 1
      %p156 = por %p154, %p155
      %p158 = scmp.ne.s32.totalorder %s143, %s157
      %p159 = scmp.eq.s32.totalorder %s28, 0
      %p160 = por %p158, %p159
      %s162 = sadd.s32 %s161, 1
      %p165 = scmp.eq.s32.totalorder %s22, 1
      %p166 = scmp.ne.s32.totalorder %s161, %s163
      %p167 = scmp.eq.s32.totalorder %s22, 0
      %p168 = por %p166, %p167
      %p169 = scmp.ne.s32.totalorder %s161, %s163
      %p170 = scmp.eq.s32.totalorder %s27, 1
      %p171 = por %p169, %p170
      %p172 = scmp.ne.s32.totalorder %s163, %s164
      %p173 = scmp.eq.s32.totalorder %s27, 0
      %p174 = por %p172, %p173
      %p175 = scmp.ne.s32.totalorder %s163, %s164
      %p176 = scmp.eq.s32.totalorder %s28, 1
      %p177 = por %p175, %p176
      %p179 = scmp.ne.s32.totalorder %s164, %s178
      %p180 = scmp.eq.s32.totalorder %s28, 0
      %p181 = por %p179, %p180
      %s182 = ssub.s32 %s22, %s29
      %p183 = scmp.eq.s32.totalorder %s182, 0
      %s185 = sadd.s32 %s184, 1
      %s186 = scalar_select %p183, %s184, %s185
      %p189 = pneg %p183
      %p190 = scmp.eq.s32.totalorder %s22, 1
      %p191 = por %p189, %p190
      %p192 = scmp.ne.s32.totalorder %s184, %s187
      %p193 = scmp.eq.s32.totalorder %s22, 0
      %p194 = por %p192, %p193
      %p195 = scmp.ne.s32.totalorder %s184, %s187
      %p196 = scmp.eq.s32.totalorder %s27, 1
      %p197 = por %p195, %p196
      %p198 = scmp.ne.s32.totalorder %s187, %s188
      %p199 = scmp.eq.s32.totalorder %s27, 0
      %p200 = por %p198, %p199
      %p201 = scmp.ne.s32.totalorder %s187, %s188
      %p202 = scmp.eq.s32.totalorder %s28, 1
      %p203 = por %p201, %p202
      %p205 = scmp.ne.s32.totalorder %s188, %s204
      %p206 = scmp.eq.s32.totalorder %s28, 0
      %p207 = por %p205, %p206
      %s208 = ssub.s32 %s22, %s29
      %p209 = scmp.eq.s32.totalorder %s208, 0
      %s211 = sadd.s32 %s210, 1
      %s212 = scalar_select %p209, %s210, %s211
      %p215 = pneg %p209
      %p216 = scmp.eq.s32.totalorder %s22, 1
      %p217 = por %p215, %p216
      %p218 = scmp.ne.s32.totalorder %s210, %s213
      %p219 = scmp.eq.s32.totalorder %s22, 0
      %p220 = por %p218, %p219
      %p221 = scmp.ne.s32.totalorder %s210, %s213
      %p222 = scmp.eq.s32.totalorder %s27, 1
      %p223 = por %p221, %p222
      %p224 = scmp.ne.s32.totalorder %s213, %s214
      %p225 = scmp.eq.s32.totalorder %s27, 0
      %p226 = por %p224, %p225
      %p227 = scmp.ne.s32.totalorder %s213, %s214
      %p228 = scmp.eq.s32.totalorder %s28, 1
      %p229 = por %p227, %p228
      %p231 = scmp.ne.s32.totalorder %s214, %s230
      %p232 = scmp.eq.s32.totalorder %s28, 0
      %p233 = por %p231, %p232
      %s234 = ssub.s32 %s22, %s29
      %p235 = scmp.eq.s32.totalorder %s234, 0
      %s237 = sadd.s32 %s236, 1
      %s238 = scalar_select %p235, %s236, %s237
      %p241 = pneg %p235
      %p242 = scmp.eq.s32.totalorder %s22, 1
      %p243 = por %p241, %p242
      %p244 = scmp.ne.s32.totalorder %s236, %s239
      %p245 = scmp.eq.s32.totalorder %s22, 0
      %p246 = por %p244, %p245
      %p247 = scmp.ne.s32.totalorder %s236, %s239
      %p248 = scmp.eq.s32.totalorder %s27, 1
      %p249 = por %p247, %p248
      %p250 = scmp.ne.s32.totalorder %s239, %s240
      %p251 = scmp.eq.s32.totalorder %s27, 0
      %p252 = por %p250, %p251
      %p253 = scmp.ne.s32.totalorder %s239, %s240
      %p254 = scmp.eq.s32.totalorder %s28, 1
      %p255 = por %p253, %p254
      %p257 = scmp.ne.s32.totalorder %s240, %s256
      %p258 = scmp.eq.s32.totalorder %s28, 0
      %p259 = por %p257, %p258
      %p260 = scmp.le.s32.totalorder 1, %s22
      %p261 = scmp.lt.s32.totalorder %s22, 3
      %p262 = pnand %p260, %p261
      %p263 = pneg %p262
      // Predicated region
      $region9: #{_encoder_forward_jit.1} parent=5 // pred_check
        _
      $region10: #{_encoder_forward_jit.1} parent=5 // pred_check_branch
        %265 = sbr.rel (%p262) target = $region12
      $region11: #{_encoder_forward_jit.1} parent=5 // pred_region
        %s266 = ssub.s32 %s22, 1
        // Predicated region
        $region13: #{_encoder_forward_jit.1} parent=11 // pred_check
          %p267 = pneg %p69
        $region14: #{_encoder_forward_jit.1} parent=11 // pred_check_branch
          %269 = sbr.rel (%p267) target = $region16
        $region15: #{_encoder_forward_jit.1} parent=11 // pred_region
          _
        $region16: #{_encoder_forward_jit.1} parent=11 // pred_fallthru
          _
        // Predicated region
        $region17: #{_encoder_forward_jit.1} parent=11 // pred_check
          %p270 = pneg %p90
        $region18: #{_encoder_forward_jit.1} parent=11 // pred_check_branch
          %272 = sbr.rel (%p270) target = $region20
        $region19: #{_encoder_forward_jit.1} parent=11 // pred_region
          _
        $region20: #{_encoder_forward_jit.1} parent=11 // pred_fallthru
          _
        // Predicated region
        $region21: #{_encoder_forward_jit.1} parent=11 // pred_check
          %p273 = pneg %p111
        $region22: #{_encoder_forward_jit.1} parent=11 // pred_check_branch
          %275 = sbr.rel (%p273) target = $region24
        $region23: #{_encoder_forward_jit.1} parent=11 // pred_region
          _
        $region24: #{_encoder_forward_jit.1} parent=11 // pred_fallthru
          _
        // Predicated region
        $region25: #{_encoder_forward_jit.1} parent=11 // pred_check
          %p276 = pneg %p132
        $region26: #{_encoder_forward_jit.1} parent=11 // pred_check_branch
          %278 = sbr.rel (%p276) target = $region28
        $region27: #{_encoder_forward_jit.1} parent=11 // pred_region
          _
        $region28: #{_encoder_forward_jit.1} parent=11 // pred_fallthru
          _
        // Predicated region
        $region29: #{_encoder_forward_jit.1} parent=11 // pred_check
          %p279 = pneg %p153
        $region30: #{_encoder_forward_jit.1} parent=11 // pred_check_branch
          %281 = sbr.rel (%p279) target = $region32
        $region31: #{_encoder_forward_jit.1} parent=11 // pred_region
          _
        $region32: #{_encoder_forward_jit.1} parent=11 // pred_fallthru
          _
        // Predicated region
        $region33: #{_encoder_forward_jit.1} parent=11 // pred_check
          %p282 = pneg %p174
        $region34: #{_encoder_forward_jit.1} parent=11 // pred_check_branch
          %284 = sbr.rel (%p282) target = $region36
        $region35: #{_encoder_forward_jit.1} parent=11 // pred_region
          _
        $region36: #{_encoder_forward_jit.1} parent=11 // pred_fallthru
          _
      $region12: #{_encoder_forward_jit.1} parent=5 // pred_fallthru
        _
      %p285 = scmp.lt.s32.totalorder %s22, 2
      // Predicated region
      $region37: #{_encoder_forward_jit.1} parent=5 // pred_check
        %p286 = pneg %p285
      $region38: #{_encoder_forward_jit.1} parent=5 // pred_check_branch
        %288 = sbr.rel (%p286) target = $region40
      $region39: #{_encoder_forward_jit.1} parent=5 // pred_region
        // Predicated region
        $region41: #{_encoder_forward_jit.1} parent=39 // pred_check
          %p289 = pneg %p42
        $region42: #{_encoder_forward_jit.1} parent=39 // pred_check_branch
          %291 = sbr.rel (%p289) target = $region44
        $region43: #{_encoder_forward_jit.1} parent=39 // pred_region
          %p292 = scmp.lt.s32.totalorder %s22, 1
          %s293 = scalar_select %p292, %s22, 1
          %s294 = smul.addr %s293, 32
          %s295 = smul.addr %s294, 8
          %s296 = scalar_lea.vmem %s0, %s295
        $region44: #{_encoder_forward_jit.1} parent=39 // pred_fallthru
          _
      $region40: #{_encoder_forward_jit.1} parent=5 // pred_fallthru
        _
      %p297 = scmp.le.s32.totalorder 1, %s22
      %p298 = scmp.lt.s32.totalorder %s22, 3
      %p299 = pnand %p297, %p298
      %p300 = pneg %p299
      // Predicated region
      $region45: #{_encoder_forward_jit.1} parent=5 // pred_check
        _
      $region46: #{_encoder_forward_jit.1} parent=5 // pred_check_branch
        %302 = sbr.rel (%p299) target = $region48
      $region47: #{_encoder_forward_jit.1} parent=5 // pred_region
        %s303 = ssub.s32 %s22, 1
        %p304 = scmp.lt.s32.totalorder %s27, 1
        %s305 = scalar_select %p304, %s27, 1
        %s306 = smul.addr %s305, 32
        %s307 = smul.addr %s306, 8
        %s308 = scalar_lea.vmem %s0, %s307
        %p309 = pneg %p48
        %p310 = pneg %p45
        %p311 = pneg %p69
        %p312 = pneg %p66
        %p313 = pneg %p90
        %p314 = pneg %p87
        %p315 = pneg %p111
        %p316 = pneg %p108
        %p317 = pneg %p132
        %p318 = pneg %p129
        %p319 = pneg %p153
        %p320 = pneg %p150
        %p321 = pneg %p174
        %p322 = pneg %p171
        %p323 = pneg %p200
        %p324 = pneg %p197
        %p325 = scmp.lt.s32.totalorder %s27, 1
        %s326 = scalar_select %p325, %s27, 1
        %s327 = smul.addr %s326, 8
        %s328 = smul.addr %s327, 8
        %s329 = scalar_lea.vmem %s7, %s328
        %p330 = pneg %p226
        %p331 = pneg %p223
        %s332 = sand.u32 %s213, 1
        %s333 = scalar_lea.sflag [#allocation6], %s332
        %s334 = sand.u32 %s213, 1
        %s335 = smul.addr %s334, 16
        %s336 = scalar_lea.vmem [#allocation5], %s335
        %p337 = pneg %p252
        %p338 = pneg %p249
        %s339 = sand.u32 %s239, 1
        %s340 = scalar_lea.sflag [#allocation8], %s339
        %s341 = sand.u32 %s239, 1
        %s342 = smul.addr %s341, 4
        %s343 = scalar_lea.vmem [#allocation7], %s342
        %p344 = scmp.lt.s32.totalorder %s27, 1
        %s345 = scalar_select %p344, %s27, 1
        %s346 = smul.addr %s345, 32
        %s347 = smul.addr %s346, 8
        %s348 = scalar_lea.vmem %s0, %s347
        %p349 = scmp.lt.s32.totalorder %s27, 1
        %s350 = scalar_select %p349, %s27, 1
        %s351 = smul.addr %s350, 8
        %s352 = smul.addr %s351, 8
        %s353 = scalar_lea.vmem %s7, %s352
        %v355 = vld [vmem:[%s348] sm:$0xff]
        %v356 = vld [vmem:[%s348 + $0x8] sm:$0xff]
        %v357 = vld [vmem:[%s348 + $0x10] sm:$0xff]
        %v358 = vld [vmem:[%s348 + $0x18] sm:$0xff]
        %v359 = vld [vmem:[%s348 + $0x20] sm:$0xff]
        %v360 = vld [vmem:[%s348 + $0x28] sm:$0xff]
        %v361 = vld [vmem:[%s348 + $0x30] sm:$0xff]
        %v362 = vld [vmem:[%s348 + $0x38] sm:$0xff]
        %v363 = vld [vmem:[%s348 + $0x40] sm:$0xff]
        %v364 = vld [vmem:[%s348 + $0x48] sm:$0xff]
        %v365 = vld [vmem:[%s348 + $0x50] sm:$0xff]
        %v366 = vld [vmem:[%s348 + $0x58] sm:$0xff]
        %v367 = vld [vmem:[%s348 + $0x60] sm:$0xff]
        %v368 = vld [vmem:[%s348 + $0x68] sm:$0xff]
        %v369 = vld [vmem:[%s348 + $0x70] sm:$0xff]
        %v370 = vld [vmem:[%s348 + $0x78] sm:$0xff]
        %v371 = vld [vmem:[%s348 + $0x80] sm:$0xff]
        %v372 = vld [vmem:[%s348 + $0x88] sm:$0xff]
        %v373 = vld [vmem:[%s348 + $0x90] sm:$0xff]
        %v374 = vld [vmem:[%s348 + $0x98] sm:$0xff]
        %v375 = vld [vmem:[%s348 + $0xa0] sm:$0xff]
        %v376 = vld [vmem:[%s348 + $0xa8] sm:$0xff]
        %v377 = vld [vmem:[%s348 + $0xb0] sm:$0xff]
        %v378 = vld [vmem:[%s348 + $0xb8] sm:$0xff]
        %v379 = vld [vmem:[%s348 + $0xc0] sm:$0xff]
        %v380 = vld [vmem:[%s348 + $0xc8] sm:$0xff]
        %v381 = vld [vmem:[%s348 + $0xd0] sm:$0xff]
        %v382 = vld [vmem:[%s348 + $0xd8] sm:$0xff]
        %v383 = vld [vmem:[%s348 + $0xe0] sm:$0xff]
        %v384 = vld [vmem:[%s348 + $0xe8] sm:$0xff]
        %v385 = vld [vmem:[%s348 + $0xf0] sm:$0xff]
        %v386 = vld [vmem:[%s348 + $0xf8] sm:$0xff]
        %v387 = vld [vmem:[%s1] sm:$0xf]
        %v388 = vld [vmem:[%s1 + $0x4] sm:$0xf]
        %v389 = vld [vmem:[%s1 + $0x8] sm:$0xf]
        %v390 = vld [vmem:[%s1 + $0xc] sm:$0xf]
        %v391 = vld [vmem:[%s1 + $0x10] sm:$0x3]
        %v392 = vld [vmem:[%s2] sm:$0x1]
        %vm393 = vcmask 31744
        %394 = vst.msk [vmem:[#allocation2] sm:$0xff] %vm393, 0.0
        %395 = vst.msk [vmem:[#allocation2 + $0x8] sm:$0xff] %vm393, 0.0
        %vm396 = vcmask 25600
        %397 = vst.msk [vmem:[#allocation2 + $0x10] sm:$0x3] %vm396, 0.0
        %398 = vst.msk [vmem:[#allocation2 + $0x18] sm:$0xff] %vm393, 0.0
        %399 = vst.msk [vmem:[#allocation2 + $0x20] sm:$0xff] %vm393, 0.0
        %400 = vst.msk [vmem:[#allocation2 + $0x28] sm:$0x3] %vm396, 0.0
        %401 = vst.msk [vmem:[#allocation2 + $0x30] sm:$0xff] %vm393, 0.0
        %402 = vst.msk [vmem:[#allocation2 + $0x38] sm:$0xff] %vm393, 0.0
        %403 = vst.msk [vmem:[#allocation2 + $0x40] sm:$0x3] %vm396, 0.0
        %404 = vst.msk [vmem:[#allocation2 + $0x48] sm:$0xff] %vm393, 0.0
        %405 = vst.msk [vmem:[#allocation2 + $0x50] sm:$0xff] %vm393, 0.0
        %406 = vst.msk [vmem:[#allocation2 + $0x58] sm:$0x3] %vm396, 0.0
        %407 = vst.msk [vmem:[#allocation2 + $0x60] sm:$0xff] %vm393, 0.0
        %408 = vst.msk [vmem:[#allocation2 + $0x68] sm:$0xff] %vm393, 0.0
        %409 = vst.msk [vmem:[#allocation2 + $0x70] sm:$0x3] %vm396, 0.0
        %410 = vst.msk [vmem:[#allocation2 + $0x78] sm:$0xff] %vm393, 0.0
        %411 = vst.msk [vmem:[#allocation2 + $0x80] sm:$0xff] %vm393, 0.0
        %412 = vst.msk [vmem:[#allocation2 + $0x88] sm:$0x3] %vm396, 0.0
        %413 = vst.msk [vmem:[#allocation2 + $0x90] sm:$0xff] %vm393, 0.0
        %414 = vst.msk [vmem:[#allocation2 + $0x98] sm:$0xff] %vm393, 0.0
        %415 = vst.msk [vmem:[#allocation2 + $0xa0] sm:$0x3] %vm396, 0.0
        %416 = vst.msk [vmem:[#allocation2 + $0xa8] sm:$0xff] %vm393, 0.0
        %417 = vst.msk [vmem:[#allocation2 + $0xb0] sm:$0xff] %vm393, 0.0
        %418 = vst.msk [vmem:[#allocation2 + $0xb8] sm:$0x3] %vm396, 0.0
        %419 = vst.msk [vmem:[#allocation2 + $0xc0] sm:$0xff] %vm393, 0.0
        %420 = vst.msk [vmem:[#allocation2 + $0xc8] sm:$0xff] %vm393, 0.0
        %421 = vst.msk [vmem:[#allocation2 + $0xd0] sm:$0x3] %vm396, 0.0
        %422 = vst.msk [vmem:[#allocation2 + $0xd8] sm:$0xff] %vm393, 0.0
        %423 = vst.msk [vmem:[#allocation2 + $0xe0] sm:$0xff] %vm393, 0.0
        %424 = vst.msk [vmem:[#allocation2 + $0xe8] sm:$0x3] %vm396, 0.0
        %425 = vst.msk [vmem:[#allocation2 + $0xf0] sm:$0xff] %vm393, 0.0
        %426 = vst.msk [vmem:[#allocation2 + $0xf8] sm:$0xff] %vm393, 0.0
        %427 = vst.msk [vmem:[#allocation2 + $0x100] sm:$0x3] %vm396, 0.0
        %428 = vst.msk [vmem:[#allocation2 + $0x108] sm:$0xff] %vm393, 0.0
        %429 = vst.msk [vmem:[#allocation2 + $0x110] sm:$0xff] %vm393, 0.0
        %430 = vst.msk [vmem:[#allocation2 + $0x118] sm:$0x3] %vm396, 0.0
        %431 = vst.msk [vmem:[#allocation2 + $0x120] sm:$0xff] %vm393, 0.0
        %432 = vst.msk [vmem:[#allocation2 + $0x128] sm:$0xff] %vm393, 0.0
        %433 = vst.msk [vmem:[#allocation2 + $0x130] sm:$0x3] %vm396, 0.0
        %434 = vst.msk [vmem:[#allocation2 + $0x138] sm:$0xff] %vm393, 0.0
        %435 = vst.msk [vmem:[#allocation2 + $0x140] sm:$0xff] %vm393, 0.0
        %436 = vst.msk [vmem:[#allocation2 + $0x148] sm:$0x3] %vm396, 0.0
        %437 = vst.msk [vmem:[#allocation2 + $0x150] sm:$0xff] %vm393, 0.0
        %438 = vst.msk [vmem:[#allocation2 + $0x158] sm:$0xff] %vm393, 0.0
        %439 = vst.msk [vmem:[#allocation2 + $0x160] sm:$0x3] %vm396, 0.0
        %440 = vst.msk [vmem:[#allocation2 + $0x168] sm:$0xff] %vm393, 0.0
        %441 = vst.msk [vmem:[#allocation2 + $0x170] sm:$0xff] %vm393, 0.0
        %442 = vst.msk [vmem:[#allocation2 + $0x178] sm:$0x3] %vm396, 0.0
        %443 = vst.msk [vmem:[#allocation2 + $0x180] sm:$0xff] %vm393, 0.0
        %444 = vst.msk [vmem:[#allocation2 + $0x188] sm:$0xff] %vm393, 0.0
        %445 = vst.msk [vmem:[#allocation2 + $0x190] sm:$0x3] %vm396, 0.0
        %446 = vst.msk [vmem:[#allocation2 + $0x198] sm:$0xff] %vm393, 0.0
        %447 = vst.msk [vmem:[#allocation2 + $0x1a0] sm:$0xff] %vm393, 0.0
        %448 = vst.msk [vmem:[#allocation2 + $0x1a8] sm:$0x3] %vm396, 0.0
        %s449 = scalar_lea.vmem [#allocation2], 24
        %450 = vst.msk [vmem:[%s449 + $0x1] sm:$0xff] %vm393, %v355
        %451 = vst.msk [vmem:[%s449 + $0x9] sm:$0xff] %vm393, %v356
        %452 = vst.msk [vmem:[%s449 + $0x19] sm:$0xff] %vm393, %v357
        %453 = vst.msk [vmem:[%s449 + $0x21] sm:$0xff] %vm393, %v358
        %454 = vst.msk [vmem:[%s449 + $0x31] sm:$0xff] %vm393, %v359
        %455 = vst.msk [vmem:[%s449 + $0x39] sm:$0xff] %vm393, %v360
        %456 = vst.msk [vmem:[%s449 + $0x49] sm:$0xff] %vm393, %v361
        %457 = vst.msk [vmem:[%s449 + $0x51] sm:$0xff] %vm393, %v362
        %458 = vst.msk [vmem:[%s449 + $0x61] sm:$0xff] %vm393, %v363
        %459 = vst.msk [vmem:[%s449 + $0x69] sm:$0xff] %vm393, %v364
        %460 = vst.msk [vmem:[%s449 + $0x79] sm:$0xff] %vm393, %v365
        %461 = vst.msk [vmem:[%s449 + $0x81] sm:$0xff] %vm393, %v366
        %462 = vst.msk [vmem:[%s449 + $0x91] sm:$0xff] %vm393, %v367
        %463 = vst.msk [vmem:[%s449 + $0x99] sm:$0xff] %vm393, %v368
        %464 = vst.msk [vmem:[%s449 + $0xa9] sm:$0xff] %vm393, %v369
        %465 = vst.msk [vmem:[%s449 + $0xb1] sm:$0xff] %vm393, %v370
        %466 = vst.msk [vmem:[%s449 + $0xc1] sm:$0xff] %vm393, %v371
        %467 = vst.msk [vmem:[%s449 + $0xc9] sm:$0xff] %vm393, %v372
        %468 = vst.msk [vmem:[%s449 + $0xd9] sm:$0xff] %vm393, %v373
        %469 = vst.msk [vmem:[%s449 + $0xe1] sm:$0xff] %vm393, %v374
        %470 = vst.msk [vmem:[%s449 + $0xf1] sm:$0xff] %vm393, %v375
        %471 = vst.msk [vmem:[%s449 + $0xf9] sm:$0xff] %vm393, %v376
        %472 = vst.msk [vmem:[%s449 + $0x109] sm:$0xff] %vm393, %v377
        %473 = vst.msk [vmem:[%s449 + $0x111] sm:$0xff] %vm393, %v378
        %474 = vst.msk [vmem:[%s449 + $0x121] sm:$0xff] %vm393, %v379
        %475 = vst.msk [vmem:[%s449 + $0x129] sm:$0xff] %vm393, %v380
        %476 = vst.msk [vmem:[%s449 + $0x139] sm:$0xff] %vm393, %v381
        %477 = vst.msk [vmem:[%s449 + $0x141] sm:$0xff] %vm393, %v382
        %478 = vst.msk [vmem:[%s449 + $0x151] sm:$0xff] %vm393, %v383
        %479 = vst.msk [vmem:[%s449 + $0x159] sm:$0xff] %vm393, %v384
        %480 = vst.msk [vmem:[%s449 + $0x169] sm:$0xff] %vm393, %v385
        %481 = vst.msk [vmem:[%s449 + $0x171] sm:$0xff] %vm393, %v386
        %v482 = vld [vmem:[#allocation2] sm:$0xff]
        %v483 = vld [vmem:[#allocation2 + $0x8] sm:$0xff]
        %v484 = vld [vmem:[#allocation2 + $0x10] sm:$0x3]
        %v485 = vld [vmem:[#allocation2 + $0x18] sm:$0xff]
        %v486 = vld [vmem:[#allocation2 + $0x20] sm:$0xff]
        %v487 = vld [vmem:[#allocation2 + $0x28] sm:$0x3]
        %v488 = vld [vmem:[#allocation2 + $0x30] sm:$0xff]
        %v489 = vld [vmem:[#allocation2 + $0x38] sm:$0xff]
        %v490 = vld [vmem:[#allocation2 + $0x40] sm:$0x3]
        %v491 = vld [vmem:[#allocation2 + $0x48] sm:$0xff]
        %v492 = vld [vmem:[#allocation2 + $0x50] sm:$0xff]
        %v493 = vld [vmem:[#allocation2 + $0x58] sm:$0x3]
        %v494 = vld [vmem:[#allocation2 + $0x60] sm:$0xff]
        %v495 = vld [vmem:[#allocation2 + $0x68] sm:$0xff]
        %v496 = vld [vmem:[#allocation2 + $0x70] sm:$0x3]
        %v497 = vld [vmem:[#allocation2 + $0x78] sm:$0xff]
        %v498 = vld [vmem:[#allocation2 + $0x80] sm:$0xff]
        %v499 = vld [vmem:[#allocation2 + $0x88] sm:$0x3]
        %v500 = vld [vmem:[#allocation2 + $0x90] sm:$0xff]
        %v501 = vld [vmem:[#allocation2 + $0x98] sm:$0xff]
        %v502 = vld [vmem:[#allocation2 + $0xa0] sm:$0x3]
        %v503 = vld [vmem:[#allocation2 + $0xa8] sm:$0xff]
        %v504 = vld [vmem:[#allocation2 + $0xb0] sm:$0xff]
        %v505 = vld [vmem:[#allocation2 + $0xb8] sm:$0x3]
        %v506 = vld [vmem:[#allocation2 + $0xc0] sm:$0xff]
        %v507 = vld [vmem:[#allocation2 + $0xc8] sm:$0xff]
        %v508 = vld [vmem:[#allocation2 + $0xd0] sm:$0x3]
        %v509 = vld [vmem:[#allocation2 + $0xd8] sm:$0xff]
        %v510 = vld [vmem:[#allocation2 + $0xe0] sm:$0xff]
        %v511 = vld [vmem:[#allocation2 + $0xe8] sm:$0x3]
        %v512 = vld [vmem:[#allocation2 + $0xf0] sm:$0xff]
        %v513 = vld [vmem:[#allocation2 + $0xf8] sm:$0xff]
        %v514 = vld [vmem:[#allocation2 + $0x100] sm:$0x3]
        %v515 = vld [vmem:[#allocation2 + $0x108] sm:$0xff]
        %v516 = vld [vmem:[#allocation2 + $0x110] sm:$0xff]
        %v517 = vld [vmem:[#allocation2 + $0x118] sm:$0x3]
        %v518 = vld [vmem:[#allocation2 + $0x120] sm:$0xff]
        %v519 = vld [vmem:[#allocation2 + $0x128] sm:$0xff]
        %v520 = vld [vmem:[#allocation2 + $0x130] sm:$0x3]
        %v521 = vld [vmem:[#allocation2 + $0x138] sm:$0xff]
        %v522 = vld [vmem:[#allocation2 + $0x140] sm:$0xff]
        %v523 = vld [vmem:[#allocation2 + $0x148] sm:$0x3]
        %v524 = vld [vmem:[#allocation2 + $0x150] sm:$0xff]
        %v525 = vld [vmem:[#allocation2 + $0x158] sm:$0xff]
        %v526 = vld [vmem:[#allocation2 + $0x160] sm:$0x3]
        %v527 = vld [vmem:[#allocation2 + $0x168] sm:$0xff]
        %v528 = vld [vmem:[#allocation2 + $0x170] sm:$0xff]
        %v529 = vld [vmem:[#allocation2 + $0x178] sm:$0x3]
        %v530 = vld [vmem:[#allocation2 + $0x180] sm:$0xff]
        %v531 = vld [vmem:[#allocation2 + $0x188] sm:$0xff]
        %v532 = vld [vmem:[#allocation2 + $0x190] sm:$0x3]
        %v584 = vcombine.high %v482, %v482
        %v586 = vunpack.c.l.s4 1983009808
        %v587 = vunpack.c.0.s8 %v586
        %v588 = vlaneseq
        %v589 = vshrl.u32 %v588, 7
        %v590 = vsub.s32 %v587, %v589
        %v591 = vrot.slane %v482, %v590
        %v593 = vunpack.c.l.s4 1983009808
        %v594 = vunpack.c.0.s8 %v593
        %v595 = vlaneseq
        %v596 = vshrl.u32 %v595, 7
        %v597 = vsub.s32 %v594, %v596
        %v598 = vrot.slane %v584, %v597
        %v599 = vcombine.high %v591, %v591
        %v600 = vcombine.high %v598, %v598
        %v601 = vcombine.high %v483, %v483
        %v603 = vunpack.c.l.s4 1983009808
        %v604 = vunpack.c.0.s8 %v603
        %v605 = vlaneseq
        %v606 = vshrl.u32 %v605, 7
        %v607 = vsub.s32 %v604, %v606
        %v608 = vrot.slane %v483, %v607
        %v610 = vunpack.c.l.s4 1983009808
        %v611 = vunpack.c.0.s8 %v610
        %v612 = vlaneseq
        %v613 = vshrl.u32 %v612, 7
        %v614 = vsub.s32 %v611, %v613
        %v615 = vrot.slane %v601, %v614
        %v616 = vcombine.high %v608, %v608
        %v617 = vcombine.high %v615, %v615
        %v619 = vunpack.c.l.s4 1983009808
        %v620 = vunpack.c.0.s8 %v619
        %v621 = vlaneseq
        %v622 = vshrl.u32 %v621, 7
        %v623 = vsub.s32 %v620, %v622
        %v624 = vrot.slane %v484, %v623
        %v625 = vcombine.high %v485, %v485
        %v627 = vunpack.c.l.s4 1983009808
        %v628 = vunpack.c.0.s8 %v627
        %v629 = vlaneseq
        %v630 = vshrl.u32 %v629, 7
        %v631 = vsub.s32 %v628, %v630
        %v632 = vrot.slane %v485, %v631
        %v634 = vunpack.c.l.s4 1983009808
        %v635 = vunpack.c.0.s8 %v634
        %v636 = vlaneseq
        %v637 = vshrl.u32 %v636, 7
        %v638 = vsub.s32 %v635, %v637
        %v639 = vrot.slane %v625, %v638
        %v640 = vcombine.high %v632, %v632
        %v641 = vcombine.high %v639, %v639
        %v642 = vcombine.high %v486, %v486
        %v644 = vunpack.c.l.s4 1983009808
        %v645 = vunpack.c.0.s8 %v644
        %v646 = vlaneseq
        %v647 = vshrl.u32 %v646, 7
        %v648 = vsub.s32 %v645, %v647
        %v649 = vrot.slane %v486, %v648
        %v651 = vunpack.c.l.s4 1983009808
        %v652 = vunpack.c.0.s8 %v651
        %v653 = vlaneseq
        %v654 = vshrl.u32 %v653, 7
        %v655 = vsub.s32 %v652, %v654
        %v656 = vrot.slane %v642, %v655
        %v657 = vcombine.high %v649, %v649
        %v658 = vcombine.high %v656, %v656
        %v660 = vunpack.c.l.s4 1983009808
        %v661 = vunpack.c.0.s8 %v660
        %v662 = vlaneseq
        %v663 = vshrl.u32 %v662, 7
        %v664 = vsub.s32 %v661, %v663
        %v665 = vrot.slane %v487, %v664
        %v666 = vcombine.high %v488, %v488
        %v668 = vunpack.c.l.s4 1983009808
        %v669 = vunpack.c.0.s8 %v668
        %v670 = vlaneseq
        %v671 = vshrl.u32 %v670, 7
        %v672 = vsub.s32 %v669, %v671
        %v673 = vrot.slane %v488, %v672
        %v675 = vunpack.c.l.s4 1983009808
        %v676 = vunpack.c.0.s8 %v675
        %v677 = vlaneseq
        %v678 = vshrl.u32 %v677, 7
        %v679 = vsub.s32 %v676, %v678
        %v680 = vrot.slane %v666, %v679
        %v681 = vcombine.high %v673, %v673
        %v682 = vcombine.high %v680, %v680
        %v683 = vcombine.high %v489, %v489
        %v685 = vunpack.c.l.s4 1983009808
        %v686 = vunpack.c.0.s8 %v685
        %v687 = vlaneseq
        %v688 = vshrl.u32 %v687, 7
        %v689 = vsub.s32 %v686, %v688
        %v690 = vrot.slane %v489, %v689
        %v692 = vunpack.c.l.s4 1983009808
        %v693 = vunpack.c.0.s8 %v692
        %v694 = vlaneseq
        %v695 = vshrl.u32 %v694, 7
        %v696 = vsub.s32 %v693, %v695
        %v697 = vrot.slane %v683, %v696
        %v698 = vcombine.high %v690, %v690
        %v699 = vcombine.high %v697, %v697
        %v701 = vunpack.c.l.s4 1983009808
        %v702 = vunpack.c.0.s8 %v701
        %v703 = vlaneseq
        %v704 = vshrl.u32 %v703, 7
        %v705 = vsub.s32 %v702, %v704
        %v706 = vrot.slane %v490, %v705
        %v707 = vcombine.high %v491, %v491
        %v709 = vunpack.c.l.s4 1983009808
        %v710 = vunpack.c.0.s8 %v709
        %v711 = vlaneseq
        %v712 = vshrl.u32 %v711, 7
        %v713 = vsub.s32 %v710, %v712
        %v714 = vrot.slane %v491, %v713
        %v716 = vunpack.c.l.s4 1983009808
        %v717 = vunpack.c.0.s8 %v716
        %v718 = vlaneseq
        %v719 = vshrl.u32 %v718, 7
        %v720 = vsub.s32 %v717, %v719
        %v721 = vrot.slane %v707, %v720
        %v722 = vcombine.high %v714, %v714
        %v723 = vcombine.high %v721, %v721
        %v724 = vcombine.high %v492, %v492
        %v726 = vunpack.c.l.s4 1983009808
        %v727 = vunpack.c.0.s8 %v726
        %v728 = vlaneseq
        %v729 = vshrl.u32 %v728, 7
        %v730 = vsub.s32 %v727, %v729
        %v731 = vrot.slane %v492, %v730
        %v733 = vunpack.c.l.s4 1983009808
        %v734 = vunpack.c.0.s8 %v733
        %v735 = vlaneseq
        %v736 = vshrl.u32 %v735, 7
        %v737 = vsub.s32 %v734, %v736
        %v738 = vrot.slane %v724, %v737
        %v739 = vcombine.high %v731, %v731
        %v740 = vcombine.high %v738, %v738
        %v742 = vunpack.c.l.s4 1983009808
        %v743 = vunpack.c.0.s8 %v742
        %v744 = vlaneseq
        %v745 = vshrl.u32 %v744, 7
        %v746 = vsub.s32 %v743, %v745
        %v747 = vrot.slane %v493, %v746
        %v748 = vcombine.high %v494, %v494
        %v750 = vunpack.c.l.s4 1983009808
        %v751 = vunpack.c.0.s8 %v750
        %v752 = vlaneseq
        %v753 = vshrl.u32 %v752, 7
        %v754 = vsub.s32 %v751, %v753
        %v755 = vrot.slane %v494, %v754
        %v757 = vunpack.c.l.s4 1983009808
        %v758 = vunpack.c.0.s8 %v757
        %v759 = vlaneseq
        %v760 = vshrl.u32 %v759, 7
        %v761 = vsub.s32 %v758, %v760
        %v762 = vrot.slane %v748, %v761
        %v763 = vcombine.high %v755, %v755
        %v764 = vcombine.high %v762, %v762
        %v765 = vcombine.high %v495, %v495
        %v767 = vunpack.c.l.s4 1983009808
        %v768 = vunpack.c.0.s8 %v767
        %v769 = vlaneseq
        %v770 = vshrl.u32 %v769, 7
        %v771 = vsub.s32 %v768, %v770
        %v772 = vrot.slane %v495, %v771
        %v774 = vunpack.c.l.s4 1983009808
        %v775 = vunpack.c.0.s8 %v774
        %v776 = vlaneseq
        %v777 = vshrl.u32 %v776, 7
        %v778 = vsub.s32 %v775, %v777
        %v779 = vrot.slane %v765, %v778
        %v780 = vcombine.high %v772, %v772
        %v781 = vcombine.high %v779, %v779
        %v783 = vunpack.c.l.s4 1983009808
        %v784 = vunpack.c.0.s8 %v783
        %v785 = vlaneseq
        %v786 = vshrl.u32 %v785, 7
        %v787 = vsub.s32 %v784, %v786
        %v788 = vrot.slane %v496, %v787
        %v789 = vcombine.high %v497, %v497
        %v791 = vunpack.c.l.s4 1983009808
        %v792 = vunpack.c.0.s8 %v791
        %v793 = vlaneseq
        %v794 = vshrl.u32 %v793, 7
        %v795 = vsub.s32 %v792, %v794
        %v796 = vrot.slane %v497, %v795
        %v798 = vunpack.c.l.s4 1983009808
        %v799 = vunpack.c.0.s8 %v798
        %v800 = vlaneseq
        %v801 = vshrl.u32 %v800, 7
        %v802 = vsub.s32 %v799, %v801
        %v803 = vrot.slane %v789, %v802
        %v804 = vcombine.high %v796, %v796
        %v805 = vcombine.high %v803, %v803
        %v806 = vcombine.high %v498, %v498
        %v808 = vunpack.c.l.s4 1983009808
        %v809 = vunpack.c.0.s8 %v808
        %v810 = vlaneseq
        %v811 = vshrl.u32 %v810, 7
        %v812 = vsub.s32 %v809, %v811
        %v813 = vrot.slane %v498, %v812
        %v815 = vunpack.c.l.s4 1983009808
        %v816 = vunpack.c.0.s8 %v815
        %v817 = vlaneseq
        %v818 = vshrl.u32 %v817, 7
        %v819 = vsub.s32 %v816, %v818
        %v820 = vrot.slane %v806, %v819
        %v821 = vcombine.high %v813, %v813
        %v822 = vcombine.high %v820, %v820
        %v824 = vunpack.c.l.s4 1983009808
        %v825 = vunpack.c.0.s8 %v824
        %v826 = vlaneseq
        %v827 = vshrl.u32 %v826, 7
        %v828 = vsub.s32 %v825, %v827
        %v829 = vrot.slane %v499, %v828
        %v830 = vcombine.high %v500, %v500
        %v832 = vunpack.c.l.s4 1983009808
        %v833 = vunpack.c.0.s8 %v832
        %v834 = vlaneseq
        %v835 = vshrl.u32 %v834, 7
        %v836 = vsub.s32 %v833, %v835
        %v837 = vrot.slane %v500, %v836
        %v839 = vunpack.c.l.s4 1983009808
        %v840 = vunpack.c.0.s8 %v839
        %v841 = vlaneseq
        %v842 = vshrl.u32 %v841, 7
        %v843 = vsub.s32 %v840, %v842
        %v844 = vrot.slane %v830, %v843
        %v845 = vcombine.high %v837, %v837
        %v846 = vcombine.high %v844, %v844
        %v847 = vcombine.high %v501, %v501
        %v849 = vunpack.c.l.s4 1983009808
        %v850 = vunpack.c.0.s8 %v849
        %v851 = vlaneseq
        %v852 = vshrl.u32 %v851, 7
        %v853 = vsub.s32 %v850, %v852
        %v854 = vrot.slane %v501, %v853
        %v856 = vunpack.c.l.s4 1983009808
        %v857 = vunpack.c.0.s8 %v856
        %v858 = vlaneseq
        %v859 = vshrl.u32 %v858, 7
        %v860 = vsub.s32 %v857, %v859
        %v861 = vrot.slane %v847, %v860
        %v862 = vcombine.high %v854, %v854
        %v863 = vcombine.high %v861, %v861
        %v865 = vunpack.c.l.s4 1983009808
        %v866 = vunpack.c.0.s8 %v865
        %v867 = vlaneseq
        %v868 = vshrl.u32 %v867, 7
        %v869 = vsub.s32 %v866, %v868
        %v870 = vrot.slane %v502, %v869
        %v871 = vcombine.high %v503, %v503
        %v873 = vunpack.c.l.s4 1983009808
        %v874 = vunpack.c.0.s8 %v873
        %v875 = vlaneseq
        %v876 = vshrl.u32 %v875, 7
        %v877 = vsub.s32 %v874, %v876
        %v878 = vrot.slane %v503, %v877
        %v880 = vunpack.c.l.s4 1983009808
        %v881 = vunpack.c.0.s8 %v880
        %v882 = vlaneseq
        %v883 = vshrl.u32 %v882, 7
        %v884 = vsub.s32 %v881, %v883
        %v885 = vrot.slane %v871, %v884
        %v886 = vcombine.high %v878, %v878
        %v887 = vcombine.high %v885, %v885
        %v888 = vcombine.high %v504, %v504
        %v890 = vunpack.c.l.s4 1983009808
        %v891 = vunpack.c.0.s8 %v890
        %v892 = vlaneseq
        %v893 = vshrl.u32 %v892, 7
        %v894 = vsub.s32 %v891, %v893
        %v895 = vrot.slane %v504, %v894
        %v897 = vunpack.c.l.s4 1983009808
        %v898 = vunpack.c.0.s8 %v897
        %v899 = vlaneseq
        %v900 = vshrl.u32 %v899, 7
        %v901 = vsub.s32 %v898, %v900
        %v902 = vrot.slane %v888, %v901
        %v903 = vcombine.high %v895, %v895
        %v904 = vcombine.high %v902, %v902
        %v906 = vunpack.c.l.s4 1983009808
        %v907 = vunpack.c.0.s8 %v906
        %v908 = vlaneseq
        %v909 = vshrl.u32 %v908, 7
        %v910 = vsub.s32 %v907, %v909
        %v911 = vrot.slane %v505, %v910
        %v912 = vcombine.high %v506, %v506
        %v914 = vunpack.c.l.s4 1983009808
        %v915 = vunpack.c.0.s8 %v914
        %v916 = vlaneseq
        %v917 = vshrl.u32 %v916, 7
        %v918 = vsub.s32 %v915, %v917
        %v919 = vrot.slane %v506, %v918
        %v921 = vunpack.c.l.s4 1983009808
        %v922 = vunpack.c.0.s8 %v921
        %v923 = vlaneseq
        %v924 = vshrl.u32 %v923, 7
        %v925 = vsub.s32 %v922, %v924
        %v926 = vrot.slane %v912, %v925
        %v927 = vcombine.high %v919, %v919
        %v928 = vcombine.high %v926, %v926
        %v929 = vcombine.high %v507, %v507
        %v931 = vunpack.c.l.s4 1983009808
        %v932 = vunpack.c.0.s8 %v931
        %v933 = vlaneseq
        %v934 = vshrl.u32 %v933, 7
        %v935 = vsub.s32 %v932, %v934
        %v936 = vrot.slane %v507, %v935
        %v938 = vunpack.c.l.s4 1983009808
        %v939 = vunpack.c.0.s8 %v938
        %v940 = vlaneseq
        %v941 = vshrl.u32 %v940, 7
        %v942 = vsub.s32 %v939, %v941
        %v943 = vrot.slane %v929, %v942
        %v944 = vcombine.high %v936, %v936
        %v945 = vcombine.high %v943, %v943
        %v947 = vunpack.c.l.s4 1983009808
        %v948 = vunpack.c.0.s8 %v947
        %v949 = vlaneseq
        %v950 = vshrl.u32 %v949, 7
        %v951 = vsub.s32 %v948, %v950
        %v952 = vrot.slane %v508, %v951
        %v953 = vcombine.high %v509, %v509
        %v955 = vunpack.c.l.s4 1983009808
        %v956 = vunpack.c.0.s8 %v955
        %v957 = vlaneseq
        %v958 = vshrl.u32 %v957, 7
        %v959 = vsub.s32 %v956, %v958
        %v960 = vrot.slane %v509, %v959
        %v962 = vunpack.c.l.s4 1983009808
        %v963 = vunpack.c.0.s8 %v962
        %v964 = vlaneseq
        %v965 = vshrl.u32 %v964, 7
        %v966 = vsub.s32 %v963, %v965
        %v967 = vrot.slane %v953, %v966
        %v968 = vcombine.high %v960, %v960
        %v969 = vcombine.high %v967, %v967
        %v970 = vcombine.high %v510, %v510
        %v972 = vunpack.c.l.s4 1983009808
        %v973 = vunpack.c.0.s8 %v972
        %v974 = vlaneseq
        %v975 = vshrl.u32 %v974, 7
        %v976 = vsub.s32 %v973, %v975
        %v977 = vrot.slane %v510, %v976
        %v979 = vunpack.c.l.s4 1983009808
        %v980 = vunpack.c.0.s8 %v979
        %v981 = vlaneseq
        %v982 = vshrl.u32 %v981, 7
        %v983 = vsub.s32 %v980, %v982
        %v984 = vrot.slane %v970, %v983
        %v985 = vcombine.high %v977, %v977
        %v986 = vcombine.high %v984, %v984
        %v988 = vunpack.c.l.s4 1983009808
        %v989 = vunpack.c.0.s8 %v988
        %v990 = vlaneseq
        %v991 = vshrl.u32 %v990, 7
        %v992 = vsub.s32 %v989, %v991
        %v993 = vrot.slane %v511, %v992
        %v994 = vcombine.high %v512, %v512
        %v996 = vunpack.c.l.s4 1983009808
        %v997 = vunpack.c.0.s8 %v996
        %v998 = vlaneseq
        %v999 = vshrl.u32 %v998, 7
        %v1000 = vsub.s32 %v997, %v999
        %v1001 = vrot.slane %v512, %v1000
        %v1003 = vunpack.c.l.s4 1983009808
        %v1004 = vunpack.c.0.s8 %v1003
        %v1005 = vlaneseq
        %v1006 = vshrl.u32 %v1005, 7
        %v1007 = vsub.s32 %v1004, %v1006
        %v1008 = vrot.slane %v994, %v1007
        %v1009 = vcombine.high %v1001, %v1001
        %v1010 = vcombine.high %v1008, %v1008
        %v1011 = vcombine.high %v513, %v513
        %v1013 = vunpack.c.l.s4 1983009808
        %v1014 = vunpack.c.0.s8 %v1013
        %v1015 = vlaneseq
        %v1016 = vshrl.u32 %v1015, 7
        %v1017 = vsub.s32 %v1014, %v1016
        %v1018 = vrot.slane %v513, %v1017
        %v1020 = vunpack.c.l.s4 1983009808
        %v1021 = vunpack.c.0.s8 %v1020
        %v1022 = vlaneseq
        %v1023 = vshrl.u32 %v1022, 7
        %v1024 = vsub.s32 %v1021, %v1023
        %v1025 = vrot.slane %v1011, %v1024
        %v1026 = vcombine.high %v1018, %v1018
        %v1027 = vcombine.high %v1025, %v1025
        %v1029 = vunpack.c.l.s4 1983009808
        %v1030 = vunpack.c.0.s8 %v1029
        %v1031 = vlaneseq
        %v1032 = vshrl.u32 %v1031, 7
        %v1033 = vsub.s32 %v1030, %v1032
        %v1034 = vrot.slane %v514, %v1033
        %v1035 = vcombine.high %v515, %v515
        %v1037 = vunpack.c.l.s4 1983009808
        %v1038 = vunpack.c.0.s8 %v1037
        %v1039 = vlaneseq
        %v1040 = vshrl.u32 %v1039, 7
        %v1041 = vsub.s32 %v1038, %v1040
        %v1042 = vrot.slane %v515, %v1041
        %v1044 = vunpack.c.l.s4 1983009808
        %v1045 = vunpack.c.0.s8 %v1044
        %v1046 = vlaneseq
        %v1047 = vshrl.u32 %v1046, 7
        %v1048 = vsub.s32 %v1045, %v1047
        %v1049 = vrot.slane %v1035, %v1048
        %v1050 = vcombine.high %v1042, %v1042
        %v1051 = vcombine.high %v1049, %v1049
        %v1052 = vcombine.high %v516, %v516
        %v1054 = vunpack.c.l.s4 1983009808
        %v1055 = vunpack.c.0.s8 %v1054
        %v1056 = vlaneseq
        %v1057 = vshrl.u32 %v1056, 7
        %v1058 = vsub.s32 %v1055, %v1057
        %v1059 = vrot.slane %v516, %v1058
        %v1061 = vunpack.c.l.s4 1983009808
        %v1062 = vunpack.c.0.s8 %v1061
        %v1063 = vlaneseq
        %v1064 = vshrl.u32 %v1063, 7
        %v1065 = vsub.s32 %v1062, %v1064
        %v1066 = vrot.slane %v1052, %v1065
        %v1067 = vcombine.high %v1059, %v1059
        %v1068 = vcombine.high %v1066, %v1066
        %v1070 = vunpack.c.l.s4 1983009808
        %v1071 = vunpack.c.0.s8 %v1070
        %v1072 = vlaneseq
        %v1073 = vshrl.u32 %v1072, 7
        %v1074 = vsub.s32 %v1071, %v1073
        %v1075 = vrot.slane %v517, %v1074
        %v1076 = vcombine.high %v518, %v518
        %v1078 = vunpack.c.l.s4 1983009808
        %v1079 = vunpack.c.0.s8 %v1078
        %v1080 = vlaneseq
        %v1081 = vshrl.u32 %v1080, 7
        %v1082 = vsub.s32 %v1079, %v1081
        %v1083 = vrot.slane %v518, %v1082
        %v1085 = vunpack.c.l.s4 1983009808
        %v1086 = vunpack.c.0.s8 %v1085
        %v1087 = vlaneseq
        %v1088 = vshrl.u32 %v1087, 7
        %v1089 = vsub.s32 %v1086, %v1088
        %v1090 = vrot.slane %v1076, %v1089
        %v1091 = vcombine.high %v1083, %v1083
        %v1092 = vcombine.high %v1090, %v1090
        %v1093 = vcombine.high %v519, %v519
        %v1095 = vunpack.c.l.s4 1983009808
        %v1096 = vunpack.c.0.s8 %v1095
        %v1097 = vlaneseq
        %v1098 = vshrl.u32 %v1097, 7
        %v1099 = vsub.s32 %v1096, %v1098
        %v1100 = vrot.slane %v519, %v1099
        %v1102 = vunpack.c.l.s4 1983009808
        %v1103 = vunpack.c.0.s8 %v1102
        %v1104 = vlaneseq
        %v1105 = vshrl.u32 %v1104, 7
        %v1106 = vsub.s32 %v1103, %v1105
        %v1107 = vrot.slane %v1093, %v1106
        %v1108 = vcombine.high %v1100, %v1100
        %v1109 = vcombine.high %v1107, %v1107
        %v1111 = vunpack.c.l.s4 1983009808
        %v1112 = vunpack.c.0.s8 %v1111
        %v1113 = vlaneseq
        %v1114 = vshrl.u32 %v1113, 7
        %v1115 = vsub.s32 %v1112, %v1114
        %v1116 = vrot.slane %v520, %v1115
        %v1117 = vcombine.high %v521, %v521
        %v1119 = vunpack.c.l.s4 1983009808
        %v1120 = vunpack.c.0.s8 %v1119
        %v1121 = vlaneseq
        %v1122 = vshrl.u32 %v1121, 7
        %v1123 = vsub.s32 %v1120, %v1122
        %v1124 = vrot.slane %v521, %v1123
        %v1126 = vunpack.c.l.s4 1983009808
        %v1127 = vunpack.c.0.s8 %v1126
        %v1128 = vlaneseq
        %v1129 = vshrl.u32 %v1128, 7
        %v1130 = vsub.s32 %v1127, %v1129
        %v1131 = vrot.slane %v1117, %v1130
        %v1132 = vcombine.high %v1124, %v1124
        %v1133 = vcombine.high %v1131, %v1131
        %v1134 = vcombine.high %v522, %v522
        %v1136 = vunpack.c.l.s4 1983009808
        %v1137 = vunpack.c.0.s8 %v1136
        %v1138 = vlaneseq
        %v1139 = vshrl.u32 %v1138, 7
        %v1140 = vsub.s32 %v1137, %v1139
        %v1141 = vrot.slane %v522, %v1140
        %v1143 = vunpack.c.l.s4 1983009808
        %v1144 = vunpack.c.0.s8 %v1143
        %v1145 = vlaneseq
        %v1146 = vshrl.u32 %v1145, 7
        %v1147 = vsub.s32 %v1144, %v1146
        %v1148 = vrot.slane %v1134, %v1147
        %v1149 = vcombine.high %v1141, %v1141
        %v1150 = vcombine.high %v1148, %v1148
        %v1152 = vunpack.c.l.s4 1983009808
        %v1153 = vunpack.c.0.s8 %v1152
        %v1154 = vlaneseq
        %v1155 = vshrl.u32 %v1154, 7
        %v1156 = vsub.s32 %v1153, %v1155
        %v1157 = vrot.slane %v523, %v1156
        %v1158 = vcombine.high %v524, %v524
        %v1160 = vunpack.c.l.s4 1983009808
        %v1161 = vunpack.c.0.s8 %v1160
        %v1162 = vlaneseq
        %v1163 = vshrl.u32 %v1162, 7
        %v1164 = vsub.s32 %v1161, %v1163
        %v1165 = vrot.slane %v524, %v1164
        %v1167 = vunpack.c.l.s4 1983009808
        %v1168 = vunpack.c.0.s8 %v1167
        %v1169 = vlaneseq
        %v1170 = vshrl.u32 %v1169, 7
        %v1171 = vsub.s32 %v1168, %v1170
        %v1172 = vrot.slane %v1158, %v1171
        %v1173 = vcombine.high %v1165, %v1165
        %v1174 = vcombine.high %v1172, %v1172
        %v1175 = vcombine.high %v525, %v525
        %v1177 = vunpack.c.l.s4 1983009808
        %v1178 = vunpack.c.0.s8 %v1177
        %v1179 = vlaneseq
        %v1180 = vshrl.u32 %v1179, 7
        %v1181 = vsub.s32 %v1178, %v1180
        %v1182 = vrot.slane %v525, %v1181
        %v1184 = vunpack.c.l.s4 1983009808
        %v1185 = vunpack.c.0.s8 %v1184
        %v1186 = vlaneseq
        %v1187 = vshrl.u32 %v1186, 7
        %v1188 = vsub.s32 %v1185, %v1187
        %v1189 = vrot.slane %v1175, %v1188
        %v1190 = vcombine.high %v1182, %v1182
        %v1191 = vcombine.high %v1189, %v1189
        %v1193 = vunpack.c.l.s4 1983009808
        %v1194 = vunpack.c.0.s8 %v1193
        %v1195 = vlaneseq
        %v1196 = vshrl.u32 %v1195, 7
        %v1197 = vsub.s32 %v1194, %v1196
        %v1198 = vrot.slane %v526, %v1197
        %v1199 = vcombine.high %v527, %v527
        %v1201 = vunpack.c.l.s4 1983009808
        %v1202 = vunpack.c.0.s8 %v1201
        %v1203 = vlaneseq
        %v1204 = vshrl.u32 %v1203, 7
        %v1205 = vsub.s32 %v1202, %v1204
        %v1206 = vrot.slane %v527, %v1205
        %v1208 = vunpack.c.l.s4 1983009808
        %v1209 = vunpack.c.0.s8 %v1208
        %v1210 = vlaneseq
        %v1211 = vshrl.u32 %v1210, 7
        %v1212 = vsub.s32 %v1209, %v1211
        %v1213 = vrot.slane %v1199, %v1212
        %v1214 = vcombine.high %v1206, %v1206
        %v1215 = vcombine.high %v1213, %v1213
        %v1216 = vcombine.high %v528, %v528
        %v1218 = vunpack.c.l.s4 1983009808
        %v1219 = vunpack.c.0.s8 %v1218
        %v1220 = vlaneseq
        %v1221 = vshrl.u32 %v1220, 7
        %v1222 = vsub.s32 %v1219, %v1221
        %v1223 = vrot.slane %v528, %v1222
        %v1225 = vunpack.c.l.s4 1983009808
        %v1226 = vunpack.c.0.s8 %v1225
        %v1227 = vlaneseq
        %v1228 = vshrl.u32 %v1227, 7
        %v1229 = vsub.s32 %v1226, %v1228
        %v1230 = vrot.slane %v1216, %v1229
        %v1231 = vcombine.high %v1223, %v1223
        %v1232 = vcombine.high %v1230, %v1230
        %v1234 = vunpack.c.l.s4 1983009808
        %v1235 = vunpack.c.0.s8 %v1234
        %v1236 = vlaneseq
        %v1237 = vshrl.u32 %v1236, 7
        %v1238 = vsub.s32 %v1235, %v1237
        %v1239 = vrot.slane %v529, %v1238
        %v1240 = vcombine.high %v530, %v530
        %v1242 = vunpack.c.l.s4 1983009808
        %v1243 = vunpack.c.0.s8 %v1242
        %v1244 = vlaneseq
        %v1245 = vshrl.u32 %v1244, 7
        %v1246 = vsub.s32 %v1243, %v1245
        %v1247 = vrot.slane %v530, %v1246
        %v1249 = vunpack.c.l.s4 1983009808
        %v1250 = vunpack.c.0.s8 %v1249
        %v1251 = vlaneseq
        %v1252 = vshrl.u32 %v1251, 7
        %v1253 = vsub.s32 %v1250, %v1252
        %v1254 = vrot.slane %v1240, %v1253
        %v1255 = vcombine.high %v1247, %v1247
        %v1256 = vcombine.high %v1254, %v1254
        %v1257 = vcombine.high %v531, %v531
        %v1259 = vunpack.c.l.s4 1983009808
        %v1260 = vunpack.c.0.s8 %v1259
        %v1261 = vlaneseq
        %v1262 = vshrl.u32 %v1261, 7
        %v1263 = vsub.s32 %v1260, %v1262
        %v1264 = vrot.slane %v531, %v1263
        %v1266 = vunpack.c.l.s4 1983009808
        %v1267 = vunpack.c.0.s8 %v1266
        %v1268 = vlaneseq
        %v1269 = vshrl.u32 %v1268, 7
        %v1270 = vsub.s32 %v1267, %v1269
        %v1271 = vrot.slane %v1257, %v1270
        %v1272 = vcombine.high %v1264, %v1264
        %v1273 = vcombine.high %v1271, %v1271
        %v1275 = vunpack.c.l.s4 1983009808
        %v1276 = vunpack.c.0.s8 %v1275
        %v1277 = vlaneseq
        %v1278 = vshrl.u32 %v1277, 7
        %v1279 = vsub.s32 %v1276, %v1278
        %v1280 = vrot.slane %v532, %v1279
        %v1281 = vlaneseq
        %v1282 = vshrl.u32 %v1281, 7
        %v1283 = vsub.s32 0, %v1282
        %v1284 = vrot.slane %v591, %v1283
        %v1285 = vlaneseq
        %v1286 = vshrl.u32 %v1285, 7
        %v1287 = vsub.s32 0, %v1286
        %v1288 = vrot.slane %v599, %v1287
        %v1289 = vlaneseq
        %v1290 = vshrl.u32 %v1289, 7
        %v1291 = vsub.s32 0, %v1290
        %v1292 = vrot.slane %v598, %v1291
        %v1293 = vlaneseq
        %v1294 = vshrl.u32 %v1293, 7
        %v1295 = vsub.s32 0, %v1294
        %v1296 = vrot.slane %v600, %v1295
        %v1297 = vlaneseq
        %v1298 = vshrl.u32 %v1297, 7
        %v1299 = vsub.s32 0, %v1298
        %v1300 = vrot.slane %v608, %v1299
        %v1301 = vlaneseq
        %v1302 = vshrl.u32 %v1301, 7
        %v1303 = vsub.s32 0, %v1302
        %v1304 = vrot.slane %v616, %v1303
        %v1305 = vlaneseq
        %v1306 = vshrl.u32 %v1305, 7
        %v1307 = vsub.s32 0, %v1306
        %v1308 = vrot.slane %v615, %v1307
        %v1309 = vlaneseq
        %v1310 = vshrl.u32 %v1309, 7
        %v1311 = vsub.s32 0, %v1310
        %v1312 = vrot.slane %v617, %v1311
        %v1313 = vlaneseq
        %v1314 = vshrl.u32 %v1313, 7
        %v1315 = vsub.s32 0, %v1314
        %v1316 = vrot.slane %v673, %v1315
        %v1317 = vlaneseq
        %v1318 = vshrl.u32 %v1317, 7
        %v1319 = vsub.s32 0, %v1318
        %v1320 = vrot.slane %v681, %v1319
        %v1321 = vlaneseq
        %v1322 = vshrl.u32 %v1321, 7
        %v1323 = vsub.s32 0, %v1322
        %v1324 = vrot.slane %v680, %v1323
        %v1325 = vlaneseq
        %v1326 = vshrl.u32 %v1325, 7
        %v1327 = vsub.s32 0, %v1326
        %v1328 = vrot.slane %v682, %v1327
        %v1329 = vlaneseq
        %v1330 = vshrl.u32 %v1329, 7
        %v1331 = vsub.s32 0, %v1330
        %v1332 = vrot.slane %v690, %v1331
        %v1333 = vlaneseq
        %v1334 = vshrl.u32 %v1333, 7
        %v1335 = vsub.s32 0, %v1334
        %v1336 = vrot.slane %v698, %v1335
        %v1337 = vlaneseq
        %v1338 = vshrl.u32 %v1337, 7
        %v1339 = vsub.s32 0, %v1338
        %v1340 = vrot.slane %v697, %v1339
        %v1341 = vlaneseq
        %v1342 = vshrl.u32 %v1341, 7
        %v1343 = vsub.s32 0, %v1342
        %v1344 = vrot.slane %v699, %v1343
        %v1345 = vlaneseq
        %v1346 = vshrl.u32 %v1345, 7
        %v1347 = vsub.s32 0, %v1346
        %v1348 = vrot.slane %v755, %v1347
        %v1349 = vlaneseq
        %v1350 = vshrl.u32 %v1349, 7
        %v1351 = vsub.s32 0, %v1350
        %v1352 = vrot.slane %v763, %v1351
        %v1353 = vlaneseq
        %v1354 = vshrl.u32 %v1353, 7
        %v1355 = vsub.s32 0, %v1354
        %v1356 = vrot.slane %v762, %v1355
        %v1357 = vlaneseq
        %v1358 = vshrl.u32 %v1357, 7
        %v1359 = vsub.s32 0, %v1358
        %v1360 = vrot.slane %v764, %v1359
        %v1361 = vlaneseq
        %v1362 = vshrl.u32 %v1361, 7
        %v1363 = vsub.s32 0, %v1362
        %v1364 = vrot.slane %v772, %v1363
        %v1365 = vlaneseq
        %v1366 = vshrl.u32 %v1365, 7
        %v1367 = vsub.s32 0, %v1366
        %v1368 = vrot.slane %v780, %v1367
        %v1369 = vlaneseq
        %v1370 = vshrl.u32 %v1369, 7
        %v1371 = vsub.s32 0, %v1370
        %v1372 = vrot.slane %v779, %v1371
        %v1373 = vlaneseq
        %v1374 = vshrl.u32 %v1373, 7
        %v1375 = vsub.s32 0, %v1374
        %v1376 = vrot.slane %v781, %v1375
        %v1377 = vlaneseq
        %v1378 = vshrl.u32 %v1377, 7
        %v1379 = vsub.s32 0, %v1378
        %v1380 = vrot.slane %v837, %v1379
        %v1381 = vlaneseq
        %v1382 = vshrl.u32 %v1381, 7
        %v1383 = vsub.s32 0, %v1382
        %v1384 = vrot.slane %v845, %v1383
        %v1385 = vlaneseq
        %v1386 = vshrl.u32 %v1385, 7
        %v1387 = vsub.s32 0, %v1386
        %v1388 = vrot.slane %v844, %v1387
        %v1389 = vlaneseq
        %v1390 = vshrl.u32 %v1389, 7
        %v1391 = vsub.s32 0, %v1390
        %v1392 = vrot.slane %v846, %v1391
        %v1393 = vlaneseq
        %v1394 = vshrl.u32 %v1393, 7
        %v1395 = vsub.s32 0, %v1394
        %v1396 = vrot.slane %v854, %v1395
        %v1397 = vlaneseq
        %v1398 = vshrl.u32 %v1397, 7
        %v1399 = vsub.s32 0, %v1398
        %v1400 = vrot.slane %v862, %v1399
        %v1401 = vlaneseq
        %v1402 = vshrl.u32 %v1401, 7
        %v1403 = vsub.s32 0, %v1402
        %v1404 = vrot.slane %v861, %v1403
        %v1405 = vlaneseq
        %v1406 = vshrl.u32 %v1405, 7
        %v1407 = vsub.s32 0, %v1406
        %v1408 = vrot.slane %v863, %v1407
        %v1409 = vlaneseq
        %v1410 = vshrl.u32 %v1409, 7
        %v1411 = vsub.s32 0, %v1410
        %v1412 = vrot.slane %v919, %v1411
        %v1413 = vlaneseq
        %v1414 = vshrl.u32 %v1413, 7
        %v1415 = vsub.s32 0, %v1414
        %v1416 = vrot.slane %v927, %v1415
        %v1417 = vlaneseq
        %v1418 = vshrl.u32 %v1417, 7
        %v1419 = vsub.s32 0, %v1418
        %v1420 = vrot.slane %v926, %v1419
        %v1421 = vlaneseq
        %v1422 = vshrl.u32 %v1421, 7
        %v1423 = vsub.s32 0, %v1422
        %v1424 = vrot.slane %v928, %v1423
        %v1425 = vlaneseq
        %v1426 = vshrl.u32 %v1425, 7
        %v1427 = vsub.s32 0, %v1426
        %v1428 = vrot.slane %v936, %v1427
        %v1429 = vlaneseq
        %v1430 = vshrl.u32 %v1429, 7
        %v1431 = vsub.s32 0, %v1430
        %v1432 = vrot.slane %v944, %v1431
        %v1433 = vlaneseq
        %v1434 = vshrl.u32 %v1433, 7
        %v1435 = vsub.s32 0, %v1434
        %v1436 = vrot.slane %v943, %v1435
        %v1437 = vlaneseq
        %v1438 = vshrl.u32 %v1437, 7
        %v1439 = vsub.s32 0, %v1438
        %v1440 = vrot.slane %v945, %v1439
        %v1441 = vlaneseq
        %v1442 = vshrl.u32 %v1441, 7
        %v1443 = vsub.s32 0, %v1442
        %v1444 = vrot.slane %v1001, %v1443
        %v1445 = vlaneseq
        %v1446 = vshrl.u32 %v1445, 7
        %v1447 = vsub.s32 0, %v1446
        %v1448 = vrot.slane %v1009, %v1447
        %v1449 = vlaneseq
        %v1450 = vshrl.u32 %v1449, 7
        %v1451 = vsub.s32 0, %v1450
        %v1452 = vrot.slane %v1008, %v1451
        %v1453 = vlaneseq
        %v1454 = vshrl.u32 %v1453, 7
        %v1455 = vsub.s32 0, %v1454
        %v1456 = vrot.slane %v1010, %v1455
        %v1457 = vlaneseq
        %v1458 = vshrl.u32 %v1457, 7
        %v1459 = vsub.s32 0, %v1458
        %v1460 = vrot.slane %v1018, %v1459
        %v1461 = vlaneseq
        %v1462 = vshrl.u32 %v1461, 7
        %v1463 = vsub.s32 0, %v1462
        %v1464 = vrot.slane %v1026, %v1463
        %v1465 = vlaneseq
        %v1466 = vshrl.u32 %v1465, 7
        %v1467 = vsub.s32 0, %v1466
        %v1468 = vrot.slane %v1025, %v1467
        %v1469 = vlaneseq
        %v1470 = vshrl.u32 %v1469, 7
        %v1471 = vsub.s32 0, %v1470
        %v1472 = vrot.slane %v1027, %v1471
        %v1473 = vlaneseq
        %v1474 = vshrl.u32 %v1473, 7
        %v1475 = vsub.s32 0, %v1474
        %v1476 = vrot.slane %v1083, %v1475
        %v1477 = vlaneseq
        %v1478 = vshrl.u32 %v1477, 7
        %v1479 = vsub.s32 0, %v1478
        %v1480 = vrot.slane %v1091, %v1479
        %v1481 = vlaneseq
        %v1482 = vshrl.u32 %v1481, 7
        %v1483 = vsub.s32 0, %v1482
        %v1484 = vrot.slane %v1090, %v1483
        %v1485 = vlaneseq
        %v1486 = vshrl.u32 %v1485, 7
        %v1487 = vsub.s32 0, %v1486
        %v1488 = vrot.slane %v1092, %v1487
        %v1489 = vlaneseq
        %v1490 = vshrl.u32 %v1489, 7
        %v1491 = vsub.s32 0, %v1490
        %v1492 = vrot.slane %v1100, %v1491
        %v1493 = vlaneseq
        %v1494 = vshrl.u32 %v1493, 7
        %v1495 = vsub.s32 0, %v1494
        %v1496 = vrot.slane %v1108, %v1495
        %v1497 = vlaneseq
        %v1498 = vshrl.u32 %v1497, 7
        %v1499 = vsub.s32 0, %v1498
        %v1500 = vrot.slane %v1107, %v1499
        %v1501 = vlaneseq
        %v1502 = vshrl.u32 %v1501, 7
        %v1503 = vsub.s32 0, %v1502
        %v1504 = vrot.slane %v1109, %v1503
        %v1505 = vlaneseq
        %v1506 = vshrl.u32 %v1505, 7
        %v1507 = vsub.s32 0, %v1506
        %v1508 = vrot.slane %v1165, %v1507
        %v1509 = vlaneseq
        %v1510 = vshrl.u32 %v1509, 7
        %v1511 = vsub.s32 0, %v1510
        %v1512 = vrot.slane %v1173, %v1511
        %v1513 = vlaneseq
        %v1514 = vshrl.u32 %v1513, 7
        %v1515 = vsub.s32 0, %v1514
        %v1516 = vrot.slane %v1172, %v1515
        %v1517 = vlaneseq
        %v1518 = vshrl.u32 %v1517, 7
        %v1519 = vsub.s32 0, %v1518
        %v1520 = vrot.slane %v1174, %v1519
        %v1521 = vlaneseq
        %v1522 = vshrl.u32 %v1521, 7
        %v1523 = vsub.s32 0, %v1522
        %v1524 = vrot.slane %v1182, %v1523
        %v1525 = vlaneseq
        %v1526 = vshrl.u32 %v1525, 7
        %v1527 = vsub.s32 0, %v1526
        %v1528 = vrot.slane %v1190, %v1527
        %v1529 = vlaneseq
        %v1530 = vshrl.u32 %v1529, 7
        %v1531 = vsub.s32 0, %v1530
        %v1532 = vrot.slane %v1189, %v1531
        %v1533 = vlaneseq
        %v1534 = vshrl.u32 %v1533, 7
        %v1535 = vsub.s32 0, %v1534
        %v1536 = vrot.slane %v1191, %v1535
        %vm1537 = vcmask 1041409
        %v1538 = vsel %vm1537, %v1288, %v1284
        %vm1539 = vcmask 1042434
        %v1540 = vsel %vm1539, %v1292, %v1538
        %vm1541 = vcmask 1043459
        %v1542 = vsel %vm1541, %v1296, %v1540
        %vm1543 = vcmask 1044484
        %v1544 = vsel %vm1543, %v1300, %v1542
        %vm1545 = vcmask 1045509
        %v1546 = vsel %vm1545, %v1304, %v1544
        %vm1547 = vcmask 1046534
        %v1548 = vsel %vm1547, %v1308, %v1546
        %vm1549 = vcmask 1047559
        %v1550 = vsel %vm1549, %v1312, %v1548
        %v1551 = vsel %vm1537, %v1320, %v1316
        %v1552 = vsel %vm1539, %v1324, %v1551
        %v1553 = vsel %vm1541, %v1328, %v1552
        %v1554 = vsel %vm1543, %v1332, %v1553
        %v1555 = vsel %vm1545, %v1336, %v1554
        %v1556 = vsel %vm1547, %v1340, %v1555
        %v1557 = vsel %vm1549, %v1344, %v1556
        %v1558 = vsel %vm1537, %v1352, %v1348
        %v1559 = vsel %vm1539, %v1356, %v1558
        %v1560 = vsel %vm1541, %v1360, %v1559
        %v1561 = vsel %vm1543, %v1364, %v1560
        %v1562 = vsel %vm1545, %v1368, %v1561
        %v1563 = vsel %vm1547, %v1372, %v1562
        %v1564 = vsel %vm1549, %v1376, %v1563
        %v1565 = vsel %vm1537, %v1384, %v1380
        %v1566 = vsel %vm1539, %v1388, %v1565
        %v1567 = vsel %vm1541, %v1392, %v1566
        %v1568 = vsel %vm1543, %v1396, %v1567
        %v1569 = vsel %vm1545, %v1400, %v1568
        %v1570 = vsel %vm1547, %v1404, %v1569
        %v1571 = vsel %vm1549, %v1408, %v1570
        %v1572 = vsel %vm1537, %v1416, %v1412
        %v1573 = vsel %vm1539, %v1420, %v1572
        %v1574 = vsel %vm1541, %v1424, %v1573
        %v1575 = vsel %vm1543, %v1428, %v1574
        %v1576 = vsel %vm1545, %v1432, %v1575
        %v1577 = vsel %vm1547, %v1436, %v1576
        %v1578 = vsel %vm1549, %v1440, %v1577
        %v1579 = vsel %vm1537, %v1448, %v1444
        %v1580 = vsel %vm1539, %v1452, %v1579
        %v1581 = vsel %vm1541, %v1456, %v1580
        %v1582 = vsel %vm1543, %v1460, %v1581
        %v1583 = vsel %vm1545, %v1464, %v1582
        %v1584 = vsel %vm1547, %v1468, %v1583
        %v1585 = vsel %vm1549, %v1472, %v1584
        %v1586 = vsel %vm1537, %v1480, %v1476
        %v1587 = vsel %vm1539, %v1484, %v1586
        %v1588 = vsel %vm1541, %v1488, %v1587
        %v1589 = vsel %vm1543, %v1492, %v1588
        %v1590 = vsel %vm1545, %v1496, %v1589
        %v1591 = vsel %vm1547, %v1500, %v1590
        %v1592 = vsel %vm1549, %v1504, %v1591
        %v1593 = vsel %vm1537, %v1512, %v1508
        %v1594 = vsel %vm1539, %v1516, %v1593
        %v1595 = vsel %vm1541, %v1520, %v1594
        %v1596 = vsel %vm1543, %v1524, %v1595
        %v1597 = vsel %vm1545, %v1528, %v1596
        %v1598 = vsel %vm1547, %v1532, %v1597
        %v1599 = vsel %vm1549, %v1536, %v1598
        %v1608 = vlaneseq
        %v1609 = vshrl.u32 %v1608, 7
        %v1610 = vsub.s32 1, %v1609
        %v1611 = vrot.slane %v591, %v1610
        %v1612 = vlaneseq
        %v1613 = vshrl.u32 %v1612, 7
        %v1614 = vsub.s32 1, %v1613
        %v1615 = vrot.slane %v599, %v1614
        %v1616 = vlaneseq
        %v1617 = vshrl.u32 %v1616, 7
        %v1618 = vsub.s32 1, %v1617
        %v1619 = vrot.slane %v598, %v1618
        %v1620 = vlaneseq
        %v1621 = vshrl.u32 %v1620, 7
        %v1622 = vsub.s32 1, %v1621
        %v1623 = vrot.slane %v600, %v1622
        %v1624 = vlaneseq
        %v1625 = vshrl.u32 %v1624, 7
        %v1626 = vsub.s32 1, %v1625
        %v1627 = vrot.slane %v608, %v1626
        %v1628 = vlaneseq
        %v1629 = vshrl.u32 %v1628, 7
        %v1630 = vsub.s32 1, %v1629
        %v1631 = vrot.slane %v616, %v1630
        %v1632 = vlaneseq
        %v1633 = vshrl.u32 %v1632, 7
        %v1634 = vsub.s32 1, %v1633
        %v1635 = vrot.slane %v615, %v1634
        %v1636 = vlaneseq
        %v1637 = vshrl.u32 %v1636, 7
        %v1638 = vsub.s32 1, %v1637
        %v1639 = vrot.slane %v617, %v1638
        %v1640 = vlaneseq
        %v1641 = vshrl.u32 %v1640, 7
        %v1642 = vsub.s32 1, %v1641
        %v1643 = vrot.slane %v673, %v1642
        %v1644 = vlaneseq
        %v1645 = vshrl.u32 %v1644, 7
        %v1646 = vsub.s32 1, %v1645
        %v1647 = vrot.slane %v681, %v1646
        %v1648 = vlaneseq
        %v1649 = vshrl.u32 %v1648, 7
        %v1650 = vsub.s32 1, %v1649
        %v1651 = vrot.slane %v680, %v1650
        %v1652 = vlaneseq
        %v1653 = vshrl.u32 %v1652, 7
        %v1654 = vsub.s32 1, %v1653
        %v1655 = vrot.slane %v682, %v1654
        %v1656 = vlaneseq
        %v1657 = vshrl.u32 %v1656, 7
        %v1658 = vsub.s32 1, %v1657
        %v1659 = vrot.slane %v690, %v1658
        %v1660 = vlaneseq
        %v1661 = vshrl.u32 %v1660, 7
        %v1662 = vsub.s32 1, %v1661
        %v1663 = vrot.slane %v698, %v1662
        %v1664 = vlaneseq
        %v1665 = vshrl.u32 %v1664, 7
        %v1666 = vsub.s32 1, %v1665
        %v1667 = vrot.slane %v697, %v1666
        %v1668 = vlaneseq
        %v1669 = vshrl.u32 %v1668, 7
        %v1670 = vsub.s32 1, %v1669
        %v1671 = vrot.slane %v699, %v1670
        %v1672 = vlaneseq
        %v1673 = vshrl.u32 %v1672, 7
        %v1674 = vsub.s32 1, %v1673
        %v1675 = vrot.slane %v755, %v1674
        %v1676 = vlaneseq
        %v1677 = vshrl.u32 %v1676, 7
        %v1678 = vsub.s32 1, %v1677
        %v1679 = vrot.slane %v763, %v1678
        %v1680 = vlaneseq
        %v1681 = vshrl.u32 %v1680, 7
        %v1682 = vsub.s32 1, %v1681
        %v1683 = vrot.slane %v762, %v1682
        %v1684 = vlaneseq
        %v1685 = vshrl.u32 %v1684, 7
        %v1686 = vsub.s32 1, %v1685
        %v1687 = vrot.slane %v764, %v1686
        %v1688 = vlaneseq
        %v1689 = vshrl.u32 %v1688, 7
        %v1690 = vsub.s32 1, %v1689
        %v1691 = vrot.slane %v772, %v1690
        %v1692 = vlaneseq
        %v1693 = vshrl.u32 %v1692, 7
        %v1694 = vsub.s32 1, %v1693
        %v1695 = vrot.slane %v780, %v1694
        %v1696 = vlaneseq
        %v1697 = vshrl.u32 %v1696, 7
        %v1698 = vsub.s32 1, %v1697
        %v1699 = vrot.slane %v779, %v1698
        %v1700 = vlaneseq
        %v1701 = vshrl.u32 %v1700, 7
        %v1702 = vsub.s32 1, %v1701
        %v1703 = vrot.slane %v781, %v1702
        %v1704 = vlaneseq
        %v1705 = vshrl.u32 %v1704, 7
        %v1706 = vsub.s32 1, %v1705
        %v1707 = vrot.slane %v837, %v1706
        %v1708 = vlaneseq
        %v1709 = vshrl.u32 %v1708, 7
        %v1710 = vsub.s32 1, %v1709
        %v1711 = vrot.slane %v845, %v1710
        %v1712 = vlaneseq
        %v1713 = vshrl.u32 %v1712, 7
        %v1714 = vsub.s32 1, %v1713
        %v1715 = vrot.slane %v844, %v1714
        %v1716 = vlaneseq
        %v1717 = vshrl.u32 %v1716, 7
        %v1718 = vsub.s32 1, %v1717
        %v1719 = vrot.slane %v846, %v1718
        %v1720 = vlaneseq
        %v1721 = vshrl.u32 %v1720, 7
        %v1722 = vsub.s32 1, %v1721
        %v1723 = vrot.slane %v854, %v1722
        %v1724 = vlaneseq
        %v1725 = vshrl.u32 %v1724, 7
        %v1726 = vsub.s32 1, %v1725
        %v1727 = vrot.slane %v862, %v1726
        %v1728 = vlaneseq
        %v1729 = vshrl.u32 %v1728, 7
        %v1730 = vsub.s32 1, %v1729
        %v1731 = vrot.slane %v861, %v1730
        %v1732 = vlaneseq
        %v1733 = vshrl.u32 %v1732, 7
        %v1734 = vsub.s32 1, %v1733
        %v1735 = vrot.slane %v863, %v1734
        %v1736 = vlaneseq
        %v1737 = vshrl.u32 %v1736, 7
        %v1738 = vsub.s32 1, %v1737
        %v1739 = vrot.slane %v919, %v1738
        %v1740 = vlaneseq
        %v1741 = vshrl.u32 %v1740, 7
        %v1742 = vsub.s32 1, %v1741
        %v1743 = vrot.slane %v927, %v1742
        %v1744 = vlaneseq
        %v1745 = vshrl.u32 %v1744, 7
        %v1746 = vsub.s32 1, %v1745
        %v1747 = vrot.slane %v926, %v1746
        %v1748 = vlaneseq
        %v1749 = vshrl.u32 %v1748, 7
        %v1750 = vsub.s32 1, %v1749
        %v1751 = vrot.slane %v928, %v1750
        %v1752 = vlaneseq
        %v1753 = vshrl.u32 %v1752, 7
        %v1754 = vsub.s32 1, %v1753
        %v1755 = vrot.slane %v936, %v1754
        %v1756 = vlaneseq
        %v1757 = vshrl.u32 %v1756, 7
        %v1758 = vsub.s32 1, %v1757
        %v1759 = vrot.slane %v944, %v1758
        %v1760 = vlaneseq
        %v1761 = vshrl.u32 %v1760, 7
        %v1762 = vsub.s32 1, %v1761
        %v1763 = vrot.slane %v943, %v1762
        %v1764 = vlaneseq
        %v1765 = vshrl.u32 %v1764, 7
        %v1766 = vsub.s32 1, %v1765
        %v1767 = vrot.slane %v945, %v1766
        %v1768 = vlaneseq
        %v1769 = vshrl.u32 %v1768, 7
        %v1770 = vsub.s32 1, %v1769
        %v1771 = vrot.slane %v1001, %v1770
        %v1772 = vlaneseq
        %v1773 = vshrl.u32 %v1772, 7
        %v1774 = vsub.s32 1, %v1773
        %v1775 = vrot.slane %v1009, %v1774
        %v1776 = vlaneseq
        %v1777 = vshrl.u32 %v1776, 7
        %v1778 = vsub.s32 1, %v1777
        %v1779 = vrot.slane %v1008, %v1778
        %v1780 = vlaneseq
        %v1781 = vshrl.u32 %v1780, 7
        %v1782 = vsub.s32 1, %v1781
        %v1783 = vrot.slane %v1010, %v1782
        %v1784 = vlaneseq
        %v1785 = vshrl.u32 %v1784, 7
        %v1786 = vsub.s32 1, %v1785
        %v1787 = vrot.slane %v1018, %v1786
        %v1788 = vlaneseq
        %v1789 = vshrl.u32 %v1788, 7
        %v1790 = vsub.s32 1, %v1789
        %v1791 = vrot.slane %v1026, %v1790
        %v1792 = vlaneseq
        %v1793 = vshrl.u32 %v1792, 7
        %v1794 = vsub.s32 1, %v1793
        %v1795 = vrot.slane %v1025, %v1794
        %v1796 = vlaneseq
        %v1797 = vshrl.u32 %v1796, 7
        %v1798 = vsub.s32 1, %v1797
        %v1799 = vrot.slane %v1027, %v1798
        %v1800 = vlaneseq
        %v1801 = vshrl.u32 %v1800, 7
        %v1802 = vsub.s32 1, %v1801
        %v1803 = vrot.slane %v1083, %v1802
        %v1804 = vlaneseq
        %v1805 = vshrl.u32 %v1804, 7
        %v1806 = vsub.s32 1, %v1805
        %v1807 = vrot.slane %v1091, %v1806
        %v1808 = vlaneseq
        %v1809 = vshrl.u32 %v1808, 7
        %v1810 = vsub.s32 1, %v1809
        %v1811 = vrot.slane %v1090, %v1810
        %v1812 = vlaneseq
        %v1813 = vshrl.u32 %v1812, 7
        %v1814 = vsub.s32 1, %v1813
        %v1815 = vrot.slane %v1092, %v1814
        %v1816 = vlaneseq
        %v1817 = vshrl.u32 %v1816, 7
        %v1818 = vsub.s32 1, %v1817
        %v1819 = vrot.slane %v1100, %v1818
        %v1820 = vlaneseq
        %v1821 = vshrl.u32 %v1820, 7
        %v1822 = vsub.s32 1, %v1821
        %v1823 = vrot.slane %v1108, %v1822
        %v1824 = vlaneseq
        %v1825 = vshrl.u32 %v1824, 7
        %v1826 = vsub.s32 1, %v1825
        %v1827 = vrot.slane %v1107, %v1826
        %v1828 = vlaneseq
        %v1829 = vshrl.u32 %v1828, 7
        %v1830 = vsub.s32 1, %v1829
        %v1831 = vrot.slane %v1109, %v1830
        %v1832 = vlaneseq
        %v1833 = vshrl.u32 %v1832, 7
        %v1834 = vsub.s32 1, %v1833
        %v1835 = vrot.slane %v1165, %v1834
        %v1836 = vlaneseq
        %v1837 = vshrl.u32 %v1836, 7
        %v1838 = vsub.s32 1, %v1837
        %v1839 = vrot.slane %v1173, %v1838
        %v1840 = vlaneseq
        %v1841 = vshrl.u32 %v1840, 7
        %v1842 = vsub.s32 1, %v1841
        %v1843 = vrot.slane %v1172, %v1842
        %v1844 = vlaneseq
        %v1845 = vshrl.u32 %v1844, 7
        %v1846 = vsub.s32 1, %v1845
        %v1847 = vrot.slane %v1174, %v1846
        %v1848 = vlaneseq
        %v1849 = vshrl.u32 %v1848, 7
        %v1850 = vsub.s32 1, %v1849
        %v1851 = vrot.slane %v1182, %v1850
        %v1852 = vlaneseq
        %v1853 = vshrl.u32 %v1852, 7
        %v1854 = vsub.s32 1, %v1853
        %v1855 = vrot.slane %v1190, %v1854
        %v1856 = vlaneseq
        %v1857 = vshrl.u32 %v1856, 7
        %v1858 = vsub.s32 1, %v1857
        %v1859 = vrot.slane %v1189, %v1858
        %v1860 = vlaneseq
        %v1861 = vshrl.u32 %v1860, 7
        %v1862 = vsub.s32 1, %v1861
        %v1863 = vrot.slane %v1191, %v1862
        %v1864 = vsel %vm1537, %v1615, %v1611
        %v1865 = vsel %vm1539, %v1619, %v1864
        %v1866 = vsel %vm1541, %v1623, %v1865
        %v1867 = vsel %vm1543, %v1627, %v1866
        %v1868 = vsel %vm1545, %v1631, %v1867
        %v1869 = vsel %vm1547, %v1635, %v1868
        %v1870 = vsel %vm1549, %v1639, %v1869
        %v1871 = vsel %vm1537, %v1647, %v1643
        %v1872 = vsel %vm1539, %v1651, %v1871
        %v1873 = vsel %vm1541, %v1655, %v1872
        %v1874 = vsel %vm1543, %v1659, %v1873
        %v1875 = vsel %vm1545, %v1663, %v1874
        %v1876 = vsel %vm1547, %v1667, %v1875
        %v1877 = vsel %vm1549, %v1671, %v1876
        %v1878 = vsel %vm1537, %v1679, %v1675
        %v1879 = vsel %vm1539, %v1683, %v1878
        %v1880 = vsel %vm1541, %v1687, %v1879
        %v1881 = vsel %vm1543, %v1691, %v1880
        %v1882 = vsel %vm1545, %v1695, %v1881
        %v1883 = vsel %vm1547, %v1699, %v1882
        %v1884 = vsel %vm1549, %v1703, %v1883
        %v1885 = vsel %vm1537, %v1711, %v1707
        %v1886 = vsel %vm1539, %v1715, %v1885
        %v1887 = vsel %vm1541, %v1719, %v1886
        %v1888 = vsel %vm1543, %v1723, %v1887
        %v1889 = vsel %vm1545, %v1727, %v1888
        %v1890 = vsel %vm1547, %v1731, %v1889
        %v1891 = vsel %vm1549, %v1735, %v1890
        %v1892 = vsel %vm1537, %v1743, %v1739
        %v1893 = vsel %vm1539, %v1747, %v1892
        %v1894 = vsel %vm1541, %v1751, %v1893
        %v1895 = vsel %vm1543, %v1755, %v1894
        %v1896 = vsel %vm1545, %v1759, %v1895
        %v1897 = vsel %vm1547, %v1763, %v1896
        %v1898 = vsel %vm1549, %v1767, %v1897
        %v1899 = vsel %vm1537, %v1775, %v1771
        %v1900 = vsel %vm1539, %v1779, %v1899
        %v1901 = vsel %vm1541, %v1783, %v1900
        %v1902 = vsel %vm1543, %v1787, %v1901
        %v1903 = vsel %vm1545, %v1791, %v1902
        %v1904 = vsel %vm1547, %v1795, %v1903
        %v1905 = vsel %vm1549, %v1799, %v1904
        %v1906 = vsel %vm1537, %v1807, %v1803
        %v1907 = vsel %vm1539, %v1811, %v1906
        %v1908 = vsel %vm1541, %v1815, %v1907
        %v1909 = vsel %vm1543, %v1819, %v1908
        %v1910 = vsel %vm1545, %v1823, %v1909
        %v1911 = vsel %vm1547, %v1827, %v1910
        %v1912 = vsel %vm1549, %v1831, %v1911
        %v1913 = vsel %vm1537, %v1839, %v1835
        %v1914 = vsel %vm1539, %v1843, %v1913
        %v1915 = vsel %vm1541, %v1847, %v1914
        %v1916 = vsel %vm1543, %v1851, %v1915
        %v1917 = vsel %vm1545, %v1855, %v1916
        %v1918 = vsel %vm1547, %v1859, %v1917
        %v1919 = vsel %vm1549, %v1863, %v1918
        %1920 = vrot.lane.b32.xlu0 %v1870, 4
        %v1921 = vpop.permute.xlu0 %1920
        %1922 = vrot.lane.b32.xlu0 %v1877, 4
        %v1923 = vpop.permute.xlu0 %1922
        %1924 = vrot.lane.b32.xlu0 %v1884, 4
        %v1925 = vpop.permute.xlu0 %1924
        %1926 = vrot.lane.b32.xlu0 %v1891, 4
        %v1927 = vpop.permute.xlu0 %1926
        %1928 = vrot.lane.b32.xlu0 %v1898, 4
        %v1929 = vpop.permute.xlu0 %1928
        %1930 = vrot.lane.b32.xlu0 %v1905, 4
        %v1931 = vpop.permute.xlu0 %1930
        %1932 = vrot.lane.b32.xlu0 %v1912, 4
        %v1933 = vpop.permute.xlu0 %1932
        %1934 = vrot.lane.b32.xlu0 %v1919, 4
        %v1935 = vpop.permute.xlu0 %1934
        %v1944 = vlaneseq
        %v1945 = vshrl.u32 %v1944, 7
        %v1946 = vsub.s32 0, %v1945
        %v1947 = vrot.slane %v624, %v1946
        %v1948 = vlaneseq
        %v1949 = vshrl.u32 %v1948, 7
        %v1950 = vsub.s32 0, %v1949
        %v1951 = vrot.slane %v706, %v1950
        %v1952 = vlaneseq
        %v1953 = vshrl.u32 %v1952, 7
        %v1954 = vsub.s32 0, %v1953
        %v1955 = vrot.slane %v788, %v1954
        %v1956 = vlaneseq
        %v1957 = vshrl.u32 %v1956, 7
        %v1958 = vsub.s32 0, %v1957
        %v1959 = vrot.slane %v870, %v1958
        %v1960 = vlaneseq
        %v1961 = vshrl.u32 %v1960, 7
        %v1962 = vsub.s32 0, %v1961
        %v1963 = vrot.slane %v952, %v1962
        %v1964 = vlaneseq
        %v1965 = vshrl.u32 %v1964, 7
        %v1966 = vsub.s32 0, %v1965
        %v1967 = vrot.slane %v1034, %v1966
        %v1968 = vlaneseq
        %v1969 = vshrl.u32 %v1968, 7
        %v1970 = vsub.s32 0, %v1969
        %v1971 = vrot.slane %v1116, %v1970
        %v1972 = vlaneseq
        %v1973 = vshrl.u32 %v1972, 7
        %v1974 = vsub.s32 0, %v1973
        %v1975 = vrot.slane %v1198, %v1974
        %v1976 = vsel %vm1537, %v1292, %v1288
        %v1977 = vsel %vm1539, %v1296, %v1976
        %v1978 = vsel %vm1541, %v1300, %v1977
        %v1979 = vsel %vm1543, %v1304, %v1978
        %v1980 = vsel %vm1545, %v1308, %v1979
        %v1981 = vsel %vm1547, %v1312, %v1980
        %v1982 = vsel %vm1549, %v1947, %v1981
        %v1983 = vsel %vm1537, %v1324, %v1320
        %v1984 = vsel %vm1539, %v1328, %v1983
        %v1985 = vsel %vm1541, %v1332, %v1984
        %v1986 = vsel %vm1543, %v1336, %v1985
        %v1987 = vsel %vm1545, %v1340, %v1986
        %v1988 = vsel %vm1547, %v1344, %v1987
        %v1989 = vsel %vm1549, %v1951, %v1988
        %v1990 = vsel %vm1537, %v1356, %v1352
        %v1991 = vsel %vm1539, %v1360, %v1990
        %v1992 = vsel %vm1541, %v1364, %v1991
        %v1993 = vsel %vm1543, %v1368, %v1992
        %v1994 = vsel %vm1545, %v1372, %v1993
        %v1995 = vsel %vm1547, %v1376, %v1994
        %v1996 = vsel %vm1549, %v1955, %v1995
        %v1997 = vsel %vm1537, %v1388, %v1384
        %v1998 = vsel %vm1539, %v1392, %v1997
        %v1999 = vsel %vm1541, %v1396, %v1998
        %v2000 = vsel %vm1543, %v1400, %v1999
        %v2001 = vsel %vm1545, %v1404, %v2000
        %v2002 = vsel %vm1547, %v1408, %v2001
        %v2003 = vsel %vm1549, %v1959, %v2002
        %v2004 = vsel %vm1537, %v1420, %v1416
        %v2005 = vsel %vm1539, %v1424, %v2004
        %v2006 = vsel %vm1541, %v1428, %v2005
        %v2007 = vsel %vm1543, %v1432, %v2006
        %v2008 = vsel %vm1545, %v1436, %v2007
        %v2009 = vsel %vm1547, %v1440, %v2008
        %v2010 = vsel %vm1549, %v1963, %v2009
        %v2011 = vsel %vm1537, %v1452, %v1448
        %v2012 = vsel %vm1539, %v1456, %v2011
        %v2013 = vsel %vm1541, %v1460, %v2012
        %v2014 = vsel %vm1543, %v1464, %v2013
        %v2015 = vsel %vm1545, %v1468, %v2014
        %v2016 = vsel %vm1547, %v1472, %v2015
        %v2017 = vsel %vm1549, %v1967, %v2016
        %v2018 = vsel %vm1537, %v1484, %v1480
        %v2019 = vsel %vm1539, %v1488, %v2018
        %v2020 = vsel %vm1541, %v1492, %v2019
        %v2021 = vsel %vm1543, %v1496, %v2020
        %v2022 = vsel %vm1545, %v1500, %v2021
        %v2023 = vsel %vm1547, %v1504, %v2022
        %v2024 = vsel %vm1549, %v1971, %v2023
        %v2025 = vsel %vm1537, %v1516, %v1512
        %v2026 = vsel %vm1539, %v1520, %v2025
        %v2027 = vsel %vm1541, %v1524, %v2026
        %v2028 = vsel %vm1543, %v1528, %v2027
        %v2029 = vsel %vm1545, %v1532, %v2028
        %v2030 = vsel %vm1547, %v1536, %v2029
        %v2031 = vsel %vm1549, %v1975, %v2030
        %2032 = vrot.lane.b32.xlu0 %v1982, 8
        %v2033 = vpop.permute.xlu0 %2032
        %2034 = vrot.lane.b32.xlu0 %v1989, 8
        %v2035 = vpop.permute.xlu0 %2034
        %2036 = vrot.lane.b32.xlu0 %v1996, 8
        %v2037 = vpop.permute.xlu0 %2036
        %2038 = vrot.lane.b32.xlu0 %v2003, 8
        %v2039 = vpop.permute.xlu0 %2038
        %2040 = vrot.lane.b32.xlu0 %v2010, 8
        %v2041 = vpop.permute.xlu0 %2040
        %2042 = vrot.lane.b32.xlu0 %v2017, 8
        %v2043 = vpop.permute.xlu0 %2042
        %2044 = vrot.lane.b32.xlu0 %v2024, 8
        %v2045 = vpop.permute.xlu0 %2044
        %2046 = vrot.lane.b32.xlu0 %v2031, 8
        %v2047 = vpop.permute.xlu0 %2046
        %v2056 = vlaneseq
        %v2057 = vshrl.u32 %v2056, 7
        %v2058 = vsub.s32 0, %v2057
        %v2059 = vrot.slane %v632, %v2058
        %v2060 = vlaneseq
        %v2061 = vshrl.u32 %v2060, 7
        %v2062 = vsub.s32 0, %v2061
        %v2063 = vrot.slane %v640, %v2062
        %v2064 = vlaneseq
        %v2065 = vshrl.u32 %v2064, 7
        %v2066 = vsub.s32 0, %v2065
        %v2067 = vrot.slane %v639, %v2066
        %v2068 = vlaneseq
        %v2069 = vshrl.u32 %v2068, 7
        %v2070 = vsub.s32 0, %v2069
        %v2071 = vrot.slane %v641, %v2070
        %v2072 = vlaneseq
        %v2073 = vshrl.u32 %v2072, 7
        %v2074 = vsub.s32 0, %v2073
        %v2075 = vrot.slane %v649, %v2074
        %v2076 = vlaneseq
        %v2077 = vshrl.u32 %v2076, 7
        %v2078 = vsub.s32 0, %v2077
        %v2079 = vrot.slane %v657, %v2078
        %v2080 = vlaneseq
        %v2081 = vshrl.u32 %v2080, 7
        %v2082 = vsub.s32 0, %v2081
        %v2083 = vrot.slane %v656, %v2082
        %v2084 = vlaneseq
        %v2085 = vshrl.u32 %v2084, 7
        %v2086 = vsub.s32 0, %v2085
        %v2087 = vrot.slane %v658, %v2086
        %v2088 = vlaneseq
        %v2089 = vshrl.u32 %v2088, 7
        %v2090 = vsub.s32 0, %v2089
        %v2091 = vrot.slane %v714, %v2090
        %v2092 = vlaneseq
        %v2093 = vshrl.u32 %v2092, 7
        %v2094 = vsub.s32 0, %v2093
        %v2095 = vrot.slane %v722, %v2094
        %v2096 = vlaneseq
        %v2097 = vshrl.u32 %v2096, 7
        %v2098 = vsub.s32 0, %v2097
        %v2099 = vrot.slane %v721, %v2098
        %v2100 = vlaneseq
        %v2101 = vshrl.u32 %v2100, 7
        %v2102 = vsub.s32 0, %v2101
        %v2103 = vrot.slane %v723, %v2102
        %v2104 = vlaneseq
        %v2105 = vshrl.u32 %v2104, 7
        %v2106 = vsub.s32 0, %v2105
        %v2107 = vrot.slane %v731, %v2106
        %v2108 = vlaneseq
        %v2109 = vshrl.u32 %v2108, 7
        %v2110 = vsub.s32 0, %v2109
        %v2111 = vrot.slane %v739, %v2110
        %v2112 = vlaneseq
        %v2113 = vshrl.u32 %v2112, 7
        %v2114 = vsub.s32 0, %v2113
        %v2115 = vrot.slane %v738, %v2114
        %v2116 = vlaneseq
        %v2117 = vshrl.u32 %v2116, 7
        %v2118 = vsub.s32 0, %v2117
        %v2119 = vrot.slane %v740, %v2118
        %v2120 = vlaneseq
        %v2121 = vshrl.u32 %v2120, 7
        %v2122 = vsub.s32 0, %v2121
        %v2123 = vrot.slane %v796, %v2122
        %v2124 = vlaneseq
        %v2125 = vshrl.u32 %v2124, 7
        %v2126 = vsub.s32 0, %v2125
        %v2127 = vrot.slane %v804, %v2126
        %v2128 = vlaneseq
        %v2129 = vshrl.u32 %v2128, 7
        %v2130 = vsub.s32 0, %v2129
        %v2131 = vrot.slane %v803, %v2130
        %v2132 = vlaneseq
        %v2133 = vshrl.u32 %v2132, 7
        %v2134 = vsub.s32 0, %v2133
        %v2135 = vrot.slane %v805, %v2134
        %v2136 = vlaneseq
        %v2137 = vshrl.u32 %v2136, 7
        %v2138 = vsub.s32 0, %v2137
        %v2139 = vrot.slane %v813, %v2138
        %v2140 = vlaneseq
        %v2141 = vshrl.u32 %v2140, 7
        %v2142 = vsub.s32 0, %v2141
        %v2143 = vrot.slane %v821, %v2142
        %v2144 = vlaneseq
        %v2145 = vshrl.u32 %v2144, 7
        %v2146 = vsub.s32 0, %v2145
        %v2147 = vrot.slane %v820, %v2146
        %v2148 = vlaneseq
        %v2149 = vshrl.u32 %v2148, 7
        %v2150 = vsub.s32 0, %v2149
        %v2151 = vrot.slane %v822, %v2150
        %v2152 = vlaneseq
        %v2153 = vshrl.u32 %v2152, 7
        %v2154 = vsub.s32 0, %v2153
        %v2155 = vrot.slane %v878, %v2154
        %v2156 = vlaneseq
        %v2157 = vshrl.u32 %v2156, 7
        %v2158 = vsub.s32 0, %v2157
        %v2159 = vrot.slane %v886, %v2158
        %v2160 = vlaneseq
        %v2161 = vshrl.u32 %v2160, 7
        %v2162 = vsub.s32 0, %v2161
        %v2163 = vrot.slane %v885, %v2162
        %v2164 = vlaneseq
        %v2165 = vshrl.u32 %v2164, 7
        %v2166 = vsub.s32 0, %v2165
        %v2167 = vrot.slane %v887, %v2166
        %v2168 = vlaneseq
        %v2169 = vshrl.u32 %v2168, 7
        %v2170 = vsub.s32 0, %v2169
        %v2171 = vrot.slane %v895, %v2170
        %v2172 = vlaneseq
        %v2173 = vshrl.u32 %v2172, 7
        %v2174 = vsub.s32 0, %v2173
        %v2175 = vrot.slane %v903, %v2174
        %v2176 = vlaneseq
        %v2177 = vshrl.u32 %v2176, 7
        %v2178 = vsub.s32 0, %v2177
        %v2179 = vrot.slane %v902, %v2178
        %v2180 = vlaneseq
        %v2181 = vshrl.u32 %v2180, 7
        %v2182 = vsub.s32 0, %v2181
        %v2183 = vrot.slane %v904, %v2182
        %v2184 = vlaneseq
        %v2185 = vshrl.u32 %v2184, 7
        %v2186 = vsub.s32 0, %v2185
        %v2187 = vrot.slane %v960, %v2186
        %v2188 = vlaneseq
        %v2189 = vshrl.u32 %v2188, 7
        %v2190 = vsub.s32 0, %v2189
        %v2191 = vrot.slane %v968, %v2190
        %v2192 = vlaneseq
        %v2193 = vshrl.u32 %v2192, 7
        %v2194 = vsub.s32 0, %v2193
        %v2195 = vrot.slane %v967, %v2194
        %v2196 = vlaneseq
        %v2197 = vshrl.u32 %v2196, 7
        %v2198 = vsub.s32 0, %v2197
        %v2199 = vrot.slane %v969, %v2198
        %v2200 = vlaneseq
        %v2201 = vshrl.u32 %v2200, 7
        %v2202 = vsub.s32 0, %v2201
        %v2203 = vrot.slane %v977, %v2202
        %v2204 = vlaneseq
        %v2205 = vshrl.u32 %v2204, 7
        %v2206 = vsub.s32 0, %v2205
        %v2207 = vrot.slane %v985, %v2206
        %v2208 = vlaneseq
        %v2209 = vshrl.u32 %v2208, 7
        %v2210 = vsub.s32 0, %v2209
        %v2211 = vrot.slane %v984, %v2210
        %v2212 = vlaneseq
        %v2213 = vshrl.u32 %v2212, 7
        %v2214 = vsub.s32 0, %v2213
        %v2215 = vrot.slane %v986, %v2214
        %v2216 = vlaneseq
        %v2217 = vshrl.u32 %v2216, 7
        %v2218 = vsub.s32 0, %v2217
        %v2219 = vrot.slane %v1042, %v2218
        %v2220 = vlaneseq
        %v2221 = vshrl.u32 %v2220, 7
        %v2222 = vsub.s32 0, %v2221
        %v2223 = vrot.slane %v1050, %v2222
        %v2224 = vlaneseq
        %v2225 = vshrl.u32 %v2224, 7
        %v2226 = vsub.s32 0, %v2225
        %v2227 = vrot.slane %v1049, %v2226
        %v2228 = vlaneseq
        %v2229 = vshrl.u32 %v2228, 7
        %v2230 = vsub.s32 0, %v2229
        %v2231 = vrot.slane %v1051, %v2230
        %v2232 = vlaneseq
        %v2233 = vshrl.u32 %v2232, 7
        %v2234 = vsub.s32 0, %v2233
        %v2235 = vrot.slane %v1059, %v2234
        %v2236 = vlaneseq
        %v2237 = vshrl.u32 %v2236, 7
        %v2238 = vsub.s32 0, %v2237
        %v2239 = vrot.slane %v1067, %v2238
        %v2240 = vlaneseq
        %v2241 = vshrl.u32 %v2240, 7
        %v2242 = vsub.s32 0, %v2241
        %v2243 = vrot.slane %v1066, %v2242
        %v2244 = vlaneseq
        %v2245 = vshrl.u32 %v2244, 7
        %v2246 = vsub.s32 0, %v2245
        %v2247 = vrot.slane %v1068, %v2246
        %v2248 = vlaneseq
        %v2249 = vshrl.u32 %v2248, 7
        %v2250 = vsub.s32 0, %v2249
        %v2251 = vrot.slane %v1124, %v2250
        %v2252 = vlaneseq
        %v2253 = vshrl.u32 %v2252, 7
        %v2254 = vsub.s32 0, %v2253
        %v2255 = vrot.slane %v1132, %v2254
        %v2256 = vlaneseq
        %v2257 = vshrl.u32 %v2256, 7
        %v2258 = vsub.s32 0, %v2257
        %v2259 = vrot.slane %v1131, %v2258
        %v2260 = vlaneseq
        %v2261 = vshrl.u32 %v2260, 7
        %v2262 = vsub.s32 0, %v2261
        %v2263 = vrot.slane %v1133, %v2262
        %v2264 = vlaneseq
        %v2265 = vshrl.u32 %v2264, 7
        %v2266 = vsub.s32 0, %v2265
        %v2267 = vrot.slane %v1141, %v2266
        %v2268 = vlaneseq
        %v2269 = vshrl.u32 %v2268, 7
        %v2270 = vsub.s32 0, %v2269
        %v2271 = vrot.slane %v1149, %v2270
        %v2272 = vlaneseq
        %v2273 = vshrl.u32 %v2272, 7
        %v2274 = vsub.s32 0, %v2273
        %v2275 = vrot.slane %v1148, %v2274
        %v2276 = vlaneseq
        %v2277 = vshrl.u32 %v2276, 7
        %v2278 = vsub.s32 0, %v2277
        %v2279 = vrot.slane %v1150, %v2278
        %v2280 = vlaneseq
        %v2281 = vshrl.u32 %v2280, 7
        %v2282 = vsub.s32 0, %v2281
        %v2283 = vrot.slane %v1206, %v2282
        %v2284 = vlaneseq
        %v2285 = vshrl.u32 %v2284, 7
        %v2286 = vsub.s32 0, %v2285
        %v2287 = vrot.slane %v1214, %v2286
        %v2288 = vlaneseq
        %v2289 = vshrl.u32 %v2288, 7
        %v2290 = vsub.s32 0, %v2289
        %v2291 = vrot.slane %v1213, %v2290
        %v2292 = vlaneseq
        %v2293 = vshrl.u32 %v2292, 7
        %v2294 = vsub.s32 0, %v2293
        %v2295 = vrot.slane %v1215, %v2294
        %v2296 = vlaneseq
        %v2297 = vshrl.u32 %v2296, 7
        %v2298 = vsub.s32 0, %v2297
        %v2299 = vrot.slane %v1223, %v2298
        %v2300 = vlaneseq
        %v2301 = vshrl.u32 %v2300, 7
        %v2302 = vsub.s32 0, %v2301
        %v2303 = vrot.slane %v1231, %v2302
        %v2304 = vlaneseq
        %v2305 = vshrl.u32 %v2304, 7
        %v2306 = vsub.s32 0, %v2305
        %v2307 = vrot.slane %v1230, %v2306
        %v2308 = vlaneseq
        %v2309 = vshrl.u32 %v2308, 7
        %v2310 = vsub.s32 0, %v2309
        %v2311 = vrot.slane %v1232, %v2310
        %v2312 = vsel %vm1537, %v2063, %v2059
        %v2313 = vsel %vm1539, %v2067, %v2312
        %v2314 = vsel %vm1541, %v2071, %v2313
        %v2315 = vsel %vm1543, %v2075, %v2314
        %v2316 = vsel %vm1545, %v2079, %v2315
        %v2317 = vsel %vm1547, %v2083, %v2316
        %v2318 = vsel %vm1549, %v2087, %v2317
        %v2319 = vsel %vm1537, %v2095, %v2091
        %v2320 = vsel %vm1539, %v2099, %v2319
        %v2321 = vsel %vm1541, %v2103, %v2320
        %v2322 = vsel %vm1543, %v2107, %v2321
        %v2323 = vsel %vm1545, %v2111, %v2322
        %v2324 = vsel %vm1547, %v2115, %v2323
        %v2325 = vsel %vm1549, %v2119, %v2324
        %v2326 = vsel %vm1537, %v2127, %v2123
        %v2327 = vsel %vm1539, %v2131, %v2326
        %v2328 = vsel %vm1541, %v2135, %v2327
        %v2329 = vsel %vm1543, %v2139, %v2328
        %v2330 = vsel %vm1545, %v2143, %v2329
        %v2331 = vsel %vm1547, %v2147, %v2330
        %v2332 = vsel %vm1549, %v2151, %v2331
        %v2333 = vsel %vm1537, %v2159, %v2155
        %v2334 = vsel %vm1539, %v2163, %v2333
        %v2335 = vsel %vm1541, %v2167, %v2334
        %v2336 = vsel %vm1543, %v2171, %v2335
        %v2337 = vsel %vm1545, %v2175, %v2336
        %v2338 = vsel %vm1547, %v2179, %v2337
        %v2339 = vsel %vm1549, %v2183, %v2338
        %v2340 = vsel %vm1537, %v2191, %v2187
        %v2341 = vsel %vm1539, %v2195, %v2340
        %v2342 = vsel %vm1541, %v2199, %v2341
        %v2343 = vsel %vm1543, %v2203, %v2342
        %v2344 = vsel %vm1545, %v2207, %v2343
        %v2345 = vsel %vm1547, %v2211, %v2344
        %v2346 = vsel %vm1549, %v2215, %v2345
        %v2347 = vsel %vm1537, %v2223, %v2219
        %v2348 = vsel %vm1539, %v2227, %v2347
        %v2349 = vsel %vm1541, %v2231, %v2348
        %v2350 = vsel %vm1543, %v2235, %v2349
        %v2351 = vsel %vm1545, %v2239, %v2350
        %v2352 = vsel %vm1547, %v2243, %v2351
        %v2353 = vsel %vm1549, %v2247, %v2352
        %v2354 = vsel %vm1537, %v2255, %v2251
        %v2355 = vsel %vm1539, %v2259, %v2354
        %v2356 = vsel %vm1541, %v2263, %v2355
        %v2357 = vsel %vm1543, %v2267, %v2356
        %v2358 = vsel %vm1545, %v2271, %v2357
        %v2359 = vsel %vm1547, %v2275, %v2358
        %v2360 = vsel %vm1549, %v2279, %v2359
        %v2361 = vsel %vm1537, %v2287, %v2283
        %v2362 = vsel %vm1539, %v2291, %v2361
        %v2363 = vsel %vm1541, %v2295, %v2362
        %v2364 = vsel %vm1543, %v2299, %v2363
        %v2365 = vsel %vm1545, %v2303, %v2364
        %v2366 = vsel %vm1547, %v2307, %v2365
        %v2367 = vsel %vm1549, %v2311, %v2366
        %2368 = vrot.lane.b32.xlu0 %v2318, 12
        %v2369 = vpop.permute.xlu0 %2368
        %2370 = vrot.lane.b32.xlu0 %v2325, 12
        %v2371 = vpop.permute.xlu0 %2370
        %2372 = vrot.lane.b32.xlu0 %v2332, 12
        %v2373 = vpop.permute.xlu0 %2372
        %2374 = vrot.lane.b32.xlu0 %v2339, 12
        %v2375 = vpop.permute.xlu0 %2374
        %2376 = vrot.lane.b32.xlu0 %v2346, 12
        %v2377 = vpop.permute.xlu0 %2376
        %2378 = vrot.lane.b32.xlu0 %v2353, 12
        %v2379 = vpop.permute.xlu0 %2378
        %2380 = vrot.lane.b32.xlu0 %v2360, 12
        %v2381 = vpop.permute.xlu0 %2380
        %2382 = vrot.lane.b32.xlu0 %v2367, 12
        %v2383 = vpop.permute.xlu0 %2382
        %v2392 = vlaneseq
        %v2393 = vshrl.u32 %v2392, 7
        %v2394 = vsub.s32 1, %v2393
        %v2395 = vrot.slane %v632, %v2394
        %v2396 = vlaneseq
        %v2397 = vshrl.u32 %v2396, 7
        %v2398 = vsub.s32 1, %v2397
        %v2399 = vrot.slane %v640, %v2398
        %v2400 = vlaneseq
        %v2401 = vshrl.u32 %v2400, 7
        %v2402 = vsub.s32 1, %v2401
        %v2403 = vrot.slane %v639, %v2402
        %v2404 = vlaneseq
        %v2405 = vshrl.u32 %v2404, 7
        %v2406 = vsub.s32 1, %v2405
        %v2407 = vrot.slane %v641, %v2406
        %v2408 = vlaneseq
        %v2409 = vshrl.u32 %v2408, 7
        %v2410 = vsub.s32 1, %v2409
        %v2411 = vrot.slane %v649, %v2410
        %v2412 = vlaneseq
        %v2413 = vshrl.u32 %v2412, 7
        %v2414 = vsub.s32 1, %v2413
        %v2415 = vrot.slane %v657, %v2414
        %v2416 = vlaneseq
        %v2417 = vshrl.u32 %v2416, 7
        %v2418 = vsub.s32 1, %v2417
        %v2419 = vrot.slane %v656, %v2418
        %v2420 = vlaneseq
        %v2421 = vshrl.u32 %v2420, 7
        %v2422 = vsub.s32 1, %v2421
        %v2423 = vrot.slane %v658, %v2422
        %v2424 = vlaneseq
        %v2425 = vshrl.u32 %v2424, 7
        %v2426 = vsub.s32 1, %v2425
        %v2427 = vrot.slane %v714, %v2426
        %v2428 = vlaneseq
        %v2429 = vshrl.u32 %v2428, 7
        %v2430 = vsub.s32 1, %v2429
        %v2431 = vrot.slane %v722, %v2430
        %v2432 = vlaneseq
        %v2433 = vshrl.u32 %v2432, 7
        %v2434 = vsub.s32 1, %v2433
        %v2435 = vrot.slane %v721, %v2434
        %v2436 = vlaneseq
        %v2437 = vshrl.u32 %v2436, 7
        %v2438 = vsub.s32 1, %v2437
        %v2439 = vrot.slane %v723, %v2438
        %v2440 = vlaneseq
        %v2441 = vshrl.u32 %v2440, 7
        %v2442 = vsub.s32 1, %v2441
        %v2443 = vrot.slane %v731, %v2442
        %v2444 = vlaneseq
        %v2445 = vshrl.u32 %v2444, 7
        %v2446 = vsub.s32 1, %v2445
        %v2447 = vrot.slane %v739, %v2446
        %v2448 = vlaneseq
        %v2449 = vshrl.u32 %v2448, 7
        %v2450 = vsub.s32 1, %v2449
        %v2451 = vrot.slane %v738, %v2450
        %v2452 = vlaneseq
        %v2453 = vshrl.u32 %v2452, 7
        %v2454 = vsub.s32 1, %v2453
        %v2455 = vrot.slane %v740, %v2454
        %v2456 = vlaneseq
        %v2457 = vshrl.u32 %v2456, 7
        %v2458 = vsub.s32 1, %v2457
        %v2459 = vrot.slane %v796, %v2458
        %v2460 = vlaneseq
        %v2461 = vshrl.u32 %v2460, 7
        %v2462 = vsub.s32 1, %v2461
        %v2463 = vrot.slane %v804, %v2462
        %v2464 = vlaneseq
        %v2465 = vshrl.u32 %v2464, 7
        %v2466 = vsub.s32 1, %v2465
        %v2467 = vrot.slane %v803, %v2466
        %v2468 = vlaneseq
        %v2469 = vshrl.u32 %v2468, 7
        %v2470 = vsub.s32 1, %v2469
        %v2471 = vrot.slane %v805, %v2470
        %v2472 = vlaneseq
        %v2473 = vshrl.u32 %v2472, 7
        %v2474 = vsub.s32 1, %v2473
        %v2475 = vrot.slane %v813, %v2474
        %v2476 = vlaneseq
        %v2477 = vshrl.u32 %v2476, 7
        %v2478 = vsub.s32 1, %v2477
        %v2479 = vrot.slane %v821, %v2478
        %v2480 = vlaneseq
        %v2481 = vshrl.u32 %v2480, 7
        %v2482 = vsub.s32 1, %v2481
        %v2483 = vrot.slane %v820, %v2482
        %v2484 = vlaneseq
        %v2485 = vshrl.u32 %v2484, 7
        %v2486 = vsub.s32 1, %v2485
        %v2487 = vrot.slane %v822, %v2486
        %v2488 = vlaneseq
        %v2489 = vshrl.u32 %v2488, 7
        %v2490 = vsub.s32 1, %v2489
        %v2491 = vrot.slane %v878, %v2490
        %v2492 = vlaneseq
        %v2493 = vshrl.u32 %v2492, 7
        %v2494 = vsub.s32 1, %v2493
        %v2495 = vrot.slane %v886, %v2494
        %v2496 = vlaneseq
        %v2497 = vshrl.u32 %v2496, 7
        %v2498 = vsub.s32 1, %v2497
        %v2499 = vrot.slane %v885, %v2498
        %v2500 = vlaneseq
        %v2501 = vshrl.u32 %v2500, 7
        %v2502 = vsub.s32 1, %v2501
        %v2503 = vrot.slane %v887, %v2502
        %v2504 = vlaneseq
        %v2505 = vshrl.u32 %v2504, 7
        %v2506 = vsub.s32 1, %v2505
        %v2507 = vrot.slane %v895, %v2506
        %v2508 = vlaneseq
        %v2509 = vshrl.u32 %v2508, 7
        %v2510 = vsub.s32 1, %v2509
        %v2511 = vrot.slane %v903, %v2510
        %v2512 = vlaneseq
        %v2513 = vshrl.u32 %v2512, 7
        %v2514 = vsub.s32 1, %v2513
        %v2515 = vrot.slane %v902, %v2514
        %v2516 = vlaneseq
        %v2517 = vshrl.u32 %v2516, 7
        %v2518 = vsub.s32 1, %v2517
        %v2519 = vrot.slane %v904, %v2518
        %v2520 = vlaneseq
        %v2521 = vshrl.u32 %v2520, 7
        %v2522 = vsub.s32 1, %v2521
        %v2523 = vrot.slane %v960, %v2522
        %v2524 = vlaneseq
        %v2525 = vshrl.u32 %v2524, 7
        %v2526 = vsub.s32 1, %v2525
        %v2527 = vrot.slane %v968, %v2526
        %v2528 = vlaneseq
        %v2529 = vshrl.u32 %v2528, 7
        %v2530 = vsub.s32 1, %v2529
        %v2531 = vrot.slane %v967, %v2530
        %v2532 = vlaneseq
        %v2533 = vshrl.u32 %v2532, 7
        %v2534 = vsub.s32 1, %v2533
        %v2535 = vrot.slane %v969, %v2534
        %v2536 = vlaneseq
        %v2537 = vshrl.u32 %v2536, 7
        %v2538 = vsub.s32 1, %v2537
        %v2539 = vrot.slane %v977, %v2538
        %v2540 = vlaneseq
        %v2541 = vshrl.u32 %v2540, 7
        %v2542 = vsub.s32 1, %v2541
        %v2543 = vrot.slane %v985, %v2542
        %v2544 = vlaneseq
        %v2545 = vshrl.u32 %v2544, 7
        %v2546 = vsub.s32 1, %v2545
        %v2547 = vrot.slane %v984, %v2546
        %v2548 = vlaneseq
        %v2549 = vshrl.u32 %v2548, 7
        %v2550 = vsub.s32 1, %v2549
        %v2551 = vrot.slane %v986, %v2550
        %v2552 = vlaneseq
        %v2553 = vshrl.u32 %v2552, 7
        %v2554 = vsub.s32 1, %v2553
        %v2555 = vrot.slane %v1042, %v2554
        %v2556 = vlaneseq
        %v2557 = vshrl.u32 %v2556, 7
        %v2558 = vsub.s32 1, %v2557
        %v2559 = vrot.slane %v1050, %v2558
        %v2560 = vlaneseq
        %v2561 = vshrl.u32 %v2560, 7
        %v2562 = vsub.s32 1, %v2561
        %v2563 = vrot.slane %v1049, %v2562
        %v2564 = vlaneseq
        %v2565 = vshrl.u32 %v2564, 7
        %v2566 = vsub.s32 1, %v2565
        %v2567 = vrot.slane %v1051, %v2566
        %v2568 = vlaneseq
        %v2569 = vshrl.u32 %v2568, 7
        %v2570 = vsub.s32 1, %v2569
        %v2571 = vrot.slane %v1059, %v2570
        %v2572 = vlaneseq
        %v2573 = vshrl.u32 %v2572, 7
        %v2574 = vsub.s32 1, %v2573
        %v2575 = vrot.slane %v1067, %v2574
        %v2576 = vlaneseq
        %v2577 = vshrl.u32 %v2576, 7
        %v2578 = vsub.s32 1, %v2577
        %v2579 = vrot.slane %v1066, %v2578
        %v2580 = vlaneseq
        %v2581 = vshrl.u32 %v2580, 7
        %v2582 = vsub.s32 1, %v2581
        %v2583 = vrot.slane %v1068, %v2582
        %v2584 = vlaneseq
        %v2585 = vshrl.u32 %v2584, 7
        %v2586 = vsub.s32 1, %v2585
        %v2587 = vrot.slane %v1124, %v2586
        %v2588 = vlaneseq
        %v2589 = vshrl.u32 %v2588, 7
        %v2590 = vsub.s32 1, %v2589
        %v2591 = vrot.slane %v1132, %v2590
        %v2592 = vlaneseq
        %v2593 = vshrl.u32 %v2592, 7
        %v2594 = vsub.s32 1, %v2593
        %v2595 = vrot.slane %v1131, %v2594
        %v2596 = vlaneseq
        %v2597 = vshrl.u32 %v2596, 7
        %v2598 = vsub.s32 1, %v2597
        %v2599 = vrot.slane %v1133, %v2598
        %v2600 = vlaneseq
        %v2601 = vshrl.u32 %v2600, 7
        %v2602 = vsub.s32 1, %v2601
        %v2603 = vrot.slane %v1141, %v2602
        %v2604 = vlaneseq
        %v2605 = vshrl.u32 %v2604, 7
        %v2606 = vsub.s32 1, %v2605
        %v2607 = vrot.slane %v1149, %v2606
        %v2608 = vlaneseq
        %v2609 = vshrl.u32 %v2608, 7
        %v2610 = vsub.s32 1, %v2609
        %v2611 = vrot.slane %v1148, %v2610
        %v2612 = vlaneseq
        %v2613 = vshrl.u32 %v2612, 7
        %v2614 = vsub.s32 1, %v2613
        %v2615 = vrot.slane %v1150, %v2614
        %v2616 = vlaneseq
        %v2617 = vshrl.u32 %v2616, 7
        %v2618 = vsub.s32 1, %v2617
        %v2619 = vrot.slane %v1206, %v2618
        %v2620 = vlaneseq
        %v2621 = vshrl.u32 %v2620, 7
        %v2622 = vsub.s32 1, %v2621
        %v2623 = vrot.slane %v1214, %v2622
        %v2624 = vlaneseq
        %v2625 = vshrl.u32 %v2624, 7
        %v2626 = vsub.s32 1, %v2625
        %v2627 = vrot.slane %v1213, %v2626
        %v2628 = vlaneseq
        %v2629 = vshrl.u32 %v2628, 7
        %v2630 = vsub.s32 1, %v2629
        %v2631 = vrot.slane %v1215, %v2630
        %v2632 = vlaneseq
        %v2633 = vshrl.u32 %v2632, 7
        %v2634 = vsub.s32 1, %v2633
        %v2635 = vrot.slane %v1223, %v2634
        %v2636 = vlaneseq
        %v2637 = vshrl.u32 %v2636, 7
        %v2638 = vsub.s32 1, %v2637
        %v2639 = vrot.slane %v1231, %v2638
        %v2640 = vlaneseq
        %v2641 = vshrl.u32 %v2640, 7
        %v2642 = vsub.s32 1, %v2641
        %v2643 = vrot.slane %v1230, %v2642
        %v2644 = vlaneseq
        %v2645 = vshrl.u32 %v2644, 7
        %v2646 = vsub.s32 1, %v2645
        %v2647 = vrot.slane %v1232, %v2646
        %v2648 = vsel %vm1537, %v2399, %v2395
        %v2649 = vsel %vm1539, %v2403, %v2648
        %v2650 = vsel %vm1541, %v2407, %v2649
        %v2651 = vsel %vm1543, %v2411, %v2650
        %v2652 = vsel %vm1545, %v2415, %v2651
        %v2653 = vsel %vm1547, %v2419, %v2652
        %v2654 = vsel %vm1549, %v2423, %v2653
        %v2655 = vsel %vm1537, %v2431, %v2427
        %v2656 = vsel %vm1539, %v2435, %v2655
        %v2657 = vsel %vm1541, %v2439, %v2656
        %v2658 = vsel %vm1543, %v2443, %v2657
        %v2659 = vsel %vm1545, %v2447, %v2658
        %v2660 = vsel %vm1547, %v2451, %v2659
        %v2661 = vsel %vm1549, %v2455, %v2660
        %v2662 = vsel %vm1537, %v2463, %v2459
        %v2663 = vsel %vm1539, %v2467, %v2662
        %v2664 = vsel %vm1541, %v2471, %v2663
        %v2665 = vsel %vm1543, %v2475, %v2664
        %v2666 = vsel %vm1545, %v2479, %v2665
        %v2667 = vsel %vm1547, %v2483, %v2666
        %v2668 = vsel %vm1549, %v2487, %v2667
        %v2669 = vsel %vm1537, %v2495, %v2491
        %v2670 = vsel %vm1539, %v2499, %v2669
        %v2671 = vsel %vm1541, %v2503, %v2670
        %v2672 = vsel %vm1543, %v2507, %v2671
        %v2673 = vsel %vm1545, %v2511, %v2672
        %v2674 = vsel %vm1547, %v2515, %v2673
        %v2675 = vsel %vm1549, %v2519, %v2674
        %v2676 = vsel %vm1537, %v2527, %v2523
        %v2677 = vsel %vm1539, %v2531, %v2676
        %v2678 = vsel %vm1541, %v2535, %v2677
        %v2679 = vsel %vm1543, %v2539, %v2678
        %v2680 = vsel %vm1545, %v2543, %v2679
        %v2681 = vsel %vm1547, %v2547, %v2680
        %v2682 = vsel %vm1549, %v2551, %v2681
        %v2683 = vsel %vm1537, %v2559, %v2555
        %v2684 = vsel %vm1539, %v2563, %v2683
        %v2685 = vsel %vm1541, %v2567, %v2684
        %v2686 = vsel %vm1543, %v2571, %v2685
        %v2687 = vsel %vm1545, %v2575, %v2686
        %v2688 = vsel %vm1547, %v2579, %v2687
        %v2689 = vsel %vm1549, %v2583, %v2688
        %v2690 = vsel %vm1537, %v2591, %v2587
        %v2691 = vsel %vm1539, %v2595, %v2690
        %v2692 = vsel %vm1541, %v2599, %v2691
        %v2693 = vsel %vm1543, %v2603, %v2692
        %v2694 = vsel %vm1545, %v2607, %v2693
        %v2695 = vsel %vm1547, %v2611, %v2694
        %v2696 = vsel %vm1549, %v2615, %v2695
        %v2697 = vsel %vm1537, %v2623, %v2619
        %v2698 = vsel %vm1539, %v2627, %v2697
        %v2699 = vsel %vm1541, %v2631, %v2698
        %v2700 = vsel %vm1543, %v2635, %v2699
        %v2701 = vsel %vm1545, %v2639, %v2700
        %v2702 = vsel %vm1547, %v2643, %v2701
        %v2703 = vsel %vm1549, %v2647, %v2702
        %2704 = vrot.lane.b32.xlu0 %v2654, 16
        %v2705 = vpop.permute.xlu0 %2704
        %2706 = vrot.lane.b32.xlu0 %v2661, 16
        %v2707 = vpop.permute.xlu0 %2706
        %2708 = vrot.lane.b32.xlu0 %v2668, 16
        %v2709 = vpop.permute.xlu0 %2708
        %2710 = vrot.lane.b32.xlu0 %v2675, 16
        %v2711 = vpop.permute.xlu0 %2710
        %2712 = vrot.lane.b32.xlu0 %v2682, 16
        %v2713 = vpop.permute.xlu0 %2712
        %2714 = vrot.lane.b32.xlu0 %v2689, 16
        %v2715 = vpop.permute.xlu0 %2714
        %2716 = vrot.lane.b32.xlu0 %v2696, 16
        %v2717 = vpop.permute.xlu0 %2716
        %2718 = vrot.lane.b32.xlu0 %v2703, 16
        %v2719 = vpop.permute.xlu0 %2718
        %v2728 = vlaneseq
        %v2729 = vshrl.u32 %v2728, 7
        %v2730 = vsub.s32 0, %v2729
        %v2731 = vrot.slane %v665, %v2730
        %v2732 = vlaneseq
        %v2733 = vshrl.u32 %v2732, 7
        %v2734 = vsub.s32 0, %v2733
        %v2735 = vrot.slane %v747, %v2734
        %v2736 = vlaneseq
        %v2737 = vshrl.u32 %v2736, 7
        %v2738 = vsub.s32 0, %v2737
        %v2739 = vrot.slane %v829, %v2738
        %v2740 = vlaneseq
        %v2741 = vshrl.u32 %v2740, 7
        %v2742 = vsub.s32 0, %v2741
        %v2743 = vrot.slane %v911, %v2742
        %v2744 = vlaneseq
        %v2745 = vshrl.u32 %v2744, 7
        %v2746 = vsub.s32 0, %v2745
        %v2747 = vrot.slane %v993, %v2746
        %v2748 = vlaneseq
        %v2749 = vshrl.u32 %v2748, 7
        %v2750 = vsub.s32 0, %v2749
        %v2751 = vrot.slane %v1075, %v2750
        %v2752 = vlaneseq
        %v2753 = vshrl.u32 %v2752, 7
        %v2754 = vsub.s32 0, %v2753
        %v2755 = vrot.slane %v1157, %v2754
        %v2756 = vlaneseq
        %v2757 = vshrl.u32 %v2756, 7
        %v2758 = vsub.s32 0, %v2757
        %v2759 = vrot.slane %v1239, %v2758
        %v2760 = vsel %vm1537, %v2067, %v2063
        %v2761 = vsel %vm1539, %v2071, %v2760
        %v2762 = vsel %vm1541, %v2075, %v2761
        %v2763 = vsel %vm1543, %v2079, %v2762
        %v2764 = vsel %vm1545, %v2083, %v2763
        %v2765 = vsel %vm1547, %v2087, %v2764
        %v2766 = vsel %vm1549, %v2731, %v2765
        %v2767 = vsel %vm1537, %v2099, %v2095
        %v2768 = vsel %vm1539, %v2103, %v2767
        %v2769 = vsel %vm1541, %v2107, %v2768
        %v2770 = vsel %vm1543, %v2111, %v2769
        %v2771 = vsel %vm1545, %v2115, %v2770
        %v2772 = vsel %vm1547, %v2119, %v2771
        %v2773 = vsel %vm1549, %v2735, %v2772
        %v2774 = vsel %vm1537, %v2131, %v2127
        %v2775 = vsel %vm1539, %v2135, %v2774
        %v2776 = vsel %vm1541, %v2139, %v2775
        %v2777 = vsel %vm1543, %v2143, %v2776
        %v2778 = vsel %vm1545, %v2147, %v2777
        %v2779 = vsel %vm1547, %v2151, %v2778
        %v2780 = vsel %vm1549, %v2739, %v2779
        %v2781 = vsel %vm1537, %v2163, %v2159
        %v2782 = vsel %vm1539, %v2167, %v2781
        %v2783 = vsel %vm1541, %v2171, %v2782
        %v2784 = vsel %vm1543, %v2175, %v2783
        %v2785 = vsel %vm1545, %v2179, %v2784
        %v2786 = vsel %vm1547, %v2183, %v2785
        %v2787 = vsel %vm1549, %v2743, %v2786
        %v2788 = vsel %vm1537, %v2195, %v2191
        %v2789 = vsel %vm1539, %v2199, %v2788
        %v2790 = vsel %vm1541, %v2203, %v2789
        %v2791 = vsel %vm1543, %v2207, %v2790
        %v2792 = vsel %vm1545, %v2211, %v2791
        %v2793 = vsel %vm1547, %v2215, %v2792
        %v2794 = vsel %vm1549, %v2747, %v2793
        %v2795 = vsel %vm1537, %v2227, %v2223
        %v2796 = vsel %vm1539, %v2231, %v2795
        %v2797 = vsel %vm1541, %v2235, %v2796
        %v2798 = vsel %vm1543, %v2239, %v2797
        %v2799 = vsel %vm1545, %v2243, %v2798
        %v2800 = vsel %vm1547, %v2247, %v2799
        %v2801 = vsel %vm1549, %v2751, %v2800
        %v2802 = vsel %vm1537, %v2259, %v2255
        %v2803 = vsel %vm1539, %v2263, %v2802
        %v2804 = vsel %vm1541, %v2267, %v2803
        %v2805 = vsel %vm1543, %v2271, %v2804
        %v2806 = vsel %vm1545, %v2275, %v2805
        %v2807 = vsel %vm1547, %v2279, %v2806
        %v2808 = vsel %vm1549, %v2755, %v2807
        %v2809 = vsel %vm1537, %v2291, %v2287
        %v2810 = vsel %vm1539, %v2295, %v2809
        %v2811 = vsel %vm1541, %v2299, %v2810
        %v2812 = vsel %vm1543, %v2303, %v2811
        %v2813 = vsel %vm1545, %v2307, %v2812
        %v2814 = vsel %vm1547, %v2311, %v2813
        %v2815 = vsel %vm1549, %v2759, %v2814
        %2816 = vrot.lane.b32.xlu0 %v2766, 20
        %v2817 = vpop.permute.xlu0 %2816
        %2818 = vrot.lane.b32.xlu0 %v2773, 20
        %v2819 = vpop.permute.xlu0 %2818
        %2820 = vrot.lane.b32.xlu0 %v2780, 20
        %v2821 = vpop.permute.xlu0 %2820
        %2822 = vrot.lane.b32.xlu0 %v2787, 20
        %v2823 = vpop.permute.xlu0 %2822
        %2824 = vrot.lane.b32.xlu0 %v2794, 20
        %v2825 = vpop.permute.xlu0 %2824
        %2826 = vrot.lane.b32.xlu0 %v2801, 20
        %v2827 = vpop.permute.xlu0 %2826
        %2828 = vrot.lane.b32.xlu0 %v2808, 20
        %v2829 = vpop.permute.xlu0 %2828
        %2830 = vrot.lane.b32.xlu0 %v2815, 20
        %v2831 = vpop.permute.xlu0 %2830
        %v2840 = vlaneseq
        %v2841 = vshrl.u32 %v2840, 7
        %v2842 = vsub.s32 0, %v2841
        %v2843 = vrot.slane %v1247, %v2842
        %v2844 = vlaneseq
        %v2845 = vshrl.u32 %v2844, 7
        %v2846 = vsub.s32 0, %v2845
        %v2847 = vrot.slane %v1255, %v2846
        %v2848 = vlaneseq
        %v2849 = vshrl.u32 %v2848, 7
        %v2850 = vsub.s32 0, %v2849
        %v2851 = vrot.slane %v1254, %v2850
        %v2852 = vlaneseq
        %v2853 = vshrl.u32 %v2852, 7
        %v2854 = vsub.s32 0, %v2853
        %v2855 = vrot.slane %v1256, %v2854
        %v2856 = vlaneseq
        %v2857 = vshrl.u32 %v2856, 7
        %v2858 = vsub.s32 0, %v2857
        %v2859 = vrot.slane %v1264, %v2858
        %v2860 = vlaneseq
        %v2861 = vshrl.u32 %v2860, 7
        %v2862 = vsub.s32 0, %v2861
        %v2863 = vrot.slane %v1272, %v2862
        %v2864 = vlaneseq
        %v2865 = vshrl.u32 %v2864, 7
        %v2866 = vsub.s32 0, %v2865
        %v2867 = vrot.slane %v1271, %v2866
        %v2868 = vlaneseq
        %v2869 = vshrl.u32 %v2868, 7
        %v2870 = vsub.s32 0, %v2869
        %v2871 = vrot.slane %v1273, %v2870
        %v2872 = vsel %vm1537, %v2847, %v2843
        %v2873 = vsel %vm1539, %v2851, %v2872
        %v2874 = vsel %vm1541, %v2855, %v2873
        %v2875 = vsel %vm1543, %v2859, %v2874
        %v2876 = vsel %vm1545, %v2863, %v2875
        %v2877 = vsel %vm1547, %v2867, %v2876
        %v2878 = vsel %vm1549, %v2871, %v2877
        %2879 = vrot.lane.b32.xlu0 %v1557, 24
        %v2880 = vpop.permute.xlu0 %2879
        %2881 = vrot.lane.b32.xlu0 %v1564, 24
        %v2882 = vpop.permute.xlu0 %2881
        %2883 = vrot.lane.b32.xlu0 %v1571, 24
        %v2884 = vpop.permute.xlu0 %2883
        %2885 = vrot.lane.b32.xlu0 %v1578, 24
        %v2886 = vpop.permute.xlu0 %2885
        %2887 = vrot.lane.b32.xlu0 %v1585, 24
        %v2888 = vpop.permute.xlu0 %2887
        %2889 = vrot.lane.b32.xlu0 %v1592, 24
        %v2890 = vpop.permute.xlu0 %2889
        %2891 = vrot.lane.b32.xlu0 %v1599, 24
        %v2892 = vpop.permute.xlu0 %2891
        %2893 = vrot.lane.b32.xlu0 %v2878, 24
        %v2894 = vpop.permute.xlu0 %2893
        %v2903 = vlaneseq
        %v2904 = vshrl.u32 %v2903, 7
        %v2905 = vsub.s32 1, %v2904
        %v2906 = vrot.slane %v1247, %v2905
        %v2907 = vlaneseq
        %v2908 = vshrl.u32 %v2907, 7
        %v2909 = vsub.s32 1, %v2908
        %v2910 = vrot.slane %v1255, %v2909
        %v2911 = vlaneseq
        %v2912 = vshrl.u32 %v2911, 7
        %v2913 = vsub.s32 1, %v2912
        %v2914 = vrot.slane %v1254, %v2913
        %v2915 = vlaneseq
        %v2916 = vshrl.u32 %v2915, 7
        %v2917 = vsub.s32 1, %v2916
        %v2918 = vrot.slane %v1256, %v2917
        %v2919 = vlaneseq
        %v2920 = vshrl.u32 %v2919, 7
        %v2921 = vsub.s32 1, %v2920
        %v2922 = vrot.slane %v1264, %v2921
        %v2923 = vlaneseq
        %v2924 = vshrl.u32 %v2923, 7
        %v2925 = vsub.s32 1, %v2924
        %v2926 = vrot.slane %v1272, %v2925
        %v2927 = vlaneseq
        %v2928 = vshrl.u32 %v2927, 7
        %v2929 = vsub.s32 1, %v2928
        %v2930 = vrot.slane %v1271, %v2929
        %v2931 = vlaneseq
        %v2932 = vshrl.u32 %v2931, 7
        %v2933 = vsub.s32 1, %v2932
        %v2934 = vrot.slane %v1273, %v2933
        %v2935 = vsel %vm1537, %v2910, %v2906
        %v2936 = vsel %vm1539, %v2914, %v2935
        %v2937 = vsel %vm1541, %v2918, %v2936
        %v2938 = vsel %vm1543, %v2922, %v2937
        %v2939 = vsel %vm1545, %v2926, %v2938
        %v2940 = vsel %vm1547, %v2930, %v2939
        %v2941 = vsel %vm1549, %v2934, %v2940
        %2942 = vrot.lane.b32.xlu0 %v1877, 28
        %v2943 = vpop.permute.xlu0 %2942
        %2944 = vrot.lane.b32.xlu0 %v1884, 28
        %v2945 = vpop.permute.xlu0 %2944
        %2946 = vrot.lane.b32.xlu0 %v1891, 28
        %v2947 = vpop.permute.xlu0 %2946
        %2948 = vrot.lane.b32.xlu0 %v1898, 28
        %v2949 = vpop.permute.xlu0 %2948
        %2950 = vrot.lane.b32.xlu0 %v1905, 28
        %v2951 = vpop.permute.xlu0 %2950
        %2952 = vrot.lane.b32.xlu0 %v1912, 28
        %v2953 = vpop.permute.xlu0 %2952
        %2954 = vrot.lane.b32.xlu0 %v1919, 28
        %v2955 = vpop.permute.xlu0 %2954
        %2956 = vrot.lane.b32.xlu0 %v2941, 28
        %v2957 = vpop.permute.xlu0 %2956
        %v2966 = vlaneseq
        %v2967 = vshrl.u32 %v2966, 7
        %v2968 = vsub.s32 0, %v2967
        %v2969 = vrot.slane %v1280, %v2968
        %v2970 = vsel %vm1537, %v2851, %v2847
        %v2971 = vsel %vm1539, %v2855, %v2970
        %v2972 = vsel %vm1541, %v2859, %v2971
        %v2973 = vsel %vm1543, %v2863, %v2972
        %v2974 = vsel %vm1545, %v2867, %v2973
        %v2975 = vsel %vm1547, %v2871, %v2974
        %v2976 = vsel %vm1549, %v2969, %v2975
        %2977 = vrot.lane.b32.xlu0 %v1989, 32
        %v2978 = vpop.permute.xlu0 %2977
        %2979 = vrot.lane.b32.xlu0 %v1996, 32
        %v2980 = vpop.permute.xlu0 %2979
        %2981 = vrot.lane.b32.xlu0 %v2003, 32
        %v2982 = vpop.permute.xlu0 %2981
        %2983 = vrot.lane.b32.xlu0 %v2010, 32
        %v2984 = vpop.permute.xlu0 %2983
        %2985 = vrot.lane.b32.xlu0 %v2017, 32
        %v2986 = vpop.permute.xlu0 %2985
        %2987 = vrot.lane.b32.xlu0 %v2024, 32
        %v2988 = vpop.permute.xlu0 %2987
        %2989 = vrot.lane.b32.xlu0 %v2031, 32
        %v2990 = vpop.permute.xlu0 %2989
        %2991 = vrot.lane.b32.xlu0 %v2976, 32
        %v2992 = vpop.permute.xlu0 %2991
        %v3001 = vsel %vm393, %v1550, %v1921
        %v3002 = vsel %vm393, %v1557, %v1923
        %v3003 = vsel %vm393, %v1564, %v1925
        %v3004 = vsel %vm393, %v1571, %v1927
        %v3005 = vsel %vm393, %v1578, %v1929
        %v3006 = vsel %vm393, %v1585, %v1931
        %v3007 = vsel %vm393, %v1592, %v1933
        %v3008 = vsel %vm393, %v1599, %v1935
        %vm3009 = vcmask 64512
        %v3010 = vsel %vm3009, %v3001, %v2033
        %v3011 = vsel %vm3009, %v3002, %v2035
        %v3012 = vsel %vm3009, %v3003, %v2037
        %v3013 = vsel %vm3009, %v3004, %v2039
        %v3014 = vsel %vm3009, %v3005, %v2041
        %v3015 = vsel %vm3009, %v3006, %v2043
        %v3016 = vsel %vm3009, %v3007, %v2045
        %v3017 = vsel %vm3009, %v3008, %v2047
        %vm3018 = vcmask 97280
        %v3019 = vsel %vm3018, %v3010, %v2369
        %v3020 = vsel %vm3018, %v3011, %v2371
        %v3021 = vsel %vm3018, %v3012, %v2373
        %v3022 = vsel %vm3018, %v3013, %v2375
        %v3023 = vsel %vm3018, %v3014, %v2377
        %v3024 = vsel %vm3018, %v3015, %v2379
        %v3025 = vsel %vm3018, %v3016, %v2381
        %v3026 = vsel %vm3018, %v3017, %v2383
        %vm3027 = vcmask 130048
        %v3028 = vsel %vm3027, %v3019, %v2705
        %v3029 = vsel %vm3027, %v3020, %v2707
        %v3030 = vsel %vm3027, %v3021, %v2709
        %v3031 = vsel %vm3027, %v3022, %v2711
        %v3032 = vsel %vm3027, %v3023, %v2713
        %v3033 = vsel %vm3027, %v3024, %v2715
        %v3034 = vsel %vm3027, %v3025, %v2717
        %v3035 = vsel %vm3027, %v3026, %v2719
        %vm3036 = vcmask 162816
        %v3037 = vsel %vm3036, %v3028, %v2817
        %v3038 = vsel %vm3036, %v3029, %v2819
        %v3039 = vsel %vm3036, %v3030, %v2821
        %v3040 = vsel %vm3036, %v3031, %v2823
        %v3041 = vsel %vm3036, %v3032, %v2825
        %v3042 = vsel %vm3036, %v3033, %v2827
        %v3043 = vsel %vm3036, %v3034, %v2829
        %v3044 = vsel %vm3036, %v3035, %v2831
        %vm3045 = vcmask 195584
        %v3046 = vsel %vm3045, %v3037, %v2880
        %v3047 = vsel %vm3045, %v3038, %v2882
        %v3048 = vsel %vm3045, %v3039, %v2884
        %v3049 = vsel %vm3045, %v3040, %v2886
        %v3050 = vsel %vm3045, %v3041, %v2888
        %v3051 = vsel %vm3045, %v3042, %v2890
        %v3052 = vsel %vm3045, %v3043, %v2892
        %v3053 = vsel %vm3045, %v3044, %v2894
        %vm3054 = vcmask 228352
        %v3055 = vsel %vm3054, %v3046, %v2943
        %v3056 = vsel %vm3054, %v3047, %v2945
        %v3057 = vsel %vm3054, %v3048, %v2947
        %v3058 = vsel %vm3054, %v3049, %v2949
        %v3059 = vsel %vm3054, %v3050, %v2951
        %v3060 = vsel %vm3054, %v3051, %v2953
        %v3061 = vsel %vm3054, %v3052, %v2955
        %v3062 = vsel %vm3054, %v3053, %v2957
        %vm3063 = vcmask 261120
        %v3064 = vsel %vm3063, %v3055, %v2978
        %v3065 = vsel %vm3063, %v3056, %v2980
        %v3066 = vsel %vm3063, %v3057, %v2982
        %v3067 = vsel %vm3063, %v3058, %v2984
        %v3068 = vsel %vm3063, %v3059, %v2986
        %v3069 = vsel %vm3063, %v3060, %v2988
        %v3070 = vsel %vm3063, %v3061, %v2990
        %v3071 = vsel %vm3063, %v3062, %v2992
        %v3072 = vpack.c.bf16 %v3065, %v3064
        %v3073 = vpack.c.bf16 %v3067, %v3066
        %v3074 = vpack.c.bf16 %v3069, %v3068
        %v3075 = vpack.c.bf16 %v3071, %v3070
        %v3077 = vlaneseq
        %v3078 = vshrl.u32 %v3077, 7
        %v3079 = vsub.s32 0, %v3078
        %v3080 = vrot.slane %v392, %v3079
        %v3087 = vunpack.c.l.b16 %v387
        %v3088 = vunpack.c.l.b16 %v388
        %v3089 = vunpack.c.l.b16 %v389
        %v3090 = vunpack.c.l.b16 %v390
        %v3091 = vunpack.c.l.b16 %v391
        %v3092 = vpack.c.b16 %v3088, %v3087
        %v3093 = vpack.c.b16 %v3090, %v3089
        %v3094 = vpack.c.b16 %v3091, %v3091
        %vm3097 = vcmask 293888
        %v3099 = vsel %vm3097, %v3072, 0
        %v3102 = vsel %vm3097, %v3073, 0
        %v3105 = vsel %vm3097, %v3074, 0
        %v3108 = vsel %vm3097, %v3075, 0
        %vm3110 = vcmask 1041408
        %v3112 = vsel %vm3110, %v3094, 0
        %3114 = vmatprep.subr.bf16.mxu0 0
        %3115 = vmatpush1.bf16.msra.mxu0 %v3092
        %3116 = vmatprep.subr.bf16.mxu0 0
        %3117 = vmatpush1.bf16.msra.mxu0 %v3093
        %3118 = vmatprep.subr.bf16.mxu0 0
        %3119 = vmatpush1.bf16.msra.mxu0 %v3112
        %3120 = vmatprep.subr.bf16.mxu0 0
        %3121 = vmatpush1.bf16.msra.mxu0 0
        %3122 = vmatprep.subr.bf16.mxu0 0
        %3123 = vmatpush1.bf16.msra.mxu0 0
        %3124 = vmatprep.subr.bf16.mxu0 0
        %3125 = vmatpush1.bf16.msra.mxu0 0
        %3126 = vmatprep.subr.bf16.mxu0 0
        %3127 = vmatpush1.bf16.msra.mxu0 0
        %3128 = vmatprep.subr.bf16.mxu0 0
        %3129 = vmatpush1.bf16.msra.mxu0 0
        %3130 = vmatprep.subr.bf16.mxu0 0
        %3131 = vmatpush1.bf16.msra.mxu0 0
        %3132 = vmatprep.subr.bf16.mxu0 0
        %3133 = vmatpush1.bf16.msra.mxu0 0
        %3134 = vmatprep.subr.bf16.mxu0 0
        %3135 = vmatpush1.bf16.msra.mxu0 0
        %3136 = vmatprep.subr.bf16.mxu0 0
        %3137 = vmatpush1.bf16.msra.mxu0 0
        %3138 = vmatprep.subr.bf16.mxu0 0
        %3139 = vmatpush1.bf16.msra.mxu0 0
        %3140 = vmatprep.subr.bf16.mxu0 0
        %3141 = vmatpush1.bf16.msra.mxu0 0
        %3142 = vmatprep.subr.bf16.mxu0 0
        %3143 = vmatpush1.bf16.msra.mxu0 0
        %3144 = vmatprep.subr.bf16.mxu0 0
        %3145 = vmatpush1.bf16.msra.mxu0 0
        %3146 = vmatprep.mubr.bf16.mxu0 0
        %3147 = vmatmul.mubr.bf16.gmra.mrb[0].mxu0 %v3099
        %v3148 = vpop.f32.mrb[0].mxu0
        %v3149 = vadd.f32 %v3080, %v3148
        %v3150 = vpop.f32.mrb[0].mxu0
        %v3151 = vpop.f32.mrb[0].mxu0
        %v3152 = vadd.f32 %v3080, %v3151
        %v3153 = vpop.f32.mrb[0].mxu0
        %3154 = vmatprep.mubr.bf16.mxu0 0
        %3155 = vmatmul.mubr.bf16.gmra.mrb[0].mxu0 %v3102
        %v3156 = vpop.f32.mrb[0].mxu0
        %v3157 = vadd.f32 %v3080, %v3156
        %v3158 = vpop.f32.mrb[0].mxu0
        %v3159 = vpop.f32.mrb[0].mxu0
        %v3160 = vadd.f32 %v3080, %v3159
        %v3161 = vpop.f32.mrb[0].mxu0
        %3162 = vmatprep.mubr.bf16.mxu0 0
        %3163 = vmatmul.mubr.bf16.gmra.mrb[0].mxu0 %v3105
        %v3164 = vpop.f32.mrb[0].mxu0
        %v3165 = vadd.f32 %v3080, %v3164
        %v3166 = vpop.f32.mrb[0].mxu0
        %v3167 = vpop.f32.mrb[0].mxu0
        %v3168 = vadd.f32 %v3080, %v3167
        %v3169 = vpop.f32.mrb[0].mxu0
        %3170 = vmatprep.mubr.bf16.mxu0 0
        %3171 = vmatmul.mubr.bf16.gmra.mrb[0].mxu0 %v3108
        %v3172 = vpop.f32.mrb[0].mxu0
        %v3173 = vadd.f32 %v3080, %v3172
        %v3174 = vpop.f32.mrb[0].mxu0
        %v3175 = vpop.f32.mrb[0].mxu0
        %v3176 = vadd.f32 %v3080, %v3175
        %v3177 = vpop.f32.mrb[0].mxu0
        %3178 = vdwg.mxu0
        %v3179 = vmax.f32 %v3149, 0.0
        %v3180 = vmax.f32 %v3152, 0.0
        %v3181 = vmax.f32 %v3157, 0.0
        %v3182 = vmax.f32 %v3160, 0.0
        %v3183 = vmax.f32 %v3165, 0.0
        %v3184 = vmax.f32 %v3168, 0.0
        %v3185 = vmax.f32 %v3173, 0.0
        %v3186 = vmax.f32 %v3176, 0.0
        %3187 = vst.msk [vmem:[%s353] sm:$0xff] %vm3009, %v3179
        %3188 = vst.msk [vmem:[%s353 + $0x8] sm:$0xff] %vm3009, %v3180
        %3189 = vst.msk [vmem:[%s353 + $0x10] sm:$0xff] %vm3009, %v3181
        %3190 = vst.msk [vmem:[%s353 + $0x18] sm:$0xff] %vm3009, %v3182
        %3191 = vst.msk [vmem:[%s353 + $0x20] sm:$0xff] %vm3009, %v3183
        %3192 = vst.msk [vmem:[%s353 + $0x28] sm:$0xff] %vm3009, %v3184
        %3193 = vst.msk [vmem:[%s353 + $0x30] sm:$0xff] %vm3009, %v3185
        %3194 = vst.msk [vmem:[%s353 + $0x38] sm:$0xff] %vm3009, %v3186
        %v3195 = vld [vmem:[%s3] sm:$0xf]
        %v3196 = vld [vmem:[%s3 + $0x4] sm:$0xf]
        %v3197 = vld [vmem:[%s3 + $0x8] sm:$0xf]
        %v3198 = vld [vmem:[%s3 + $0xc] sm:$0xf]
        %v3199 = vld [vmem:[%s3 + $0x10] sm:$0xf]
        %v3200 = vld [vmem:[%s3 + $0x14] sm:$0xf]
        %v3201 = vld [vmem:[%s3 + $0x18] sm:$0xf]
        %v3202 = vld [vmem:[%s3 + $0x1c] sm:$0xf]
        %v3203 = vld [vmem:[%s3 + $0x20] sm:$0xf]
        %v3204 = vld [vmem:[%s4] sm:$0x1]
        %3205 = vst.msk [vmem:[#allocation3] sm:$0xff] %vm3009, 0.0
        %vm3206 = vcmask 58368
        %3207 = vst.msk [vmem:[#allocation3 + $0x8] sm:$0x3] %vm3206, 0.0
        %3208 = vst.msk [vmem:[#allocation3 + $0x10] sm:$0xff] %vm3009, 0.0
        %3209 = vst.msk [vmem:[#allocation3 + $0x18] sm:$0x3] %vm3206, 0.0
        %3210 = vst.msk [vmem:[#allocation3 + $0x20] sm:$0xff] %vm3009, 0.0
        %3211 = vst.msk [vmem:[#allocation3 + $0x28] sm:$0x3] %vm3206, 0.0
        %3212 = vst.msk [vmem:[#allocation3 + $0x30] sm:$0xff] %vm3009, 0.0
        %3213 = vst.msk [vmem:[#allocation3 + $0x38] sm:$0x3] %vm3206, 0.0
        %3214 = vst.msk [vmem:[#allocation3 + $0x40] sm:$0xff] %vm3009, 0.0
        %3215 = vst.msk [vmem:[#allocation3 + $0x48] sm:$0x3] %vm3206, 0.0
        %3216 = vst.msk [vmem:[#allocation3 + $0x50] sm:$0xff] %vm3009, 0.0
        %3217 = vst.msk [vmem:[#allocation3 + $0x58] sm:$0x3] %vm3206, 0.0
        %3218 = vst.msk [vmem:[#allocation3 + $0x60] sm:$0xff] %vm3009, 0.0
        %3219 = vst.msk [vmem:[#allocation3 + $0x68] sm:$0x3] %vm3206, 0.0
        %3220 = vst.msk [vmem:[#allocation3 + $0x70] sm:$0xff] %vm3009, 0.0
        %3221 = vst.msk [vmem:[#allocation3 + $0x78] sm:$0x3] %vm3206, 0.0
        %3222 = vst.msk [vmem:[#allocation3 + $0x80] sm:$0xff] %vm3009, 0.0
        %3223 = vst.msk [vmem:[#allocation3 + $0x88] sm:$0x3] %vm3206, 0.0
        %3224 = vst.msk [vmem:[#allocation3 + $0x90] sm:$0xff] %vm3009, 0.0
        %3225 = vst.msk [vmem:[#allocation3 + $0x98] sm:$0x3] %vm3206, 0.0
        %s3226 = scalar_lea.vmem [#allocation3], 16
        %3227 = vst.msk [vmem:[%s3226 + $0x1] sm:$0xff] %vm3009, %v3179
        %3228 = vst.msk [vmem:[%s3226 + $0x11] sm:$0xff] %vm3009, %v3180
        %3229 = vst.msk [vmem:[%s3226 + $0x21] sm:$0xff] %vm3009, %v3181
        %3230 = vst.msk [vmem:[%s3226 + $0x31] sm:$0xff] %vm3009, %v3182
        %3231 = vst.msk [vmem:[%s3226 + $0x41] sm:$0xff] %vm3009, %v3183
        %3232 = vst.msk [vmem:[%s3226 + $0x51] sm:$0xff] %vm3009, %v3184
        %3233 = vst.msk [vmem:[%s3226 + $0x61] sm:$0xff] %vm3009, %v3185
        %3234 = vst.msk [vmem:[%s3226 + $0x71] sm:$0xff] %vm3009, %v3186
        %v3235 = vld [vmem:[#allocation3] sm:$0xff]
        %v3236 = vld [vmem:[#allocation3 + $0x8] sm:$0x3]
        %v3237 = vld [vmem:[#allocation3 + $0x10] sm:$0xff]
        %v3238 = vld [vmem:[#allocation3 + $0x18] sm:$0x3]
        %v3239 = vld [vmem:[#allocation3 + $0x20] sm:$0xff]
        %v3240 = vld [vmem:[#allocation3 + $0x28] sm:$0x3]
        %v3241 = vld [vmem:[#allocation3 + $0x30] sm:$0xff]
        %v3242 = vld [vmem:[#allocation3 + $0x38] sm:$0x3]
        %v3243 = vld [vmem:[#allocation3 + $0x40] sm:$0xff]
        %v3244 = vld [vmem:[#allocation3 + $0x48] sm:$0x3]
        %v3245 = vld [vmem:[#allocation3 + $0x50] sm:$0xff]
        %v3246 = vld [vmem:[#allocation3 + $0x58] sm:$0x3]
        %v3247 = vld [vmem:[#allocation3 + $0x60] sm:$0xff]
        %v3248 = vld [vmem:[#allocation3 + $0x68] sm:$0x3]
        %v3249 = vld [vmem:[#allocation3 + $0x70] sm:$0xff]
        %v3250 = vld [vmem:[#allocation3 + $0x78] sm:$0x3]
        %v3251 = vld [vmem:[#allocation3 + $0x80] sm:$0xff]
        %v3252 = vld [vmem:[#allocation3 + $0x88] sm:$0x3]
        %v3271 = vcombine.high %v3235, %v3235
        %v3273 = vunpack.c.l.s4 1983009808
        %v3274 = vunpack.c.0.s8 %v3273
        %v3275 = vlaneseq
        %v3276 = vshrl.u32 %v3275, 7
        %v3277 = vsub.s32 %v3274, %v3276
        %v3278 = vrot.slane %v3235, %v3277
        %v3280 = vunpack.c.l.s4 1983009808
        %v3281 = vunpack.c.0.s8 %v3280
        %v3282 = vlaneseq
        %v3283 = vshrl.u32 %v3282, 7
        %v3284 = vsub.s32 %v3281, %v3283
        %v3285 = vrot.slane %v3271, %v3284
        %v3286 = vcombine.high %v3278, %v3278
        %v3287 = vcombine.high %v3285, %v3285
        %v3289 = vunpack.c.l.s4 1983009808
        %v3290 = vunpack.c.0.s8 %v3289
        %v3291 = vlaneseq
        %v3292 = vshrl.u32 %v3291, 7
        %v3293 = vsub.s32 %v3290, %v3292
        %v3294 = vrot.slane %v3236, %v3293
        %v3295 = vcombine.high %v3237, %v3237
        %v3297 = vunpack.c.l.s4 1983009808
        %v3298 = vunpack.c.0.s8 %v3297
        %v3299 = vlaneseq
        %v3300 = vshrl.u32 %v3299, 7
        %v3301 = vsub.s32 %v3298, %v3300
        %v3302 = vrot.slane %v3237, %v3301
        %v3304 = vunpack.c.l.s4 1983009808
        %v3305 = vunpack.c.0.s8 %v3304
        %v3306 = vlaneseq
        %v3307 = vshrl.u32 %v3306, 7
        %v3308 = vsub.s32 %v3305, %v3307
        %v3309 = vrot.slane %v3295, %v3308
        %v3310 = vcombine.high %v3302, %v3302
        %v3311 = vcombine.high %v3309, %v3309
        %v3313 = vunpack.c.l.s4 1983009808
        %v3314 = vunpack.c.0.s8 %v3313
        %v3315 = vlaneseq
        %v3316 = vshrl.u32 %v3315, 7
        %v3317 = vsub.s32 %v3314, %v3316
        %v3318 = vrot.slane %v3238, %v3317
        %v3319 = vcombine.high %v3239, %v3239
        %v3321 = vunpack.c.l.s4 1983009808
        %v3322 = vunpack.c.0.s8 %v3321
        %v3323 = vlaneseq
        %v3324 = vshrl.u32 %v3323, 7
        %v3325 = vsub.s32 %v3322, %v3324
        %v3326 = vrot.slane %v3239, %v3325
        %v3328 = vunpack.c.l.s4 1983009808
        %v3329 = vunpack.c.0.s8 %v3328
        %v3330 = vlaneseq
        %v3331 = vshrl.u32 %v3330, 7
        %v3332 = vsub.s32 %v3329, %v3331
        %v3333 = vrot.slane %v3319, %v3332
        %v3334 = vcombine.high %v3326, %v3326
        %v3335 = vcombine.high %v3333, %v3333
        %v3337 = vunpack.c.l.s4 1983009808
        %v3338 = vunpack.c.0.s8 %v3337
        %v3339 = vlaneseq
        %v3340 = vshrl.u32 %v3339, 7
        %v3341 = vsub.s32 %v3338, %v3340
        %v3342 = vrot.slane %v3240, %v3341
        %v3343 = vcombine.high %v3241, %v3241
        %v3345 = vunpack.c.l.s4 1983009808
        %v3346 = vunpack.c.0.s8 %v3345
        %v3347 = vlaneseq
        %v3348 = vshrl.u32 %v3347, 7
        %v3349 = vsub.s32 %v3346, %v3348
        %v3350 = vrot.slane %v3241, %v3349
        %v3352 = vunpack.c.l.s4 1983009808
        %v3353 = vunpack.c.0.s8 %v3352
        %v3354 = vlaneseq
        %v3355 = vshrl.u32 %v3354, 7
        %v3356 = vsub.s32 %v3353, %v3355
        %v3357 = vrot.slane %v3343, %v3356
        %v3358 = vcombine.high %v3350, %v3350
        %v3359 = vcombine.high %v3357, %v3357
        %v3361 = vunpack.c.l.s4 1983009808
        %v3362 = vunpack.c.0.s8 %v3361
        %v3363 = vlaneseq
        %v3364 = vshrl.u32 %v3363, 7
        %v3365 = vsub.s32 %v3362, %v3364
        %v3366 = vrot.slane %v3242, %v3365
        %v3367 = vcombine.high %v3243, %v3243
        %v3369 = vunpack.c.l.s4 1983009808
        %v3370 = vunpack.c.0.s8 %v3369
        %v3371 = vlaneseq
        %v3372 = vshrl.u32 %v3371, 7
        %v3373 = vsub.s32 %v3370, %v3372
        %v3374 = vrot.slane %v3243, %v3373
        %v3376 = vunpack.c.l.s4 1983009808
        %v3377 = vunpack.c.0.s8 %v3376
        %v3378 = vlaneseq
        %v3379 = vshrl.u32 %v3378, 7
        %v3380 = vsub.s32 %v3377, %v3379
        %v3381 = vrot.slane %v3367, %v3380
        %v3382 = vcombine.high %v3374, %v3374
        %v3383 = vcombine.high %v3381, %v3381
        %v3385 = vunpack.c.l.s4 1983009808
        %v3386 = vunpack.c.0.s8 %v3385
        %v3387 = vlaneseq
        %v3388 = vshrl.u32 %v3387, 7
        %v3389 = vsub.s32 %v3386, %v3388
        %v3390 = vrot.slane %v3244, %v3389
        %v3391 = vcombine.high %v3245, %v3245
        %v3393 = vunpack.c.l.s4 1983009808
        %v3394 = vunpack.c.0.s8 %v3393
        %v3395 = vlaneseq
        %v3396 = vshrl.u32 %v3395, 7
        %v3397 = vsub.s32 %v3394, %v3396
        %v3398 = vrot.slane %v3245, %v3397
        %v3400 = vunpack.c.l.s4 1983009808
        %v3401 = vunpack.c.0.s8 %v3400
        %v3402 = vlaneseq
        %v3403 = vshrl.u32 %v3402, 7
        %v3404 = vsub.s32 %v3401, %v3403
        %v3405 = vrot.slane %v3391, %v3404
        %v3406 = vcombine.high %v3398, %v3398
        %v3407 = vcombine.high %v3405, %v3405
        %v3409 = vunpack.c.l.s4 1983009808
        %v3410 = vunpack.c.0.s8 %v3409
        %v3411 = vlaneseq
        %v3412 = vshrl.u32 %v3411, 7
        %v3413 = vsub.s32 %v3410, %v3412
        %v3414 = vrot.slane %v3246, %v3413
        %v3415 = vcombine.high %v3247, %v3247
        %v3417 = vunpack.c.l.s4 1983009808
        %v3418 = vunpack.c.0.s8 %v3417
        %v3419 = vlaneseq
        %v3420 = vshrl.u32 %v3419, 7
        %v3421 = vsub.s32 %v3418, %v3420
        %v3422 = vrot.slane %v3247, %v3421
        %v3424 = vunpack.c.l.s4 1983009808
        %v3425 = vunpack.c.0.s8 %v3424
        %v3426 = vlaneseq
        %v3427 = vshrl.u32 %v3426, 7
        %v3428 = vsub.s32 %v3425, %v3427
        %v3429 = vrot.slane %v3415, %v3428
        %v3430 = vcombine.high %v3422, %v3422
        %v3431 = vcombine.high %v3429, %v3429
        %v3433 = vunpack.c.l.s4 1983009808
        %v3434 = vunpack.c.0.s8 %v3433
        %v3435 = vlaneseq
        %v3436 = vshrl.u32 %v3435, 7
        %v3437 = vsub.s32 %v3434, %v3436
        %v3438 = vrot.slane %v3248, %v3437
        %v3439 = vcombine.high %v3249, %v3249
        %v3441 = vunpack.c.l.s4 1983009808
        %v3442 = vunpack.c.0.s8 %v3441
        %v3443 = vlaneseq
        %v3444 = vshrl.u32 %v3443, 7
        %v3445 = vsub.s32 %v3442, %v3444
        %v3446 = vrot.slane %v3249, %v3445
        %v3448 = vunpack.c.l.s4 1983009808
        %v3449 = vunpack.c.0.s8 %v3448
        %v3450 = vlaneseq
        %v3451 = vshrl.u32 %v3450, 7
        %v3452 = vsub.s32 %v3449, %v3451
        %v3453 = vrot.slane %v3439, %v3452
        %v3454 = vcombine.high %v3446, %v3446
        %v3455 = vcombine.high %v3453, %v3453
        %v3457 = vunpack.c.l.s4 1983009808
        %v3458 = vunpack.c.0.s8 %v3457
        %v3459 = vlaneseq
        %v3460 = vshrl.u32 %v3459, 7
        %v3461 = vsub.s32 %v3458, %v3460
        %v3462 = vrot.slane %v3250, %v3461
        %v3463 = vcombine.high %v3251, %v3251
        %v3465 = vunpack.c.l.s4 1983009808
        %v3466 = vunpack.c.0.s8 %v3465
        %v3467 = vlaneseq
        %v3468 = vshrl.u32 %v3467, 7
        %v3469 = vsub.s32 %v3466, %v3468
        %v3470 = vrot.slane %v3251, %v3469
        %v3472 = vunpack.c.l.s4 1983009808
        %v3473 = vunpack.c.0.s8 %v3472
        %v3474 = vlaneseq
        %v3475 = vshrl.u32 %v3474, 7
        %v3476 = vsub.s32 %v3473, %v3475
        %v3477 = vrot.slane %v3463, %v3476
        %v3478 = vcombine.high %v3470, %v3470
        %v3479 = vcombine.high %v3477, %v3477
        %v3481 = vunpack.c.l.s4 1983009808
        %v3482 = vunpack.c.0.s8 %v3481
        %v3483 = vlaneseq
        %v3484 = vshrl.u32 %v3483, 7
        %v3485 = vsub.s32 %v3482, %v3484
        %v3486 = vrot.slane %v3252, %v3485
        %v3487 = vlaneseq
        %v3488 = vshrl.u32 %v3487, 7
        %v3489 = vsub.s32 0, %v3488
        %v3490 = vrot.slane %v3278, %v3489
        %v3491 = vlaneseq
        %v3492 = vshrl.u32 %v3491, 7
        %v3493 = vsub.s32 0, %v3492
        %v3494 = vrot.slane %v3286, %v3493
        %v3495 = vlaneseq
        %v3496 = vshrl.u32 %v3495, 7
        %v3497 = vsub.s32 0, %v3496
        %v3498 = vrot.slane %v3285, %v3497
        %v3499 = vlaneseq
        %v3500 = vshrl.u32 %v3499, 7
        %v3501 = vsub.s32 0, %v3500
        %v3502 = vrot.slane %v3287, %v3501
        %v3503 = vlaneseq
        %v3504 = vshrl.u32 %v3503, 7
        %v3505 = vsub.s32 0, %v3504
        %v3506 = vrot.slane %v3326, %v3505
        %v3507 = vlaneseq
        %v3508 = vshrl.u32 %v3507, 7
        %v3509 = vsub.s32 0, %v3508
        %v3510 = vrot.slane %v3334, %v3509
        %v3511 = vlaneseq
        %v3512 = vshrl.u32 %v3511, 7
        %v3513 = vsub.s32 0, %v3512
        %v3514 = vrot.slane %v3333, %v3513
        %v3515 = vlaneseq
        %v3516 = vshrl.u32 %v3515, 7
        %v3517 = vsub.s32 0, %v3516
        %v3518 = vrot.slane %v3335, %v3517
        %v3519 = vlaneseq
        %v3520 = vshrl.u32 %v3519, 7
        %v3521 = vsub.s32 0, %v3520
        %v3522 = vrot.slane %v3374, %v3521
        %v3523 = vlaneseq
        %v3524 = vshrl.u32 %v3523, 7
        %v3525 = vsub.s32 0, %v3524
        %v3526 = vrot.slane %v3382, %v3525
        %v3527 = vlaneseq
        %v3528 = vshrl.u32 %v3527, 7
        %v3529 = vsub.s32 0, %v3528
        %v3530 = vrot.slane %v3381, %v3529
        %v3531 = vlaneseq
        %v3532 = vshrl.u32 %v3531, 7
        %v3533 = vsub.s32 0, %v3532
        %v3534 = vrot.slane %v3383, %v3533
        %v3535 = vlaneseq
        %v3536 = vshrl.u32 %v3535, 7
        %v3537 = vsub.s32 0, %v3536
        %v3538 = vrot.slane %v3422, %v3537
        %v3539 = vlaneseq
        %v3540 = vshrl.u32 %v3539, 7
        %v3541 = vsub.s32 0, %v3540
        %v3542 = vrot.slane %v3430, %v3541
        %v3543 = vlaneseq
        %v3544 = vshrl.u32 %v3543, 7
        %v3545 = vsub.s32 0, %v3544
        %v3546 = vrot.slane %v3429, %v3545
        %v3547 = vlaneseq
        %v3548 = vshrl.u32 %v3547, 7
        %v3549 = vsub.s32 0, %v3548
        %v3550 = vrot.slane %v3431, %v3549
        %v3551 = vsel %vm1537, %v3494, %v3490
        %v3552 = vsel %vm1539, %v3498, %v3551
        %v3553 = vsel %vm1541, %v3502, %v3552
        %v3554 = vsel %vm1537, %v3510, %v3506
        %v3555 = vsel %vm1539, %v3514, %v3554
        %v3556 = vsel %vm1541, %v3518, %v3555
        %v3557 = vsel %vm1537, %v3526, %v3522
        %v3558 = vsel %vm1539, %v3530, %v3557
        %v3559 = vsel %vm1541, %v3534, %v3558
        %v3560 = vsel %vm1537, %v3542, %v3538
        %v3561 = vsel %vm1539, %v3546, %v3560
        %v3562 = vsel %vm1541, %v3550, %v3561
        %v3567 = vlaneseq
        %v3568 = vshrl.u32 %v3567, 7
        %v3569 = vsub.s32 1, %v3568
        %v3570 = vrot.slane %v3278, %v3569
        %v3571 = vlaneseq
        %v3572 = vshrl.u32 %v3571, 7
        %v3573 = vsub.s32 1, %v3572
        %v3574 = vrot.slane %v3286, %v3573
        %v3575 = vlaneseq
        %v3576 = vshrl.u32 %v3575, 7
        %v3577 = vsub.s32 1, %v3576
        %v3578 = vrot.slane %v3285, %v3577
        %v3579 = vlaneseq
        %v3580 = vshrl.u32 %v3579, 7
        %v3581 = vsub.s32 1, %v3580
        %v3582 = vrot.slane %v3287, %v3581
        %v3583 = vlaneseq
        %v3584 = vshrl.u32 %v3583, 7
        %v3585 = vsub.s32 1, %v3584
        %v3586 = vrot.slane %v3326, %v3585
        %v3587 = vlaneseq
        %v3588 = vshrl.u32 %v3587, 7
        %v3589 = vsub.s32 1, %v3588
        %v3590 = vrot.slane %v3334, %v3589
        %v3591 = vlaneseq
        %v3592 = vshrl.u32 %v3591, 7
        %v3593 = vsub.s32 1, %v3592
        %v3594 = vrot.slane %v3333, %v3593
        %v3595 = vlaneseq
        %v3596 = vshrl.u32 %v3595, 7
        %v3597 = vsub.s32 1, %v3596
        %v3598 = vrot.slane %v3335, %v3597
        %v3599 = vlaneseq
        %v3600 = vshrl.u32 %v3599, 7
        %v3601 = vsub.s32 1, %v3600
        %v3602 = vrot.slane %v3374, %v3601
        %v3603 = vlaneseq
        %v3604 = vshrl.u32 %v3603, 7
        %v3605 = vsub.s32 1, %v3604
        %v3606 = vrot.slane %v3382, %v3605
        %v3607 = vlaneseq
        %v3608 = vshrl.u32 %v3607, 7
        %v3609 = vsub.s32 1, %v3608
        %v3610 = vrot.slane %v3381, %v3609
        %v3611 = vlaneseq
        %v3612 = vshrl.u32 %v3611, 7
        %v3613 = vsub.s32 1, %v3612
        %v3614 = vrot.slane %v3383, %v3613
        %v3615 = vlaneseq
        %v3616 = vshrl.u32 %v3615, 7
        %v3617 = vsub.s32 1, %v3616
        %v3618 = vrot.slane %v3422, %v3617
        %v3619 = vlaneseq
        %v3620 = vshrl.u32 %v3619, 7
        %v3621 = vsub.s32 1, %v3620
        %v3622 = vrot.slane %v3430, %v3621
        %v3623 = vlaneseq
        %v3624 = vshrl.u32 %v3623, 7
        %v3625 = vsub.s32 1, %v3624
        %v3626 = vrot.slane %v3429, %v3625
        %v3627 = vlaneseq
        %v3628 = vshrl.u32 %v3627, 7
        %v3629 = vsub.s32 1, %v3628
        %v3630 = vrot.slane %v3431, %v3629
        %v3631 = vsel %vm1537, %v3574, %v3570
        %v3632 = vsel %vm1539, %v3578, %v3631
        %v3633 = vsel %vm1541, %v3582, %v3632
        %v3634 = vsel %vm1537, %v3590, %v3586
        %v3635 = vsel %vm1539, %v3594, %v3634
        %v3636 = vsel %vm1541, %v3598, %v3635
        %v3637 = vsel %vm1537, %v3606, %v3602
        %v3638 = vsel %vm1539, %v3610, %v3637
        %v3639 = vsel %vm1541, %v3614, %v3638
        %v3640 = vsel %vm1537, %v3622, %v3618
        %v3641 = vsel %vm1539, %v3626, %v3640
        %v3642 = vsel %vm1541, %v3630, %v3641
        %3643 = vrot.lane.b32.xlu0 %v3633, 8
        %v3644 = vpop.permute.xlu0 %3643
        %3645 = vrot.lane.b32.xlu0 %v3636, 8
        %v3646 = vpop.permute.xlu0 %3645
        %3647 = vrot.lane.b32.xlu0 %v3639, 8
        %v3648 = vpop.permute.xlu0 %3647
        %3649 = vrot.lane.b32.xlu0 %v3642, 8
        %v3650 = vpop.permute.xlu0 %3649
        %v3655 = vlaneseq
        %v3656 = vshrl.u32 %v3655, 7
        %v3657 = vsub.s32 0, %v3656
        %v3658 = vrot.slane %v3294, %v3657
        %v3659 = vlaneseq
        %v3660 = vshrl.u32 %v3659, 7
        %v3661 = vsub.s32 0, %v3660
        %v3662 = vrot.slane %v3342, %v3661
        %v3663 = vlaneseq
        %v3664 = vshrl.u32 %v3663, 7
        %v3665 = vsub.s32 0, %v3664
        %v3666 = vrot.slane %v3390, %v3665
        %v3667 = vlaneseq
        %v3668 = vshrl.u32 %v3667, 7
        %v3669 = vsub.s32 0, %v3668
        %v3670 = vrot.slane %v3438, %v3669
        %v3671 = vsel %vm1537, %v3498, %v3494
        %v3672 = vsel %vm1539, %v3502, %v3671
        %v3673 = vsel %vm1541, %v3658, %v3672
        %v3674 = vsel %vm1537, %v3514, %v3510
        %v3675 = vsel %vm1539, %v3518, %v3674
        %v3676 = vsel %vm1541, %v3662, %v3675
        %v3677 = vsel %vm1537, %v3530, %v3526
        %v3678 = vsel %vm1539, %v3534, %v3677
        %v3679 = vsel %vm1541, %v3666, %v3678
        %v3680 = vsel %vm1537, %v3546, %v3542
        %v3681 = vsel %vm1539, %v3550, %v3680
        %v3682 = vsel %vm1541, %v3670, %v3681
        %3683 = vrot.lane.b32.xlu0 %v3673, 16
        %v3684 = vpop.permute.xlu0 %3683
        %3685 = vrot.lane.b32.xlu0 %v3676, 16
        %v3686 = vpop.permute.xlu0 %3685
        %3687 = vrot.lane.b32.xlu0 %v3679, 16
        %v3688 = vpop.permute.xlu0 %3687
        %3689 = vrot.lane.b32.xlu0 %v3682, 16
        %v3690 = vpop.permute.xlu0 %3689
        %v3695 = vlaneseq
        %v3696 = vshrl.u32 %v3695, 7
        %v3697 = vsub.s32 0, %v3696
        %v3698 = vrot.slane %v3302, %v3697
        %v3699 = vlaneseq
        %v3700 = vshrl.u32 %v3699, 7
        %v3701 = vsub.s32 0, %v3700
        %v3702 = vrot.slane %v3310, %v3701
        %v3703 = vlaneseq
        %v3704 = vshrl.u32 %v3703, 7
        %v3705 = vsub.s32 0, %v3704
        %v3706 = vrot.slane %v3309, %v3705
        %v3707 = vlaneseq
        %v3708 = vshrl.u32 %v3707, 7
        %v3709 = vsub.s32 0, %v3708
        %v3710 = vrot.slane %v3311, %v3709
        %v3711 = vlaneseq
        %v3712 = vshrl.u32 %v3711, 7
        %v3713 = vsub.s32 0, %v3712
        %v3714 = vrot.slane %v3350, %v3713
        %v3715 = vlaneseq
        %v3716 = vshrl.u32 %v3715, 7
        %v3717 = vsub.s32 0, %v3716
        %v3718 = vrot.slane %v3358, %v3717
        %v3719 = vlaneseq
        %v3720 = vshrl.u32 %v3719, 7
        %v3721 = vsub.s32 0, %v3720
        %v3722 = vrot.slane %v3357, %v3721
        %v3723 = vlaneseq
        %v3724 = vshrl.u32 %v3723, 7
        %v3725 = vsub.s32 0, %v3724
        %v3726 = vrot.slane %v3359, %v3725
        %v3727 = vlaneseq
        %v3728 = vshrl.u32 %v3727, 7
        %v3729 = vsub.s32 0, %v3728
        %v3730 = vrot.slane %v3398, %v3729
        %v3731 = vlaneseq
        %v3732 = vshrl.u32 %v3731, 7
        %v3733 = vsub.s32 0, %v3732
        %v3734 = vrot.slane %v3406, %v3733
        %v3735 = vlaneseq
        %v3736 = vshrl.u32 %v3735, 7
        %v3737 = vsub.s32 0, %v3736
        %v3738 = vrot.slane %v3405, %v3737
        %v3739 = vlaneseq
        %v3740 = vshrl.u32 %v3739, 7
        %v3741 = vsub.s32 0, %v3740
        %v3742 = vrot.slane %v3407, %v3741
        %v3743 = vlaneseq
        %v3744 = vshrl.u32 %v3743, 7
        %v3745 = vsub.s32 0, %v3744
        %v3746 = vrot.slane %v3446, %v3745
        %v3747 = vlaneseq
        %v3748 = vshrl.u32 %v3747, 7
        %v3749 = vsub.s32 0, %v3748
        %v3750 = vrot.slane %v3454, %v3749
        %v3751 = vlaneseq
        %v3752 = vshrl.u32 %v3751, 7
        %v3753 = vsub.s32 0, %v3752
        %v3754 = vrot.slane %v3453, %v3753
        %v3755 = vlaneseq
        %v3756 = vshrl.u32 %v3755, 7
        %v3757 = vsub.s32 0, %v3756
        %v3758 = vrot.slane %v3455, %v3757
        %v3759 = vsel %vm1537, %v3702, %v3698
        %v3760 = vsel %vm1539, %v3706, %v3759
        %v3761 = vsel %vm1541, %v3710, %v3760
        %v3762 = vsel %vm1537, %v3718, %v3714
        %v3763 = vsel %vm1539, %v3722, %v3762
        %v3764 = vsel %vm1541, %v3726, %v3763
        %v3765 = vsel %vm1537, %v3734, %v3730
        %v3766 = vsel %vm1539, %v3738, %v3765
        %v3767 = vsel %vm1541, %v3742, %v3766
        %v3768 = vsel %vm1537, %v3750, %v3746
        %v3769 = vsel %vm1539, %v3754, %v3768
        %v3770 = vsel %vm1541, %v3758, %v3769
        %3771 = vrot.lane.b32.xlu0 %v3761, 24
        %v3772 = vpop.permute.xlu0 %3771
        %3773 = vrot.lane.b32.xlu0 %v3764, 24
        %v3774 = vpop.permute.xlu0 %3773
        %3775 = vrot.lane.b32.xlu0 %v3767, 24
        %v3776 = vpop.permute.xlu0 %3775
        %3777 = vrot.lane.b32.xlu0 %v3770, 24
        %v3778 = vpop.permute.xlu0 %3777
        %v3783 = vlaneseq
        %v3784 = vshrl.u32 %v3783, 7
        %v3785 = vsub.s32 1, %v3784
        %v3786 = vrot.slane %v3302, %v3785
        %v3787 = vlaneseq
        %v3788 = vshrl.u32 %v3787, 7
        %v3789 = vsub.s32 1, %v3788
        %v3790 = vrot.slane %v3310, %v3789
        %v3791 = vlaneseq
        %v3792 = vshrl.u32 %v3791, 7
        %v3793 = vsub.s32 1, %v3792
        %v3794 = vrot.slane %v3309, %v3793
        %v3795 = vlaneseq
        %v3796 = vshrl.u32 %v3795, 7
        %v3797 = vsub.s32 1, %v3796
        %v3798 = vrot.slane %v3311, %v3797
        %v3799 = vlaneseq
        %v3800 = vshrl.u32 %v3799, 7
        %v3801 = vsub.s32 1, %v3800
        %v3802 = vrot.slane %v3350, %v3801
        %v3803 = vlaneseq
        %v3804 = vshrl.u32 %v3803, 7
        %v3805 = vsub.s32 1, %v3804
        %v3806 = vrot.slane %v3358, %v3805
        %v3807 = vlaneseq
        %v3808 = vshrl.u32 %v3807, 7
        %v3809 = vsub.s32 1, %v3808
        %v3810 = vrot.slane %v3357, %v3809
        %v3811 = vlaneseq
        %v3812 = vshrl.u32 %v3811, 7
        %v3813 = vsub.s32 1, %v3812
        %v3814 = vrot.slane %v3359, %v3813
        %v3815 = vlaneseq
        %v3816 = vshrl.u32 %v3815, 7
        %v3817 = vsub.s32 1, %v3816
        %v3818 = vrot.slane %v3398, %v3817
        %v3819 = vlaneseq
        %v3820 = vshrl.u32 %v3819, 7
        %v3821 = vsub.s32 1, %v3820
        %v3822 = vrot.slane %v3406, %v3821
        %v3823 = vlaneseq
        %v3824 = vshrl.u32 %v3823, 7
        %v3825 = vsub.s32 1, %v3824
        %v3826 = vrot.slane %v3405, %v3825
        %v3827 = vlaneseq
        %v3828 = vshrl.u32 %v3827, 7
        %v3829 = vsub.s32 1, %v3828
        %v3830 = vrot.slane %v3407, %v3829
        %v3831 = vlaneseq
        %v3832 = vshrl.u32 %v3831, 7
        %v3833 = vsub.s32 1, %v3832
        %v3834 = vrot.slane %v3446, %v3833
        %v3835 = vlaneseq
        %v3836 = vshrl.u32 %v3835, 7
        %v3837 = vsub.s32 1, %v3836
        %v3838 = vrot.slane %v3454, %v3837
        %v3839 = vlaneseq
        %v3840 = vshrl.u32 %v3839, 7
        %v3841 = vsub.s32 1, %v3840
        %v3842 = vrot.slane %v3453, %v3841
        %v3843 = vlaneseq
        %v3844 = vshrl.u32 %v3843, 7
        %v3845 = vsub.s32 1, %v3844
        %v3846 = vrot.slane %v3455, %v3845
        %v3847 = vsel %vm1537, %v3790, %v3786
        %v3848 = vsel %vm1539, %v3794, %v3847
        %v3849 = vsel %vm1541, %v3798, %v3848
        %v3850 = vsel %vm1537, %v3806, %v3802
        %v3851 = vsel %vm1539, %v3810, %v3850
        %v3852 = vsel %vm1541, %v3814, %v3851
        %v3853 = vsel %vm1537, %v3822, %v3818
        %v3854 = vsel %vm1539, %v3826, %v3853
        %v3855 = vsel %vm1541, %v3830, %v3854
        %v3856 = vsel %vm1537, %v3838, %v3834
        %v3857 = vsel %vm1539, %v3842, %v3856
        %v3858 = vsel %vm1541, %v3846, %v3857
        %3859 = vrot.lane.b32.xlu0 %v3849, 32
        %v3860 = vpop.permute.xlu0 %3859
        %3861 = vrot.lane.b32.xlu0 %v3852, 32
        %v3862 = vpop.permute.xlu0 %3861
        %3863 = vrot.lane.b32.xlu0 %v3855, 32
        %v3864 = vpop.permute.xlu0 %3863
        %3865 = vrot.lane.b32.xlu0 %v3858, 32
        %v3866 = vpop.permute.xlu0 %3865
        %v3871 = vlaneseq
        %v3872 = vshrl.u32 %v3871, 7
        %v3873 = vsub.s32 0, %v3872
        %v3874 = vrot.slane %v3318, %v3873
        %v3875 = vlaneseq
        %v3876 = vshrl.u32 %v3875, 7
        %v3877 = vsub.s32 0, %v3876
        %v3878 = vrot.slane %v3366, %v3877
        %v3879 = vlaneseq
        %v3880 = vshrl.u32 %v3879, 7
        %v3881 = vsub.s32 0, %v3880
        %v3882 = vrot.slane %v3414, %v3881
        %v3883 = vlaneseq
        %v3884 = vshrl.u32 %v3883, 7
        %v3885 = vsub.s32 0, %v3884
        %v3886 = vrot.slane %v3462, %v3885
        %v3887 = vsel %vm1537, %v3706, %v3702
        %v3888 = vsel %vm1539, %v3710, %v3887
        %v3889 = vsel %vm1541, %v3874, %v3888
        %v3890 = vsel %vm1537, %v3722, %v3718
        %v3891 = vsel %vm1539, %v3726, %v3890
        %v3892 = vsel %vm1541, %v3878, %v3891
        %v3893 = vsel %vm1537, %v3738, %v3734
        %v3894 = vsel %vm1539, %v3742, %v3893
        %v3895 = vsel %vm1541, %v3882, %v3894
        %v3896 = vsel %vm1537, %v3754, %v3750
        %v3897 = vsel %vm1539, %v3758, %v3896
        %v3898 = vsel %vm1541, %v3886, %v3897
        %3899 = vrot.lane.b32.xlu0 %v3889, 40
        %v3900 = vpop.permute.xlu0 %3899
        %3901 = vrot.lane.b32.xlu0 %v3892, 40
        %v3902 = vpop.permute.xlu0 %3901
        %3903 = vrot.lane.b32.xlu0 %v3895, 40
        %v3904 = vpop.permute.xlu0 %3903
        %3905 = vrot.lane.b32.xlu0 %v3898, 40
        %v3906 = vpop.permute.xlu0 %3905
        %v3911 = vlaneseq
        %v3912 = vshrl.u32 %v3911, 7
        %v3913 = vsub.s32 0, %v3912
        %v3914 = vrot.slane %v3470, %v3913
        %v3915 = vlaneseq
        %v3916 = vshrl.u32 %v3915, 7
        %v3917 = vsub.s32 0, %v3916
        %v3918 = vrot.slane %v3478, %v3917
        %v3919 = vlaneseq
        %v3920 = vshrl.u32 %v3919, 7
        %v3921 = vsub.s32 0, %v3920
        %v3922 = vrot.slane %v3477, %v3921
        %v3923 = vlaneseq
        %v3924 = vshrl.u32 %v3923, 7
        %v3925 = vsub.s32 0, %v3924
        %v3926 = vrot.slane %v3479, %v3925
        %v3927 = vsel %vm1537, %v3918, %v3914
        %v3928 = vsel %vm1539, %v3922, %v3927
        %v3929 = vsel %vm1541, %v3926, %v3928
        %3930 = vrot.lane.b32.xlu0 %v3556, 48
        %v3931 = vpop.permute.xlu0 %3930
        %3932 = vrot.lane.b32.xlu0 %v3559, 48
        %v3933 = vpop.permute.xlu0 %3932
        %3934 = vrot.lane.b32.xlu0 %v3562, 48
        %v3935 = vpop.permute.xlu0 %3934
        %3936 = vrot.lane.b32.xlu0 %v3929, 48
        %v3937 = vpop.permute.xlu0 %3936
        %v3942 = vlaneseq
        %v3943 = vshrl.u32 %v3942, 7
        %v3944 = vsub.s32 1, %v3943
        %v3945 = vrot.slane %v3470, %v3944
        %v3946 = vlaneseq
        %v3947 = vshrl.u32 %v3946, 7
        %v3948 = vsub.s32 1, %v3947
        %v3949 = vrot.slane %v3478, %v3948
        %v3950 = vlaneseq
        %v3951 = vshrl.u32 %v3950, 7
        %v3952 = vsub.s32 1, %v3951
        %v3953 = vrot.slane %v3477, %v3952
        %v3954 = vlaneseq
        %v3955 = vshrl.u32 %v3954, 7
        %v3956 = vsub.s32 1, %v3955
        %v3957 = vrot.slane %v3479, %v3956
        %v3958 = vsel %vm1537, %v3949, %v3945
        %v3959 = vsel %vm1539, %v3953, %v3958
        %v3960 = vsel %vm1541, %v3957, %v3959
        %3961 = vrot.lane.b32.xlu0 %v3636, 56
        %v3962 = vpop.permute.xlu0 %3961
        %3963 = vrot.lane.b32.xlu0 %v3639, 56
        %v3964 = vpop.permute.xlu0 %3963
        %3965 = vrot.lane.b32.xlu0 %v3642, 56
        %v3966 = vpop.permute.xlu0 %3965
        %3967 = vrot.lane.b32.xlu0 %v3960, 56
        %v3968 = vpop.permute.xlu0 %3967
        %v3973 = vlaneseq
        %v3974 = vshrl.u32 %v3973, 7
        %v3975 = vsub.s32 0, %v3974
        %v3976 = vrot.slane %v3486, %v3975
        %v3977 = vsel %vm1537, %v3922, %v3918
        %v3978 = vsel %vm1539, %v3926, %v3977
        %v3979 = vsel %vm1541, %v3976, %v3978
        %3980 = vrot.lane.b32.xlu0 %v3676, 64
        %v3981 = vpop.permute.xlu0 %3980
        %3982 = vrot.lane.b32.xlu0 %v3679, 64
        %v3983 = vpop.permute.xlu0 %3982
        %3984 = vrot.lane.b32.xlu0 %v3682, 64
        %v3985 = vpop.permute.xlu0 %3984
        %3986 = vrot.lane.b32.xlu0 %v3979, 64
        %v3987 = vpop.permute.xlu0 %3986
        %v3992 = vsel %vm3009, %v3553, %v3644
        %v3993 = vsel %vm3009, %v3556, %v3646
        %v3994 = vsel %vm3009, %v3559, %v3648
        %v3995 = vsel %vm3009, %v3562, %v3650
        %v3996 = vsel %vm3027, %v3992, %v3684
        %v3997 = vsel %vm3027, %v3993, %v3686
        %v3998 = vsel %vm3027, %v3994, %v3688
        %v3999 = vsel %vm3027, %v3995, %v3690
        %v4000 = vsel %vm3045, %v3996, %v3772
        %v4001 = vsel %vm3045, %v3997, %v3774
        %v4002 = vsel %vm3045, %v3998, %v3776
        %v4003 = vsel %vm3045, %v3999, %v3778
        %v4004 = vsel %vm3063, %v4000, %v3860
        %v4005 = vsel %vm3063, %v4001, %v3862
        %v4006 = vsel %vm3063, %v4002, %v3864
        %v4007 = vsel %vm3063, %v4003, %v3866
        %vm4008 = vcmask 326656
        %v4009 = vsel %vm4008, %v4004, %v3900
        %v4010 = vsel %vm4008, %v4005, %v3902
        %v4011 = vsel %vm4008, %v4006, %v3904
        %v4012 = vsel %vm4008, %v4007, %v3906
        %vm4013 = vcmask 392192
        %v4014 = vsel %vm4013, %v4009, %v3931
        %v4015 = vsel %vm4013, %v4010, %v3933
        %v4016 = vsel %vm4013, %v4011, %v3935
        %v4017 = vsel %vm4013, %v4012, %v3937
        %vm4018 = vcmask 457728
        %v4019 = vsel %vm4018, %v4014, %v3962
        %v4020 = vsel %vm4018, %v4015, %v3964
        %v4021 = vsel %vm4018, %v4016, %v3966
        %v4022 = vsel %vm4018, %v4017, %v3968
        %vm4023 = vcmask 523264
        %v4024 = vsel %vm4023, %v4019, %v3981
        %v4025 = vsel %vm4023, %v4020, %v3983
        %v4026 = vsel %vm4023, %v4021, %v3985
        %v4027 = vsel %vm4023, %v4022, %v3987
        %v4032 = vcombine.low %v4024, %v4025
        %v4033 = vcombine.low %v4026, %v4027
        %v4036 = vpack.c.bf16 %v4033, %v4032
        %v4038 = vlaneseq
        %v4039 = vshrl.u32 %v4038, 7
        %v4040 = vsub.s32 0, %v4039
        %v4041 = vrot.slane %v3204, %v4040
        %v4052 = vunpack.c.l.b16 %v3195
        %v4053 = vunpack.c.l.b16 %v3196
        %v4054 = vunpack.c.l.b16 %v3197
        %v4055 = vunpack.c.l.b16 %v3198
        %v4056 = vunpack.c.l.b16 %v3199
        %v4057 = vunpack.c.l.b16 %v3200
        %v4058 = vunpack.c.l.b16 %v3201
        %v4059 = vunpack.c.l.b16 %v3202
        %v4060 = vunpack.c.l.b16 %v3203
        %v4061 = vpack.c.b16 %v4053, %v4052
        %v4062 = vpack.c.b16 %v4055, %v4054
        %v4063 = vpack.c.b16 %v4057, %v4056
        %v4064 = vpack.c.b16 %v4059, %v4058
        %v4065 = vpack.c.b16 %v4060, %v4060
        %vm4070 = vcmask 588800
        %v4072 = vsel %vm4070, %v4036, 0
        %vm4074 = vcmask 1043456
        %v4076 = vsel %vm4074, %v4065, 0
        %4078 = vmatprep.subr.bf16.mxu0 0
        %4079 = vmatpush1.bf16.msra.mxu0 %v4061
        %4080 = vmatprep.subr.bf16.mxu0 0
        %4081 = vmatpush1.bf16.msra.mxu0 %v4062
        %4082 = vmatprep.subr.bf16.mxu0 0
        %4083 = vmatpush1.bf16.msra.mxu0 %v4063
        %4084 = vmatprep.subr.bf16.mxu0 0
        %4085 = vmatpush1.bf16.msra.mxu0 %v4064
        %4086 = vmatprep.subr.bf16.mxu0 0
        %4087 = vmatpush1.bf16.msra.mxu0 %v4076
        %4088 = vmatprep.subr.bf16.mxu0 0
        %4089 = vmatpush1.bf16.msra.mxu0 0
        %4090 = vmatprep.subr.bf16.mxu0 0
        %4091 = vmatpush1.bf16.msra.mxu0 0
        %4092 = vmatprep.subr.bf16.mxu0 0
        %4093 = vmatpush1.bf16.msra.mxu0 0
        %4094 = vmatprep.subr.bf16.mxu0 0
        %4095 = vmatpush1.bf16.msra.mxu0 0
        %4096 = vmatprep.subr.bf16.mxu0 0
        %4097 = vmatpush1.bf16.msra.mxu0 0
        %4098 = vmatprep.subr.bf16.mxu0 0
        %4099 = vmatpush1.bf16.msra.mxu0 0
        %4100 = vmatprep.subr.bf16.mxu0 0
        %4101 = vmatpush1.bf16.msra.mxu0 0
        %4102 = vmatprep.subr.bf16.mxu0 0
        %4103 = vmatpush1.bf16.msra.mxu0 0
        %4104 = vmatprep.subr.bf16.mxu0 0
        %4105 = vmatpush1.bf16.msra.mxu0 0
        %4106 = vmatprep.subr.bf16.mxu0 0
        %4107 = vmatpush1.bf16.msra.mxu0 0
        %4108 = vmatprep.subr.bf16.mxu0 0
        %4109 = vmatpush1.bf16.msra.mxu0 0
        %4110 = vmatprep.mubr.bf16.mxu0 0
        %4111 = vmatmul.mubr.bf16.gmra.mrb[0].mxu0 %v4072
        %v4112 = vpop.f32.mrb[0].mxu0
        %v4113 = vadd.f32 %v4041, %v4112
        %v4114 = vpop.f32.mrb[0].mxu0
        %v4115 = vpop.f32.mrb[0].mxu0
        %v4116 = vadd.f32 %v4041, %v4115
        %v4117 = vpop.f32.mrb[0].mxu0
        %4118 = vdwg.mxu0
        %v4119 = vmax.f32 %v4113, 0.0
        %v4120 = vmax.f32 %v4116, 0.0
        %4121 = vst.msk [vmem:[%s336] sm:$0xff] %vm3027, %v4119
        %4122 = vst.msk [vmem:[%s336 + $0x8] sm:$0xff] %vm3027, %v4120
        %v4125 = vcombine.high %v4119, %v4119
        %v4126 = vcombine.high %v4120, %v4120
        %v4129 = vld [vmem:[%s5] sm:$0xf]
        %v4130 = vld [vmem:[%s5 + $0x4] sm:$0xf]
        %v4131 = vld [vmem:[%s5 + $0x8] sm:$0xf]
        %v4132 = vld [vmem:[%s5 + $0xc] sm:$0xf]
        %v4133 = vld [vmem:[%s5 + $0x10] sm:$0xf]
        %v4134 = vld [vmem:[%s5 + $0x14] sm:$0xf]
        %v4135 = vld [vmem:[%s5 + $0x18] sm:$0xf]
        %v4136 = vld [vmem:[%s5 + $0x1c] sm:$0xf]
        %v4137 = vld [vmem:[%s5 + $0x20] sm:$0xf]
        %v4138 = vld [vmem:[%s5 + $0x24] sm:$0xf]
        %v4139 = vld [vmem:[%s5 + $0x28] sm:$0xf]
        %v4140 = vld [vmem:[%s5 + $0x2c] sm:$0xf]
        %v4141 = vld [vmem:[%s5 + $0x30] sm:$0xf]
        %v4142 = vld [vmem:[%s5 + $0x34] sm:$0xf]
        %v4143 = vld [vmem:[%s5 + $0x38] sm:$0xf]
        %v4144 = vld [vmem:[%s5 + $0x3c] sm:$0xf]
        %v4145 = vld [vmem:[%s5 + $0x40] sm:$0xf]
        %v4146 = vld [vmem:[%s5 + $0x44] sm:$0xf]
        %v4147 = vld [vmem:[%s6] sm:$0x1]
        %vm4148 = vcmask 128000
        %4149 = vst.msk [vmem:[#allocation4] sm:$0x3f] %vm4148, 0.0
        %4150 = vst.msk [vmem:[#allocation4 + $0x8] sm:$0x3f] %vm4148, 0.0
        %4151 = vst.msk [vmem:[#allocation4 + $0x10] sm:$0x3f] %vm4148, 0.0
        %4152 = vst.msk [vmem:[#allocation4 + $0x18] sm:$0x3f] %vm4148, 0.0
        %4153 = vst.msk [vmem:[#allocation4 + $0x20] sm:$0x3f] %vm4148, 0.0
        %4154 = vst.msk [vmem:[#allocation4 + $0x28] sm:$0x3f] %vm4148, 0.0
        %s4155 = scalar_lea.vmem [#allocation4], 8
        %vm4156 = vcmask 125952
        %4157 = vst.msk [vmem:[%s4155 + $0x1] sm:$0xf] %vm4156, %v4119
        %4158 = vst.msk [vmem:[%s4155 + $0x9] sm:$0xf] %vm4156, %v4125
        %4159 = vst.msk [vmem:[%s4155 + $0x11] sm:$0xf] %vm4156, %v4120
        %4160 = vst.msk [vmem:[%s4155 + $0x19] sm:$0xf] %vm4156, %v4126
        %v4161 = vld [vmem:[#allocation4] sm:$0x3f]
        %v4162 = vld [vmem:[#allocation4 + $0x8] sm:$0x3f]
        %v4163 = vld [vmem:[#allocation4 + $0x10] sm:$0x3f]
        %v4164 = vld [vmem:[#allocation4 + $0x18] sm:$0x3f]
        %v4165 = vld [vmem:[#allocation4 + $0x20] sm:$0x3f]
        %v4171 = vcombine.high %v4161, %v4161
        %v4173 = vunpack.c.l.s4 1983009808
        %v4174 = vunpack.c.0.s8 %v4173
        %v4175 = vlaneseq
        %v4176 = vshrl.u32 %v4175, 7
        %v4177 = vsub.s32 %v4174, %v4176
        %v4178 = vrot.slane %v4161, %v4177
        %v4180 = vunpack.c.l.s4 1983009808
        %v4181 = vunpack.c.0.s8 %v4180
        %v4182 = vlaneseq
        %v4183 = vshrl.u32 %v4182, 7
        %v4184 = vsub.s32 %v4181, %v4183
        %v4185 = vrot.slane %v4171, %v4184
        %v4186 = vcombine.high %v4178, %v4178
        %v4187 = vcombine.high %v4162, %v4162
        %v4189 = vunpack.c.l.s4 1983009808
        %v4190 = vunpack.c.0.s8 %v4189
        %v4191 = vlaneseq
        %v4192 = vshrl.u32 %v4191, 7
        %v4193 = vsub.s32 %v4190, %v4192
        %v4194 = vrot.slane %v4162, %v4193
        %v4196 = vunpack.c.l.s4 1983009808
        %v4197 = vunpack.c.0.s8 %v4196
        %v4198 = vlaneseq
        %v4199 = vshrl.u32 %v4198, 7
        %v4200 = vsub.s32 %v4197, %v4199
        %v4201 = vrot.slane %v4187, %v4200
        %v4202 = vcombine.high %v4194, %v4194
        %v4203 = vcombine.high %v4163, %v4163
        %v4205 = vunpack.c.l.s4 1983009808
        %v4206 = vunpack.c.0.s8 %v4205
        %v4207 = vlaneseq
        %v4208 = vshrl.u32 %v4207, 7
        %v4209 = vsub.s32 %v4206, %v4208
        %v4210 = vrot.slane %v4163, %v4209
        %v4212 = vunpack.c.l.s4 1983009808
        %v4213 = vunpack.c.0.s8 %v4212
        %v4214 = vlaneseq
        %v4215 = vshrl.u32 %v4214, 7
        %v4216 = vsub.s32 %v4213, %v4215
        %v4217 = vrot.slane %v4203, %v4216
        %v4218 = vcombine.high %v4210, %v4210
        %v4219 = vcombine.high %v4164, %v4164
        %v4221 = vunpack.c.l.s4 1983009808
        %v4222 = vunpack.c.0.s8 %v4221
        %v4223 = vlaneseq
        %v4224 = vshrl.u32 %v4223, 7
        %v4225 = vsub.s32 %v4222, %v4224
        %v4226 = vrot.slane %v4164, %v4225
        %v4228 = vunpack.c.l.s4 1983009808
        %v4229 = vunpack.c.0.s8 %v4228
        %v4230 = vlaneseq
        %v4231 = vshrl.u32 %v4230, 7
        %v4232 = vsub.s32 %v4229, %v4231
        %v4233 = vrot.slane %v4219, %v4232
        %v4234 = vcombine.high %v4226, %v4226
        %v4235 = vcombine.high %v4165, %v4165
        %v4237 = vunpack.c.l.s4 1983009808
        %v4238 = vunpack.c.0.s8 %v4237
        %v4239 = vlaneseq
        %v4240 = vshrl.u32 %v4239, 7
        %v4241 = vsub.s32 %v4238, %v4240
        %v4242 = vrot.slane %v4165, %v4241
        %v4244 = vunpack.c.l.s4 1983009808
        %v4245 = vunpack.c.0.s8 %v4244
        %v4246 = vlaneseq
        %v4247 = vshrl.u32 %v4246, 7
        %v4248 = vsub.s32 %v4245, %v4247
        %v4249 = vrot.slane %v4235, %v4248
        %v4250 = vcombine.high %v4242, %v4242
        %v4251 = vlaneseq
        %v4252 = vshrl.u32 %v4251, 7
        %v4253 = vsub.s32 0, %v4252
        %v4254 = vrot.slane %v4178, %v4253
        %v4255 = vlaneseq
        %v4256 = vshrl.u32 %v4255, 7
        %v4257 = vsub.s32 0, %v4256
        %v4258 = vrot.slane %v4186, %v4257
        %v4259 = vlaneseq
        %v4260 = vshrl.u32 %v4259, 7
        %v4261 = vsub.s32 0, %v4260
        %v4262 = vrot.slane %v4210, %v4261
        %v4263 = vlaneseq
        %v4264 = vshrl.u32 %v4263, 7
        %v4265 = vsub.s32 0, %v4264
        %v4266 = vrot.slane %v4218, %v4265
        %v4267 = vsel %vm1537, %v4258, %v4254
        %v4268 = vsel %vm1537, %v4266, %v4262
        %v4271 = vlaneseq
        %v4272 = vshrl.u32 %v4271, 7
        %v4273 = vsub.s32 1, %v4272
        %v4274 = vrot.slane %v4178, %v4273
        %v4275 = vlaneseq
        %v4276 = vshrl.u32 %v4275, 7
        %v4277 = vsub.s32 1, %v4276
        %v4278 = vrot.slane %v4186, %v4277
        %v4279 = vlaneseq
        %v4280 = vshrl.u32 %v4279, 7
        %v4281 = vsub.s32 1, %v4280
        %v4282 = vrot.slane %v4210, %v4281
        %v4283 = vlaneseq
        %v4284 = vshrl.u32 %v4283, 7
        %v4285 = vsub.s32 1, %v4284
        %v4286 = vrot.slane %v4218, %v4285
        %v4287 = vsel %vm1537, %v4278, %v4274
        %v4288 = vsel %vm1537, %v4286, %v4282
        %4289 = vrot.lane.b32.xlu0 %v4287, 16
        %v4290 = vpop.permute.xlu0 %4289
        %4291 = vrot.lane.b32.xlu0 %v4288, 16
        %v4292 = vpop.permute.xlu0 %4291
        %v4295 = vlaneseq
        %v4296 = vshrl.u32 %v4295, 7
        %v4297 = vsub.s32 0, %v4296
        %v4298 = vrot.slane %v4185, %v4297
        %v4299 = vlaneseq
        %v4300 = vshrl.u32 %v4299, 7
        %v4301 = vsub.s32 0, %v4300
        %v4302 = vrot.slane %v4217, %v4301
        %v4303 = vsel %vm1537, %v4298, %v4258
        %v4304 = vsel %vm1537, %v4302, %v4266
        %4305 = vrot.lane.b32.xlu0 %v4303, 32
        %v4306 = vpop.permute.xlu0 %4305
        %4307 = vrot.lane.b32.xlu0 %v4304, 32
        %v4308 = vpop.permute.xlu0 %4307
        %v4311 = vlaneseq
        %v4312 = vshrl.u32 %v4311, 7
        %v4313 = vsub.s32 0, %v4312
        %v4314 = vrot.slane %v4194, %v4313
        %v4315 = vlaneseq
        %v4316 = vshrl.u32 %v4315, 7
        %v4317 = vsub.s32 0, %v4316
        %v4318 = vrot.slane %v4202, %v4317
        %v4319 = vlaneseq
        %v4320 = vshrl.u32 %v4319, 7
        %v4321 = vsub.s32 0, %v4320
        %v4322 = vrot.slane %v4226, %v4321
        %v4323 = vlaneseq
        %v4324 = vshrl.u32 %v4323, 7
        %v4325 = vsub.s32 0, %v4324
        %v4326 = vrot.slane %v4234, %v4325
        %v4327 = vsel %vm1537, %v4318, %v4314
        %v4328 = vsel %vm1537, %v4326, %v4322
        %4329 = vrot.lane.b32.xlu0 %v4327, 48
        %v4330 = vpop.permute.xlu0 %4329
        %4331 = vrot.lane.b32.xlu0 %v4328, 48
        %v4332 = vpop.permute.xlu0 %4331
        %v4335 = vlaneseq
        %v4336 = vshrl.u32 %v4335, 7
        %v4337 = vsub.s32 1, %v4336
        %v4338 = vrot.slane %v4194, %v4337
        %v4339 = vlaneseq
        %v4340 = vshrl.u32 %v4339, 7
        %v4341 = vsub.s32 1, %v4340
        %v4342 = vrot.slane %v4202, %v4341
        %v4343 = vlaneseq
        %v4344 = vshrl.u32 %v4343, 7
        %v4345 = vsub.s32 1, %v4344
        %v4346 = vrot.slane %v4226, %v4345
        %v4347 = vlaneseq
        %v4348 = vshrl.u32 %v4347, 7
        %v4349 = vsub.s32 1, %v4348
        %v4350 = vrot.slane %v4234, %v4349
        %v4351 = vsel %vm1537, %v4342, %v4338
        %v4352 = vsel %vm1537, %v4350, %v4346
        %4353 = vrot.lane.b32.xlu0 %v4351, 64
        %v4354 = vpop.permute.xlu0 %4353
        %4355 = vrot.lane.b32.xlu0 %v4352, 64
        %v4356 = vpop.permute.xlu0 %4355
        %v4359 = vlaneseq
        %v4360 = vshrl.u32 %v4359, 7
        %v4361 = vsub.s32 0, %v4360
        %v4362 = vrot.slane %v4201, %v4361
        %v4363 = vlaneseq
        %v4364 = vshrl.u32 %v4363, 7
        %v4365 = vsub.s32 0, %v4364
        %v4366 = vrot.slane %v4233, %v4365
        %v4367 = vsel %vm1537, %v4362, %v4318
        %v4368 = vsel %vm1537, %v4366, %v4326
        %4369 = vrot.lane.b32.xlu0 %v4367, 80
        %v4370 = vpop.permute.xlu0 %4369
        %4371 = vrot.lane.b32.xlu0 %v4368, 80
        %v4372 = vpop.permute.xlu0 %4371
        %v4375 = vlaneseq
        %v4376 = vshrl.u32 %v4375, 7
        %v4377 = vsub.s32 0, %v4376
        %v4378 = vrot.slane %v4242, %v4377
        %v4379 = vlaneseq
        %v4380 = vshrl.u32 %v4379, 7
        %v4381 = vsub.s32 0, %v4380
        %v4382 = vrot.slane %v4250, %v4381
        %v4383 = vsel %vm1537, %v4382, %v4378
        %4384 = vrot.lane.b32.xlu0 %v4268, 96
        %v4385 = vpop.permute.xlu0 %4384
        %4386 = vrot.lane.b32.xlu0 %v4383, 96
        %v4387 = vpop.permute.xlu0 %4386
        %v4390 = vlaneseq
        %v4391 = vshrl.u32 %v4390, 7
        %v4392 = vsub.s32 1, %v4391
        %v4393 = vrot.slane %v4242, %v4392
        %v4394 = vlaneseq
        %v4395 = vshrl.u32 %v4394, 7
        %v4396 = vsub.s32 1, %v4395
        %v4397 = vrot.slane %v4250, %v4396
        %v4398 = vsel %vm1537, %v4397, %v4393
        %4399 = vrot.lane.b32.xlu0 %v4288, 112
        %v4400 = vpop.permute.xlu0 %4399
        %4401 = vrot.lane.b32.xlu0 %v4398, 112
        %v4402 = vpop.permute.xlu0 %4401
        %v4405 = vlaneseq
        %v4406 = vshrl.u32 %v4405, 7
        %v4407 = vsub.s32 0, %v4406
        %v4408 = vrot.slane %v4249, %v4407
        %v4409 = vsel %vm1537, %v4408, %v4382
        %v4410 = vsel %vm3027, %v4267, %v4290
        %v4411 = vsel %vm3027, %v4268, %v4292
        %v4412 = vsel %vm3063, %v4410, %v4306
        %v4413 = vsel %vm3063, %v4411, %v4308
        %v4414 = vsel %vm4013, %v4412, %v4330
        %v4415 = vsel %vm4013, %v4413, %v4332
        %v4416 = vsel %vm4023, %v4414, %v4354
        %v4417 = vsel %vm4023, %v4415, %v4356
        %vm4418 = vcmask 654336
        %v4419 = vsel %vm4418, %v4416, %v4370
        %v4420 = vsel %vm4418, %v4417, %v4372
        %vm4421 = vcmask 785408
        %v4422 = vsel %vm4421, %v4419, %v4385
        %v4423 = vsel %vm4421, %v4420, %v4387
        %vm4424 = vcmask 916480
        %v4425 = vsel %vm4424, %v4422, %v4400
        %v4426 = vsel %vm4424, %v4423, %v4402
        %v4429 = vcombine.low %v4425, %v4304
        %v4431 = vunpack.c.l.s4 1983009808
        %v4432 = vunpack.c.0.s8 %v4431
        %v4433 = vlaneseq
        %v4434 = vshrl.u32 %v4433, 7
        %v4435 = vsub.s32 %v4432, %v4434
        %v4436 = vrot.slane %v4429, %v4435
        %v4437 = vcombine.low %v4426, %v4409
        %v4439 = vunpack.c.l.s4 1983009808
        %v4440 = vunpack.c.0.s8 %v4439
        %v4441 = vlaneseq
        %v4442 = vshrl.u32 %v4441, 7
        %v4443 = vsub.s32 %v4440, %v4442
        %v4444 = vrot.slane %v4437, %v4443
        %v4445 = vcombine.low %v4436, %v4444
        %v4447 = vunpack.c.l.s4 1983009808
        %v4448 = vunpack.c.0.s8 %v4447
        %v4449 = vlaneseq
        %v4450 = vshrl.u32 %v4449, 7
        %v4451 = vsub.s32 %v4448, %v4450
        %v4452 = vrot.slane %v4445, %v4451
        %v4453 = vcombine.high %v4452, %v4452
        %v4456 = vpack.c.bf16 %v4452, %v4452
        %v4457 = vpack.c.bf16 %v4453, %v4453
        %v4459 = vlaneseq
        %v4460 = vshrl.u32 %v4459, 7
        %v4461 = vsub.s32 0, %v4460
        %v4462 = vrot.slane %v4147, %v4461
        %v4482 = vunpack.c.l.b16 %v4129
        %v4483 = vunpack.c.l.b16 %v4130
        %v4484 = vunpack.c.l.b16 %v4131
        %v4485 = vunpack.c.l.b16 %v4132
        %v4486 = vunpack.c.l.b16 %v4133
        %v4487 = vunpack.c.l.b16 %v4134
        %v4488 = vunpack.c.l.b16 %v4135
        %v4489 = vunpack.c.l.b16 %v4136
        %v4490 = vunpack.c.l.b16 %v4137
        %v4491 = vunpack.c.l.b16 %v4138
        %v4492 = vunpack.c.l.b16 %v4139
        %v4493 = vunpack.c.l.b16 %v4140
        %v4494 = vunpack.c.l.b16 %v4141
        %v4495 = vunpack.c.l.b16 %v4142
        %v4496 = vunpack.c.l.b16 %v4143
        %v4497 = vunpack.c.l.b16 %v4144
        %v4498 = vunpack.c.l.b16 %v4145
        %v4499 = vunpack.c.l.b16 %v4146
        %v4500 = vpack.c.b16 %v4483, %v4482
        %v4501 = vpack.c.b16 %v4485, %v4484
        %v4502 = vpack.c.b16 %v4487, %v4486
        %v4503 = vpack.c.b16 %v4489, %v4488
        %v4504 = vpack.c.b16 %v4491, %v4490
        %v4505 = vpack.c.b16 %v4493, %v4492
        %v4506 = vpack.c.b16 %v4495, %v4494
        %v4507 = vpack.c.b16 %v4497, %v4496
        %v4508 = vpack.c.b16 %v4499, %v4498
        %v4519 = vsel %vm3027, %v4457, 0
        %4521 = vmatprep.subr.bf16.mxu0 0
        %4522 = vmatpush1.bf16.msra.mxu0 %v4500
        %4523 = vmatprep.subr.bf16.mxu0 0
        %4524 = vmatpush1.bf16.msra.mxu0 %v4501
        %4525 = vmatprep.subr.bf16.mxu0 0
        %4526 = vmatpush1.bf16.msra.mxu0 %v4502
        %4527 = vmatprep.subr.bf16.mxu0 0
        %4528 = vmatpush1.bf16.msra.mxu0 %v4503
        %4529 = vmatprep.subr.bf16.mxu0 0
        %4530 = vmatpush1.bf16.msra.mxu0 %v4504
        %4531 = vmatprep.subr.bf16.mxu0 0
        %4532 = vmatpush1.bf16.msra.mxu0 %v4505
        %4533 = vmatprep.subr.bf16.mxu0 0
        %4534 = vmatpush1.bf16.msra.mxu0 %v4506
        %4535 = vmatprep.subr.bf16.mxu0 0
        %4536 = vmatpush1.bf16.msra.mxu0 %v4507
        %4537 = vmatprep.subr.bf16.mxu0 0
        %4538 = vmatpush1.bf16.msra.mxu0 %v4508
        %4539 = vmatprep.subr.bf16.mxu0 0
        %4540 = vmatpush1.bf16.msra.mxu0 0
        %4541 = vmatprep.subr.bf16.mxu0 0
        %4542 = vmatpush1.bf16.msra.mxu0 0
        %4543 = vmatprep.subr.bf16.mxu0 0
        %4544 = vmatpush1.bf16.msra.mxu0 0
        %4545 = vmatprep.subr.bf16.mxu0 0
        %4546 = vmatpush1.bf16.msra.mxu0 0
        %4547 = vmatprep.subr.bf16.mxu0 0
        %4548 = vmatpush1.bf16.msra.mxu0 0
        %4549 = vmatprep.subr.bf16.mxu0 0
        %4550 = vmatpush1.bf16.msra.mxu0 0
        %4551 = vmatprep.subr.bf16.mxu0 0
        %4552 = vmatpush1.bf16.msra.mxu0 0
        %4553 = vmatprep.mubr.bf16.mxu0 %v4519
        %4554 = vmatmul.mubr.bf16.gmra.mrb[0].mxu0 %v4456
        %v4555 = vpop.f32.mrb[0].mxu0
        %v4556 = vadd.f32 %v4462, %v4555
        %v4557 = vpop.f32.mrb[0].mxu0
        %v4558 = vpop.f32.mrb[0].mxu0
        %v4559 = vpop.f32.mrb[0].mxu0
        %4560 = vdwg.mxu0
        %v4561 = vmax.f32 %v4556, 0.0
        %vm4562 = vcmask 257024
        %4563 = vst.msk [vmem:[%s343] sm:$0xf] %vm4562, %v4561
        %p4564 = scmp.lt.s32.totalorder %s27, 1
        %s4565 = scalar_select %p4564, %s27, 1
        %s4566 = smul.addr %s4565, 8
        %s4567 = smul.addr %s4566, 8
        %s4568 = scalar_lea.vmem %s7, %s4567
        %s4569 = sand.u32 %s213, 1
        %s4570 = scalar_lea.sflag [#allocation6], %s4569
        %s4571 = sand.u32 %s213, 1
        %s4572 = smul.addr %s4571, 16
        %s4573 = scalar_lea.vmem [#allocation5], %s4572
        %s4574 = sand.u32 %s239, 1
        %s4575 = scalar_lea.sflag [#allocation8], %s4574
        %s4576 = sand.u32 %s239, 1
        %s4577 = smul.addr %s4576, 4
        %s4578 = scalar_lea.vmem [#allocation7], %s4577
        // Predicated region
        $region49: #{_encoder_forward_jit.1} parent=47 // pred_check
          %p4579 = pneg %p197
        $region50: #{_encoder_forward_jit.1} parent=47 // pred_check_branch
          %4581 = sbr.rel (%p4579) target = $region52
        $region51: #{_encoder_forward_jit.1} parent=47 // pred_region
          _
        $region52: #{_encoder_forward_jit.1} parent=47 // pred_fallthru
          _
        // Predicated region
        $region53: #{_encoder_forward_jit.1} parent=47 // pred_check
          %p4582 = pneg %p223
        $region54: #{_encoder_forward_jit.1} parent=47 // pred_check_branch
          %4584 = sbr.rel (%p4582) target = $region56
        $region55: #{_encoder_forward_jit.1} parent=47 // pred_region
          %s4586 = ssub.s32 256, 256
          %4587 = vsyncadd %s4570, %s4586
          %s4588 = smul.addr %s27, 2
          %s4589 = smul.addr %s4588, 128
          %s4590 = scalar_lea.hbm %s8, %s4589
          %s4591 = sshll.u32 %s4573, 4
          %s4592 = int_to_ptr.vmem [resolvable:$true] %s4591
          %4597 = dma.vmem_to_hbm [thread:$0]  %s4592, 256, %s4590, %s4570, 128, 128, 8
        $region56: #{_encoder_forward_jit.1} parent=47 // pred_fallthru
          _
        // Predicated region
        $region57: #{_encoder_forward_jit.1} parent=47 // pred_check
          %p4598 = pneg %p249
        $region58: #{_encoder_forward_jit.1} parent=47 // pred_check_branch
          %4600 = sbr.rel (%p4598) target = $region60
        $region59: #{_encoder_forward_jit.1} parent=47 // pred_region
          %s4602 = ssub.s32 64, 64
          %4603 = vsyncadd %s4575, %s4602
          %s4604 = smul.addr %s27, 64
          %s4605 = scalar_lea.hbm %s9, %s4604
          %s4607 = sshll.u32 %s4578, 4
          %s4608 = int_to_ptr.vmem [resolvable:$true] %s4607
          %4610 = dma.vmem_to_hbm [thread:$0]  %s4608, 64, %s4605, %s4575
        $region60: #{_encoder_forward_jit.1} parent=47 // pred_fallthru
          _
      $region48: #{_encoder_forward_jit.1} parent=5 // pred_fallthru
        _
      %p4611 = scmp.le.s32.totalorder 2, %s22
      // Predicated region
      $region61: #{_encoder_forward_jit.1} parent=5 // pred_check
        %p4612 = pneg %p4611
      $region62: #{_encoder_forward_jit.1} parent=5 // pred_check_branch
        %4614 = sbr.rel (%p4612) target = $region64
      $region63: #{_encoder_forward_jit.1} parent=5 // pred_region
        %s4615 = ssub.s32 %s22, 2
        // Predicated region
        $region65: #{_encoder_forward_jit.1} parent=63 // pred_check
          %p4616 = pneg %p203
        $region66: #{_encoder_forward_jit.1} parent=63 // pred_check_branch
          %4618 = sbr.rel (%p4616) target = $region68
        $region67: #{_encoder_forward_jit.1} parent=63 // pred_region
          %p4619 = scmp.lt.s32.totalorder %s28, 1
          %s4620 = scalar_select %p4619, %s28, 1
          %s4621 = smul.addr %s4620, 8
          %s4622 = smul.addr %s4621, 8
          %s4623 = scalar_lea.vmem %s7, %s4622
        $region68: #{_encoder_forward_jit.1} parent=63 // pred_fallthru
          _
        // Predicated region
        $region69: #{_encoder_forward_jit.1} parent=63 // pred_check
          %p4624 = pneg %p229
        $region70: #{_encoder_forward_jit.1} parent=63 // pred_check_branch
          %4626 = sbr.rel (%p4624) target = $region72
        $region71: #{_encoder_forward_jit.1} parent=63 // pred_region
          %s4627 = sand.u32 %s214, 1
          %s4628 = scalar_lea.sflag [#allocation6], %s4627
          %s4629 = sand.u32 %s214, 1
          %s4630 = smul.addr %s4629, 16
          %s4631 = scalar_lea.vmem [#allocation5], %s4630
          %4632 = dma.done %s4628, 256
        $region72: #{_encoder_forward_jit.1} parent=63 // pred_fallthru
          _
        // Predicated region
        $region73: #{_encoder_forward_jit.1} parent=63 // pred_check
          %p4633 = pneg %p255
        $region74: #{_encoder_forward_jit.1} parent=63 // pred_check_branch
          %4635 = sbr.rel (%p4633) target = $region76
        $region75: #{_encoder_forward_jit.1} parent=63 // pred_region
          %s4636 = sand.u32 %s240, 1
          %s4637 = scalar_lea.sflag [#allocation8], %s4636
          %s4638 = sand.u32 %s240, 1
          %s4639 = smul.addr %s4638, 4
          %s4640 = scalar_lea.vmem [#allocation7], %s4639
          %4641 = dma.done %s4637, 64
        $region76: #{_encoder_forward_jit.1} parent=63 // pred_fallthru
          _
      $region64: #{_encoder_forward_jit.1} parent=5 // pred_fallthru
        _
    $region6: #{_encoder_forward_jit.1} parent=1 // loop_footer
      %s26 = sadd.s32 1, %s22
    $region7: #{_encoder_forward_jit.1} parent=1 // loop_footer_branch
      %21 = sbr.rel target = $region3
    $region8: #{_encoder_forward_jit.1} parent=1 // loop_exit
      _
    %4642 = vsyncpa [#allocation6], 1
    %s4643 = scalar_lea.sflag [#allocation6], 1
    %4644 = vsyncpa %s4643, 1
    %4645 = vsyncpa [#allocation8], 1
    %s4646 = scalar_lea.sflag [#allocation8], 1
    %4647 = vsyncpa %s4646, 1

</llo_original>
